<compile_context>
chip_gen: v7x
topology: tpu7x:2x2x1
jax: 0.10.0
libtpu: 0.0.40
codegen_flags: <defaults>
</compile_context>

<pallas_src>
import numpy as np
import jax
import jax.numpy as jnp
from jax.experimental import pallas as pl
from jax.experimental.pallas import tpu as pltpu

# ---------------- module / test configuration ----------------
D_MODEL = 128                      # d_model (multiple of 128 -> lane-dense rows)
N_HEAD = 4
HEAD_DIM = D_MODEL // N_HEAD       # 32
D_HALF = D_MODEL // 2              # adapter bottleneck width (module: d_model // 2)
DH_PAD = 128                       # bottleneck zero-padded to a full lane width in the kernel
D_FF = 4 * D_MODEL                 # 512
FF_CHUNK = 128                     # MLP chunk width (4 chunks)
T = 2                              # temporal frames per clip
B = 2                              # clips
BT = B * T                         # attention batch (number of sequences)
GRID_HW = 4                        # spatial side -> 16 image tokens
SEQ_LEN = 1 + GRID_HW * GRID_HW    # L = cls + image tokens = 17
L = SEQ_LEN
NL = BT * L                        # 68 real token rows
NL_PAD = 128                       # padded token/key extent (lane-dense scores)
LN_EPS = 1e-5
ATTN_SCALE = 1.0 / float(HEAD_DIM) ** 0.5
NEG_INF = -1e30


# ---------------- wrapper-precomputed masks (compile-time constants) ----------------
def _build_masks():
    # additive attention bias: 0 inside each sequence's (L x L) diagonal block, -1e30 elsewhere
    bias = np.full((NL_PAD, NL_PAD), NEG_INF, np.float32)
    img = np.zeros((NL_PAD, 1), np.float32)     # 1 on image-token rows (adapter residual)
    tprev = np.zeros((NL_PAD, 1), np.float32)   # 1 where a t-1 temporal neighbour exists
    tnext = np.zeros((NL_PAD, 1), np.float32)   # 1 where a t+1 temporal neighbour exists
    for n in range(BT):                          # n = b*T + t ; rows ordered (b, t, l)
        lo = n * L
        bias[lo:lo + L, lo:lo + L] = 0.0
        img[lo + 1:lo + L, 0] = 1.0              # l > 0 -> image token
        t = n % T
        if t > 0:
            tprev[lo:lo + L, 0] = 1.0
        if t < T - 1:
            tnext[lo:lo + L, 0] = 1.0
    hmask = np.zeros((N_HEAD, D_MODEL), np.float32)
    for h in range(N_HEAD):
        hmask[h, h * HEAD_DIM:(h + 1) * HEAD_DIM] = 1.0
    return bias, img, tprev, tnext, hmask


_ATTN_BIAS, _IMG_MASK, _TPREV_MASK, _TNEXT_MASK, _HEAD_MASK = _build_masks()


def _layernorm(v, gamma, beta):
    mu = jnp.mean(v, axis=-1, keepdims=True)
    var = jnp.mean(jnp.square(v - mu), axis=-1, keepdims=True)
    return (v - mu) * jax.lax.rsqrt(var + LN_EPS) * gamma + beta


def stadapt_block_kernel(
    x_ref,                        # (NL_PAD, D) f32   tokens, rows ordered (b, t, l), zero-padded
    bias_ref,                     # (NL_PAD, NL_PAD) f32  additive same-sequence attention bias
    img_ref,                      # (NL_PAD, 1) f32   image-token row mask
    tprev_ref, tnext_ref,         # (NL_PAD, 1) f32   temporal-boundary row masks
    hmask_ref,                    # (N_HEAD, D) f32   per-head lane masks
    wd_ref, bd_ref,               # (D, DH_PAD) bf16, (1, DH_PAD) f32   stadapt_down_1
    wdw_ref, bdw_ref,             # (3, DH_PAD) f32, (1, DH_PAD) f32    stadapt_conv3d_1 taps
    wu_ref, bu_ref,               # (DH_PAD, D) bf16, (1, D) f32        stadapt_up_1
    ln1_g_ref, ln1_b_ref,         # (1, D)
    wqkv_ref, bqkv_ref,           # (D, 3D) bf16, (1, 3D) f32           attn.in_proj (fused)
    wo_ref, bo_ref,               # (D, D) bf16, (1, D) f32             attn.out_proj
    ln2_g_ref, ln2_b_ref,         # (1, D)
    wfc_ref, bfc_ref,             # (D, 4D) bf16, (1, 4D) f32           mlp.c_fc
    wpr_ref, bpr_ref,             # (4D, D) bf16, (1, D) f32            mlp.c_proj
    o_ref,                        # (NL_PAD, D)
):
    f32 = jnp.float32
    bf16 = jnp.bfloat16
    x = x_ref[...].astype(f32)                                        # (NL_PAD, D)

    # ------- ST-Adapter (residual only on image tokens; cls / padded rows masked out) -------
    z = jnp.dot(x.astype(bf16), wd_ref[...], preferred_element_type=f32) + bd_ref[...]
    # temporal neighbours (same clip, same token position l) live exactly +-L rows away;
    # pltpu.roll keeps the shift on the XLU, boundary frames are re-zeroed by the row masks.
    z_prev = pltpu.roll(z, shift=L, axis=0) * tprev_ref[...]
    z_next = pltpu.roll(z, shift=NL_PAD - L, axis=0) * tnext_ref[...]
    zc = (z_prev * wdw_ref[0:1, :] + z * wdw_ref[1:2, :] + z_next * wdw_ref[2:3, :]
          + bdw_ref[...])
    u = jnp.dot(zc.astype(bf16), wu_ref[...], preferred_element_type=f32) + bu_ref[...]
    x = x + u * img_ref[...]

    # ------- LN1 + multi-head self-attention (fused QKV, lane-dense 128-key scores) -------
    xn = _layernorm(x, ln1_g_ref[...], ln1_b_ref[...])
    qkv = jnp.dot(xn.astype(bf16), wqkv_ref[...], preferred_element_type=f32) + bqkv_ref[...]
    q = qkv[:, :D_MODEL] * ATTN_SCALE
    k = qkv[:, D_MODEL:2 * D_MODEL]
    v = qkv[:, 2 * D_MODEL:]
    kt_bf = k.T.astype(bf16)                                          # hoisted out of head loop
    bias = bias_ref[...]

    # Heads handled with full-width (128-lane contraction) matmuls over all sequences at once:
    # q masked to head-h lanes => q @ k.T only contracts head-h dims; the additive bias masks
    # other-sequence and padded keys; v masked to head-h lanes writes only head-h output lanes,
    # so accumulating over heads reassembles the concatenated context with no slicing/concat.
    ctx = jnp.zeros((NL_PAD, D_MODEL), f32)
    for h in range(N_HEAD):
        hm = hmask_ref[h:h + 1, :]                                    # (1, D) 0/1
        qh = (q * hm).astype(bf16)
        s = jnp.dot(qh, kt_bf, preferred_element_type=f32) + bias     # (NL_PAD, NL_PAD)
        s = s - jnp.max(s, axis=-1, keepdims=True)
        p = jnp.exp(s)
        p = p * pl.reciprocal(jnp.sum(p, axis=-1, keepdims=True), approx=True)
        vh = (v * hm).astype(bf16)
        ctx = ctx + jnp.dot(p.astype(bf16), vh, preferred_element_type=f32)
    attn = jnp.dot(ctx.astype(bf16), wo_ref[...], preferred_element_type=f32) + bo_ref[...]
    y = x + attn                                                      # residual 1

    # ------- LN2 + MLP (c_fc -> QuickGELU -> c_proj), chunked over the 4D dim -------
    yn = _layernorm(y, ln2_g_ref[...], ln2_b_ref[...])
    yn_bf = yn.astype(bf16)
    h2 = jnp.zeros((NL_PAD, D_MODEL), f32)
    for c in range(D_FF // FF_CHUNK):
        lo = c * FF_CHUNK
        h1 = (jnp.dot(yn_bf, wfc_ref[:, lo:lo + FF_CHUNK], preferred_element_type=f32)
              + bfc_ref[:, lo:lo + FF_CHUNK])
        h1 = h1 * jax.nn.sigmoid(1.702 * h1)                          # QuickGELU (f32)
        h2 = h2 + jnp.dot(h1.astype(bf16), wpr_ref[lo:lo + FF_CHUNK, :],
                          preferred_element_type=f32)
    o_ref[...] = (y + h2 + bpr_ref[...]).astype(o_ref.dtype)          # residual 2


@jax.jit
def stadapt_block_forward(x, p):
    """x: (L, B*T, D) in the module's native nn.MultiheadAttention layout."""
    Lx, BTx, Dx = x.shape
    # rows ordered (b, t, l): per-sequence tokens are contiguous, temporal neighbours are +-L rows
    x2d = jnp.transpose(x, (1, 0, 2)).reshape(BTx * Lx, Dx)
    x_pad = jnp.pad(x2d, ((0, NL_PAD - BTx * Lx), (0, 0)))            # pad rows to 128

    r2 = lambda a: a.reshape(1, -1)
    bf = lambda a: a.astype(jnp.bfloat16)
    pad_cols = lambda a, n: jnp.pad(a, ((0, 0), (0, n - a.shape[1])))
    pad_rows = lambda a, n: jnp.pad(a, ((0, n - a.shape[0]), (0, 0)))

    inputs = (
        x_pad,
        jnp.asarray(_ATTN_BIAS), jnp.asarray(_IMG_MASK),
        jnp.asarray(_TPREV_MASK), jnp.asarray(_TNEXT_MASK), jnp.asarray(_HEAD_MASK),
        bf(pad_cols(p["w_down"].T, DH_PAD)), pad_cols(r2(p["b_down"]), DH_PAD),
        pad_cols(p["w_dw"].T, DH_PAD),       pad_cols(r2(p["b_dw"]), DH_PAD),
        bf(pad_rows(p["w_up"].T, DH_PAD)),   r2(p["b_up"]),
        r2(p["ln1_g"]), r2(p["ln1_b"]),
        bf(p["w_in"].T), r2(p["b_in"]),                               # fused QKV (D, 3D)
        bf(p["w_out"].T), r2(p["b_out"]),
        r2(p["ln2_g"]), r2(p["ln2_b"]),
        bf(p["w_fc"].T), r2(p["b_fc"]),
        bf(p["w_pr"].T), r2(p["b_pr"]),
    )
    vmem = pl.BlockSpec(memory_space=pltpu.MemorySpace.VMEM)
    out_pad = pl.pallas_call(
        stadapt_block_kernel,
        out_shape=jax.ShapeDtypeStruct((NL_PAD, Dx), x.dtype),
        in_specs=[vmem] * len(inputs),
        out_specs=vmem,
    )(*inputs)
    out2d = out_pad[:BTx * Lx]
    return out2d.reshape(BTx, Lx, Dx).transpose(1, 0, 2)              # back to (L, B*T, D)


# ---------------- pure-JAX reference (mirrors the PyTorch forward, num_experts=0) ----------------
def reference_block(x, p):
    Lx, BTx, Dx = x.shape
    Bx = BTx // T
    x4 = x.reshape(Lx, Bx, T, Dx)
    cls_tok, x_img = x4[:1], x4[1:]                                   # (1,B,T,D), (HW,B,T,D)

    # ST-Adapter
    z = jnp.einsum("sbtd,cd->sbtc", x_img, p["w_down"]) + p["b_down"]
    zp = jnp.pad(z, ((0, 0), (0, 0), (1, 1), (0, 0)))
    zc = (zp[:, :, :-2, :] * p["w_dw"][:, 0]
          + zp[:, :, 1:-1, :] * p["w_dw"][:, 1]
          + zp[:, :, 2:, :] * p["w_dw"][:, 2]) + p["b_dw"]
    u = jnp.einsum("sbtc,dc->sbtd", zc, p["w_up"]) + p["b_up"]
    x4 = jnp.concatenate([cls_tok, x_img + u], axis=0).reshape(Lx, BTx, Dx)

    def ln(v, g, b):
        mu = jnp.mean(v, -1, keepdims=True)
        var = jnp.mean(jnp.square(v - mu), -1, keepdims=True)
        return (v - mu) * jax.lax.rsqrt(var + LN_EPS) * g + b

    # multi-head self-attention (PyTorch nn.MultiheadAttention math)
    xn = ln(x4, p["ln1_g"], p["ln1_b"])
    qkv = xn @ p["w_in"].T + p["b_in"]
    q, k, v = jnp.split(qkv, 3, axis=-1)
    sh = lambda t: jnp.transpose(t.reshape(Lx, BTx, N_HEAD, HEAD_DIM), (1, 2, 0, 3))
    s = jnp.einsum("nhqd,nhkd->nhqk", sh(q) * ATTN_SCALE, sh(k))
    a = jax.nn.softmax(s, axis=-1)
    o = jnp.einsum("nhqk,nhkd->nhqd", a, sh(v))
    o = jnp.transpose(o, (2, 0, 1, 3)).reshape(Lx, BTx, Dx)
    y = x4 + (o @ p["w_out"].T + p["b_out"])

    yn = ln(y, p["ln2_g"], p["ln2_b"])
    h1 = yn @ p["w_fc"].T + p["b_fc"]
    h1 = h1 * jax.nn.sigmoid(1.702 * h1)
    return y + (h1 @ p["w_pr"].T + p["b_pr"])


def init_params(key):
    d, d2, dff = D_MODEL, D_HALF, D_FF
    ks = jax.random.split(key, 18)
    s = 0.02
    rnd = lambda i, shape: s * jax.random.normal(ks[i], shape, jnp.float32)
    return {
        # ST-Adapter convs (PyTorch-native layouts, unit kernel dims squeezed).
        # NOTE: the module zero-inits stadapt_up_1; random weights here so the path is exercised.
        "w_down": rnd(0, (d2, d)), "b_down": rnd(1, (d2,)),
        "w_dw": rnd(2, (d2, 3)),   "b_dw": rnd(3, (d2,)),
        "w_up": rnd(4, (d, d2)),   "b_up": rnd(5, (d,)),
        "ln1_g": 1.0 + rnd(6, (d,)), "ln1_b": rnd(7, (d,)),
        "w_in": rnd(8, (3 * d, d)),  "b_in": rnd(9, (3 * d,)),
        "w_out": rnd(10, (d, d)),    "b_out": rnd(11, (d,)),
        "ln2_g": 1.0 + rnd(12, (d,)), "ln2_b": rnd(13, (d,)),
        "w_fc": rnd(14, (dff, d)),   "b_fc": rnd(15, (dff,)),
        "w_pr": rnd(16, (d, dff)),   "b_pr": rnd(17, (d,)),
    }


if __name__ == "__main__":
    key = jax.random.PRNGKey(0)
    k_x, k_p = jax.random.split(key)
    x = jax.random.normal(k_x, (SEQ_LEN, BT, D_MODEL), jnp.float32)   # (L, B*T, D) module layout
    params = init_params(k_p)

    out = jax.block_until_ready(stadapt_block_forward(x, params))
    ref = reference_block(x, params)

    assert out.shape == (SEQ_LEN, BT, D_MODEL)
    # bf16 MXU operands (f32 accumulation) + approx softmax reciprocal relax exact parity with the
    # all-f32 reference; observed error is O(1e-3), tolerance set with margin.
    max_err = float(jnp.max(jnp.abs(out - ref)))
    assert jnp.allclose(out, ref, atol=1e-2, rtol=1e-2), f"mismatch vs reference (max err {max_err})"

    print("KERNEL_OK")
</pallas_src>

<mosaic_0001>
module attributes {stable_mosaic.version = 11 : i64} {
  func.func @stadapt_block_kernel(%arg0: memref<128x128xf32, #tpu.memory_space<vmem>>, %arg1: memref<128x128xf32, #tpu.memory_space<vmem>>, %arg2: memref<128x1xf32, #tpu.memory_space<vmem>>, %arg3: memref<128x1xf32, #tpu.memory_space<vmem>>, %arg4: memref<128x1xf32, #tpu.memory_space<vmem>>, %arg5: memref<4x128xf32, #tpu.memory_space<vmem>>, %arg6: memref<128x128xbf16, #tpu.memory_space<vmem>>, %arg7: memref<1x128xf32, #tpu.memory_space<vmem>>, %arg8: memref<3x128xf32, #tpu.memory_space<vmem>>, %arg9: memref<1x128xf32, #tpu.memory_space<vmem>>, %arg10: memref<128x128xbf16, #tpu.memory_space<vmem>>, %arg11: memref<1x128xf32, #tpu.memory_space<vmem>>, %arg12: memref<1x128xf32, #tpu.memory_space<vmem>>, %arg13: memref<1x128xf32, #tpu.memory_space<vmem>>, %arg14: memref<128x384xbf16, #tpu.memory_space<vmem>>, %arg15: memref<1x384xf32, #tpu.memory_space<vmem>>, %arg16: memref<128x128xbf16, #tpu.memory_space<vmem>>, %arg17: memref<1x128xf32, #tpu.memory_space<vmem>>, %arg18: memref<1x128xf32, #tpu.memory_space<vmem>>, %arg19: memref<1x128xf32, #tpu.memory_space<vmem>>, %arg20: memref<128x512xbf16, #tpu.memory_space<vmem>>, %arg21: memref<1x512xf32, #tpu.memory_space<vmem>>, %arg22: memref<512x128xbf16, #tpu.memory_space<vmem>>, %arg23: memref<1x128xf32, #tpu.memory_space<vmem>>, %arg24: memref<128x128xf32, #tpu.memory_space<vmem>>) attributes {dimension_semantics = [], scalar_prefetch = 0 : i64, scratch_operands = 0 : i64, tpu.core_type = #tpu.core_type<tc>} {
    %c0 = arith.constant 0 : index
    %c0_0 = arith.constant 0 : index
    %0 = vector.load %arg0[%c0, %c0_0] : memref<128x128xf32, #tpu.memory_space<vmem>>, vector<128x128xf32>
    %1 = arith.truncf %0 : vector<128x128xf32> to vector<128x128xbf16>
    %c0_1 = arith.constant 0 : index
    %c0_2 = arith.constant 0 : index
    %2 = vector.load %arg6[%c0_1, %c0_2] : memref<128x128xbf16, #tpu.memory_space<vmem>>, vector<128x128xbf16>
    %cst = arith.constant dense<0.000000e+00> : vector<128x128xf32>
    %3 = tpu.matmul %1, %2, %cst {dimension_numbers = #tpu.dot_dimension_numbers<[1], [0], [0], [1], [0, 0, 1, 1], [], []>} : vector<128x128xbf16>, vector<128x128xbf16>, vector<128x128xf32> -> vector<128x128xf32>
    %c0_3 = arith.constant 0 : index
    %c0_4 = arith.constant 0 : index
    %4 = vector.load %arg7[%c0_3, %c0_4] : memref<1x128xf32, #tpu.memory_space<vmem>>, vector<1x128xf32>
    %5 = vector.broadcast %4 : vector<1x128xf32> to vector<128x128xf32>
    %6 = arith.addf %3, %5 : vector<128x128xf32>
    %c17_i32 = arith.constant 17 : i32
    %7 = tpu.dynamic_rotate %6 by %c17_i32 dim 0 : vector<128x128xf32>, i32 -> vector<128x128xf32>
    %c0_5 = arith.constant 0 : index
    %c0_6 = arith.constant 0 : index
    %8 = vector.load %arg3[%c0_5, %c0_6] : memref<128x1xf32, #tpu.memory_space<vmem>>, vector<128x1xf32>
    %9 = vector.broadcast %8 : vector<128x1xf32> to vector<128x128xf32>
    %10 = arith.mulf %7, %9 : vector<128x128xf32>
    %c111_i32 = arith.constant 111 : i32
    %11 = tpu.dynamic_rotate %6 by %c111_i32 dim 0 : vector<128x128xf32>, i32 -> vector<128x128xf32>
    %c0_7 = arith.constant 0 : index
    %c0_8 = arith.constant 0 : index
    %12 = vector.load %arg4[%c0_7, %c0_8] : memref<128x1xf32, #tpu.memory_space<vmem>>, vector<128x1xf32>
    %13 = vector.broadcast %12 : vector<128x1xf32> to vector<128x128xf32>
    %14 = arith.mulf %11, %13 : vector<128x128xf32>
    %c0_9 = arith.constant 0 : index
    %c0_10 = arith.constant 0 : index
    %15 = vector.load %arg8[%c0_9, %c0_10] : memref<3x128xf32, #tpu.memory_space<vmem>>, vector<1x128xf32>
    %16 = vector.broadcast %15 : vector<1x128xf32> to vector<128x128xf32>
    %17 = arith.mulf %10, %16 : vector<128x128xf32>
    %c1 = arith.constant 1 : index
    %c0_11 = arith.constant 0 : index
    %18 = vector.load %arg8[%c1, %c0_11] : memref<3x128xf32, #tpu.memory_space<vmem>>, vector<1x128xf32>
    %19 = vector.broadcast %18 : vector<1x128xf32> to vector<128x128xf32>
    %20 = arith.mulf %6, %19 : vector<128x128xf32>
    %21 = arith.addf %17, %20 : vector<128x128xf32>
    %c2 = arith.constant 2 : index
    %c0_12 = arith.constant 0 : index
    %22 = vector.load %arg8[%c2, %c0_12] : memref<3x128xf32, #tpu.memory_space<vmem>>, vector<1x128xf32>
    %23 = vector.broadcast %22 : vector<1x128xf32> to vector<128x128xf32>
    %24 = arith.mulf %14, %23 : vector<128x128xf32>
    %25 = arith.addf %21, %24 : vector<128x128xf32>
    %c0_13 = arith.constant 0 : index
    %c0_14 = arith.constant 0 : index
    %26 = vector.load %arg9[%c0_13, %c0_14] : memref<1x128xf32, #tpu.memory_space<vmem>>, vector<1x128xf32>
    %27 = vector.broadcast %26 : vector<1x128xf32> to vector<128x128xf32>
    %28 = arith.addf %25, %27 : vector<128x128xf32>
    %29 = arith.truncf %28 : vector<128x128xf32> to vector<128x128xbf16>
    %c0_15 = arith.constant 0 : index
    %c0_16 = arith.constant 0 : index
    %30 = vector.load %arg10[%c0_15, %c0_16] : memref<128x128xbf16, #tpu.memory_space<vmem>>, vector<128x128xbf16>
    %cst_17 = arith.constant dense<0.000000e+00> : vector<128x128xf32>
    %31 = tpu.matmul %29, %30, %cst_17 {dimension_numbers = #tpu.dot_dimension_numbers<[1], [0], [0], [1], [0, 0, 1, 1], [], []>} : vector<128x128xbf16>, vector<128x128xbf16>, vector<128x128xf32> -> vector<128x128xf32>
    %c0_18 = arith.constant 0 : index
    %c0_19 = arith.constant 0 : index
    %32 = vector.load %arg11[%c0_18, %c0_19] : memref<1x128xf32, #tpu.memory_space<vmem>>, vector<1x128xf32>
    %33 = vector.broadcast %32 : vector<1x128xf32> to vector<128x128xf32>
    %34 = arith.addf %31, %33 : vector<128x128xf32>
    %c0_20 = arith.constant 0 : index
    %c0_21 = arith.constant 0 : index
    %35 = vector.load %arg2[%c0_20, %c0_21] : memref<128x1xf32, #tpu.memory_space<vmem>>, vector<128x1xf32>
    %36 = vector.broadcast %35 : vector<128x1xf32> to vector<128x128xf32>
    %37 = arith.mulf %34, %36 : vector<128x128xf32>
    %38 = arith.addf %0, %37 : vector<128x128xf32>
    %c0_22 = arith.constant 0 : index
    %c0_23 = arith.constant 0 : index
    %39 = vector.load %arg12[%c0_22, %c0_23] : memref<1x128xf32, #tpu.memory_space<vmem>>, vector<1x128xf32>
    %c0_24 = arith.constant 0 : index
    %c0_25 = arith.constant 0 : index
    %40 = vector.load %arg13[%c0_24, %c0_25] : memref<1x128xf32, #tpu.memory_space<vmem>>, vector<1x128xf32>
    %cst_26 = arith.constant dense<0.000000e+00> : vector<128xf32>
    %41 = vector.multi_reduction <add>, %38, %cst_26 [1] : vector<128x128xf32> to vector<128xf32>
    %42 = vector.shape_cast %41 : vector<128xf32> to vector<128x1xf32>
    %cst_27 = arith.constant 1.280000e+02 : f32
    %43 = vector.broadcast %cst_27 : f32 to vector<128x1xf32>
    %44 = arith.divf %42, %43 : vector<128x1xf32>
    %45 = vector.broadcast %44 : vector<128x1xf32> to vector<128x128xf32>
    %46 = arith.subf %38, %45 : vector<128x128xf32>
    %47 = arith.mulf %46, %46 : vector<128x128xf32>
    %cst_28 = arith.constant dense<0.000000e+00> : vector<128xf32>
    %48 = vector.multi_reduction <add>, %47, %cst_28 [1] : vector<128x128xf32> to vector<128xf32>
    %49 = vector.shape_cast %48 : vector<128xf32> to vector<128x1xf32>
    %cst_29 = arith.constant 1.280000e+02 : f32
    %50 = vector.broadcast %cst_29 : f32 to vector<128x1xf32>
    %51 = arith.divf %49, %50 : vector<128x1xf32>
    %52 = vector.broadcast %44 : vector<128x1xf32> to vector<128x128xf32>
    %53 = arith.subf %38, %52 : vector<128x128xf32>
    %cst_30 = arith.constant 9.99999974E-6 : f32
    %54 = vector.broadcast %cst_30 : f32 to vector<128x1xf32>
    %55 = arith.addf %51, %54 : vector<128x1xf32>
    %56 = math.rsqrt %55 : vector<128x1xf32>
    %57 = vector.broadcast %56 : vector<128x1xf32> to vector<128x128xf32>
    %58 = arith.mulf %53, %57 : vector<128x128xf32>
    %59 = vector.broadcast %39 : vector<1x128xf32> to vector<128x128xf32>
    %60 = arith.mulf %58, %59 : vector<128x128xf32>
    %61 = vector.broadcast %40 : vector<1x128xf32> to vector<128x128xf32>
    %62 = arith.addf %60, %61 : vector<128x128xf32>
    %63 = arith.truncf %62 : vector<128x128xf32> to vector<128x128xbf16>
    %c0_31 = arith.constant 0 : index
    %c0_32 = arith.constant 0 : index
    %64 = vector.load %arg14[%c0_31, %c0_32] : memref<128x384xbf16, #tpu.memory_space<vmem>>, vector<128x384xbf16>
    %cst_33 = arith.constant dense<0.000000e+00> : vector<128x384xf32>
    %65 = tpu.matmul %63, %64, %cst_33 {dimension_numbers = #tpu.dot_dimension_numbers<[1], [0], [0], [1], [0, 0, 1, 1], [], []>} : vector<128x128xbf16>, vector<128x384xbf16>, vector<128x384xf32> -> vector<128x384xf32>
    %c0_34 = arith.constant 0 : index
    %c0_35 = arith.constant 0 : index
    %66 = vector.load %arg15[%c0_34, %c0_35] : memref<1x384xf32, #tpu.memory_space<vmem>>, vector<1x384xf32>
    %67 = vector.broadcast %66 : vector<1x384xf32> to vector<128x384xf32>
    %68 = arith.addf %65, %67 : vector<128x384xf32>
    %69 = vector.extract_strided_slice %68 {offsets = [0, 0], sizes = [128, 128], strides = [1, 1]} : vector<128x384xf32> to vector<128x128xf32>
    %cst_36 = arith.constant 0.176776692 : f32
    %70 = vector.broadcast %cst_36 : f32 to vector<128x128xf32>
    %71 = arith.mulf %69, %70 : vector<128x128xf32>
    %72 = vector.extract_strided_slice %68 {offsets = [0, 128], sizes = [128, 128], strides = [1, 1]} : vector<128x384xf32> to vector<128x128xf32>
    %73 = vector.extract_strided_slice %68 {offsets = [0, 256], sizes = [128, 128], strides = [1, 1]} : vector<128x384xf32> to vector<128x128xf32>
    %74 = tpu.transpose %72, [1, 0] : vector<128x128xf32> -> vector<128x128xf32>
    %75 = arith.truncf %74 : vector<128x128xf32> to vector<128x128xbf16>
    %c0_37 = arith.constant 0 : index
    %c0_38 = arith.constant 0 : index
    %76 = vector.load %arg1[%c0_37, %c0_38] : memref<128x128xf32, #tpu.memory_space<vmem>>, vector<128x128xf32>
    %cst_39 = arith.constant 0.000000e+00 : f32
    %77 = vector.broadcast %cst_39 : f32 to vector<128x128xf32>
    %c0_40 = arith.constant 0 : index
    %c0_41 = arith.constant 0 : index
    %78 = vector.load %arg5[%c0_40, %c0_41] : memref<4x128xf32, #tpu.memory_space<vmem>>, vector<1x128xf32>
    %79 = vector.broadcast %78 : vector<1x128xf32> to vector<128x128xf32>
    %80 = arith.mulf %71, %79 : vector<128x128xf32>
    %81 = arith.truncf %80 : vector<128x128xf32> to vector<128x128xbf16>
    %cst_42 = arith.constant dense<0.000000e+00> : vector<128x128xf32>
    %82 = tpu.matmul %81, %75, %cst_42 {dimension_numbers = #tpu.dot_dimension_numbers<[1], [0], [0], [1], [0, 0, 1, 1], [], []>} : vector<128x128xbf16>, vector<128x128xbf16>, vector<128x128xf32> -> vector<128x128xf32>
    %83 = arith.addf %82, %76 : vector<128x128xf32>
    %cst_43 = arith.constant dense<0xFF800000> : vector<128xf32>
    %84 = vector.multi_reduction <maximumf>, %83, %cst_43 [1] : vector<128x128xf32> to vector<128xf32>
    %85 = vector.shape_cast %84 : vector<128xf32> to vector<128x1xf32>
    %86 = vector.broadcast %85 : vector<128x1xf32> to vector<128x128xf32>
    %87 = arith.subf %83, %86 : vector<128x128xf32>
    %88 = math.exp %87 : vector<128x128xf32>
    %cst_44 = arith.constant dense<0.000000e+00> : vector<128xf32>
    %89 = vector.multi_reduction <add>, %88, %cst_44 [1] : vector<128x128xf32> to vector<128xf32>
    %90 = vector.shape_cast %89 : vector<128xf32> to vector<128x1xf32>
    %91 = tpu.reciprocal %90 {approx = true} : vector<128x1xf32> -> vector<128x1xf32>
    %92 = vector.broadcast %91 : vector<128x1xf32> to vector<128x128xf32>
    %93 = arith.mulf %88, %92 : vector<128x128xf32>
    %94 = vector.broadcast %78 : vector<1x128xf32> to vector<128x128xf32>
    %95 = arith.mulf %73, %94 : vector<128x128xf32>
    %96 = arith.truncf %95 : vector<128x128xf32> to vector<128x128xbf16>
    %97 = arith.truncf %93 : vector<128x128xf32> to vector<128x128xbf16>
    %cst_45 = arith.constant dense<0.000000e+00> : vector<128x128xf32>
    %98 = tpu.matmul %97, %96, %cst_45 {dimension_numbers = #tpu.dot_dimension_numbers<[1], [0], [0], [1], [0, 0, 1, 1], [], []>} : vector<128x128xbf16>, vector<128x128xbf16>, vector<128x128xf32> -> vector<128x128xf32>
    %99 = arith.addf %77, %98 : vector<128x128xf32>
    %c1_46 = arith.constant 1 : index
    %c0_47 = arith.constant 0 : index
    %100 = vector.load %arg5[%c1_46, %c0_47] : memref<4x128xf32, #tpu.memory_space<vmem>>, vector<1x128xf32>
    %101 = vector.broadcast %100 : vector<1x128xf32> to vector<128x128xf32>
    %102 = arith.mulf %71, %101 : vector<128x128xf32>
    %103 = arith.truncf %102 : vector<128x128xf32> to vector<128x128xbf16>
    %cst_48 = arith.constant dense<0.000000e+00> : vector<128x128xf32>
    %104 = tpu.matmul %103, %75, %cst_48 {dimension_numbers = #tpu.dot_dimension_numbers<[1], [0], [0], [1], [0, 0, 1, 1], [], []>} : vector<128x128xbf16>, vector<128x128xbf16>, vector<128x128xf32> -> vector<128x128xf32>
    %105 = arith.addf %104, %76 : vector<128x128xf32>
    %cst_49 = arith.constant dense<0xFF800000> : vector<128xf32>
    %106 = vector.multi_reduction <maximumf>, %105, %cst_49 [1] : vector<128x128xf32> to vector<128xf32>
    %107 = vector.shape_cast %106 : vector<128xf32> to vector<128x1xf32>
    %108 = vector.broadcast %107 : vector<128x1xf32> to vector<128x128xf32>
    %109 = arith.subf %105, %108 : vector<128x128xf32>
    %110 = math.exp %109 : vector<128x128xf32>
    %cst_50 = arith.constant dense<0.000000e+00> : vector<128xf32>
    %111 = vector.multi_reduction <add>, %110, %cst_50 [1] : vector<128x128xf32> to vector<128xf32>
    %112 = vector.shape_cast %111 : vector<128xf32> to vector<128x1xf32>
    %113 = tpu.reciprocal %112 {approx = true} : vector<128x1xf32> -> vector<128x1xf32>
    %114 = vector.broadcast %113 : vector<128x1xf32> to vector<128x128xf32>
    %115 = arith.mulf %110, %114 : vector<128x128xf32>
    %116 = vector.broadcast %100 : vector<1x128xf32> to vector<128x128xf32>
    %117 = arith.mulf %73, %116 : vector<128x128xf32>
    %118 = arith.truncf %117 : vector<128x128xf32> to vector<128x128xbf16>
    %119 = arith.truncf %115 : vector<128x128xf32> to vector<128x128xbf16>
    %cst_51 = arith.constant dense<0.000000e+00> : vector<128x128xf32>
    %120 = tpu.matmul %119, %118, %cst_51 {dimension_numbers = #tpu.dot_dimension_numbers<[1], [0], [0], [1], [0, 0, 1, 1], [], []>} : vector<128x128xbf16>, vector<128x128xbf16>, vector<128x128xf32> -> vector<128x128xf32>
    %121 = arith.addf %99, %120 : vector<128x128xf32>
    %c2_52 = arith.constant 2 : index
    %c0_53 = arith.constant 0 : index
    %122 = vector.load %arg5[%c2_52, %c0_53] : memref<4x128xf32, #tpu.memory_space<vmem>>, vector<1x128xf32>
    %123 = vector.broadcast %122 : vector<1x128xf32> to vector<128x128xf32>
    %124 = arith.mulf %71, %123 : vector<128x128xf32>
    %125 = arith.truncf %124 : vector<128x128xf32> to vector<128x128xbf16>
    %cst_54 = arith.constant dense<0.000000e+00> : vector<128x128xf32>
    %126 = tpu.matmul %125, %75, %cst_54 {dimension_numbers = #tpu.dot_dimension_numbers<[1], [0], [0], [1], [0, 0, 1, 1], [], []>} : vector<128x128xbf16>, vector<128x128xbf16>, vector<128x128xf32> -> vector<128x128xf32>
    %127 = arith.addf %126, %76 : vector<128x128xf32>
    %cst_55 = arith.constant dense<0xFF800000> : vector<128xf32>
    %128 = vector.multi_reduction <maximumf>, %127, %cst_55 [1] : vector<128x128xf32> to vector<128xf32>
    %129 = vector.shape_cast %128 : vector<128xf32> to vector<128x1xf32>
    %130 = vector.broadcast %129 : vector<128x1xf32> to vector<128x128xf32>
    %131 = arith.subf %127, %130 : vector<128x128xf32>
    %132 = math.exp %131 : vector<128x128xf32>
    %cst_56 = arith.constant dense<0.000000e+00> : vector<128xf32>
    %133 = vector.multi_reduction <add>, %132, %cst_56 [1] : vector<128x128xf32> to vector<128xf32>
    %134 = vector.shape_cast %133 : vector<128xf32> to vector<128x1xf32>
    %135 = tpu.reciprocal %134 {approx = true} : vector<128x1xf32> -> vector<128x1xf32>
    %136 = vector.broadcast %135 : vector<128x1xf32> to vector<128x128xf32>
    %137 = arith.mulf %132, %136 : vector<128x128xf32>
    %138 = vector.broadcast %122 : vector<1x128xf32> to vector<128x128xf32>
    %139 = arith.mulf %73, %138 : vector<128x128xf32>
    %140 = arith.truncf %139 : vector<128x128xf32> to vector<128x128xbf16>
    %141 = arith.truncf %137 : vector<128x128xf32> to vector<128x128xbf16>
    %cst_57 = arith.constant dense<0.000000e+00> : vector<128x128xf32>
    %142 = tpu.matmul %141, %140, %cst_57 {dimension_numbers = #tpu.dot_dimension_numbers<[1], [0], [0], [1], [0, 0, 1, 1], [], []>} : vector<128x128xbf16>, vector<128x128xbf16>, vector<128x128xf32> -> vector<128x128xf32>
    %143 = arith.addf %121, %142 : vector<128x128xf32>
    %c3 = arith.constant 3 : index
    %c0_58 = arith.constant 0 : index
    %144 = vector.load %arg5[%c3, %c0_58] : memref<4x128xf32, #tpu.memory_space<vmem>>, vector<1x128xf32>
    %145 = vector.broadcast %144 : vector<1x128xf32> to vector<128x128xf32>
    %146 = arith.mulf %71, %145 : vector<128x128xf32>
    %147 = arith.truncf %146 : vector<128x128xf32> to vector<128x128xbf16>
    %cst_59 = arith.constant dense<0.000000e+00> : vector<128x128xf32>
    %148 = tpu.matmul %147, %75, %cst_59 {dimension_numbers = #tpu.dot_dimension_numbers<[1], [0], [0], [1], [0, 0, 1, 1], [], []>} : vector<128x128xbf16>, vector<128x128xbf16>, vector<128x128xf32> -> vector<128x128xf32>
    %149 = arith.addf %148, %76 : vector<128x128xf32>
    %cst_60 = arith.constant dense<0xFF800000> : vector<128xf32>
    %150 = vector.multi_reduction <maximumf>, %149, %cst_60 [1] : vector<128x128xf32> to vector<128xf32>
    %151 = vector.shape_cast %150 : vector<128xf32> to vector<128x1xf32>
    %152 = vector.broadcast %151 : vector<128x1xf32> to vector<128x128xf32>
    %153 = arith.subf %149, %152 : vector<128x128xf32>
    %154 = math.exp %153 : vector<128x128xf32>
    %cst_61 = arith.constant dense<0.000000e+00> : vector<128xf32>
    %155 = vector.multi_reduction <add>, %154, %cst_61 [1] : vector<128x128xf32> to vector<128xf32>
    %156 = vector.shape_cast %155 : vector<128xf32> to vector<128x1xf32>
    %157 = tpu.reciprocal %156 {approx = true} : vector<128x1xf32> -> vector<128x1xf32>
    %158 = vector.broadcast %157 : vector<128x1xf32> to vector<128x128xf32>
    %159 = arith.mulf %154, %158 : vector<128x128xf32>
    %160 = vector.broadcast %144 : vector<1x128xf32> to vector<128x128xf32>
    %161 = arith.mulf %73, %160 : vector<128x128xf32>
    %162 = arith.truncf %161 : vector<128x128xf32> to vector<128x128xbf16>
    %163 = arith.truncf %159 : vector<128x128xf32> to vector<128x128xbf16>
    %cst_62 = arith.constant dense<0.000000e+00> : vector<128x128xf32>
    %164 = tpu.matmul %163, %162, %cst_62 {dimension_numbers = #tpu.dot_dimension_numbers<[1], [0], [0], [1], [0, 0, 1, 1], [], []>} : vector<128x128xbf16>, vector<128x128xbf16>, vector<128x128xf32> -> vector<128x128xf32>
    %165 = arith.addf %143, %164 : vector<128x128xf32>
    %166 = arith.truncf %165 : vector<128x128xf32> to vector<128x128xbf16>
    %c0_63 = arith.constant 0 : index
    %c0_64 = arith.constant 0 : index
    %167 = vector.load %arg16[%c0_63, %c0_64] : memref<128x128xbf16, #tpu.memory_space<vmem>>, vector<128x128xbf16>
    %cst_65 = arith.constant dense<0.000000e+00> : vector<128x128xf32>
    %168 = tpu.matmul %166, %167, %cst_65 {dimension_numbers = #tpu.dot_dimension_numbers<[1], [0], [0], [1], [0, 0, 1, 1], [], []>} : vector<128x128xbf16>, vector<128x128xbf16>, vector<128x128xf32> -> vector<128x128xf32>
    %c0_66 = arith.constant 0 : index
    %c0_67 = arith.constant 0 : index
    %169 = vector.load %arg17[%c0_66, %c0_67] : memref<1x128xf32, #tpu.memory_space<vmem>>, vector<1x128xf32>
    %170 = vector.broadcast %169 : vector<1x128xf32> to vector<128x128xf32>
    %171 = arith.addf %168, %170 : vector<128x128xf32>
    %172 = arith.addf %38, %171 : vector<128x128xf32>
    %c0_68 = arith.constant 0 : index
    %c0_69 = arith.constant 0 : index
    %173 = vector.load %arg18[%c0_68, %c0_69] : memref<1x128xf32, #tpu.memory_space<vmem>>, vector<1x128xf32>
    %c0_70 = arith.constant 0 : index
    %c0_71 = arith.constant 0 : index
    %174 = vector.load %arg19[%c0_70, %c0_71] : memref<1x128xf32, #tpu.memory_space<vmem>>, vector<1x128xf32>
    %cst_72 = arith.constant dense<0.000000e+00> : vector<128xf32>
    %175 = vector.multi_reduction <add>, %172, %cst_72 [1] : vector<128x128xf32> to vector<128xf32>
    %176 = vector.shape_cast %175 : vector<128xf32> to vector<128x1xf32>
    %cst_73 = arith.constant 1.280000e+02 : f32
    %177 = vector.broadcast %cst_73 : f32 to vector<128x1xf32>
    %178 = arith.divf %176, %177 : vector<128x1xf32>
    %179 = vector.broadcast %178 : vector<128x1xf32> to vector<128x128xf32>
    %180 = arith.subf %172, %179 : vector<128x128xf32>
    %181 = arith.mulf %180, %180 : vector<128x128xf32>
    %cst_74 = arith.constant dense<0.000000e+00> : vector<128xf32>
    %182 = vector.multi_reduction <add>, %181, %cst_74 [1] : vector<128x128xf32> to vector<128xf32>
    %183 = vector.shape_cast %182 : vector<128xf32> to vector<128x1xf32>
    %cst_75 = arith.constant 1.280000e+02 : f32
    %184 = vector.broadcast %cst_75 : f32 to vector<128x1xf32>
    %185 = arith.divf %183, %184 : vector<128x1xf32>
    %186 = vector.broadcast %178 : vector<128x1xf32> to vector<128x128xf32>
    %187 = arith.subf %172, %186 : vector<128x128xf32>
    %cst_76 = arith.constant 9.99999974E-6 : f32
    %188 = vector.broadcast %cst_76 : f32 to vector<128x1xf32>
    %189 = arith.addf %185, %188 : vector<128x1xf32>
    %190 = math.rsqrt %189 : vector<128x1xf32>
    %191 = vector.broadcast %190 : vector<128x1xf32> to vector<128x128xf32>
    %192 = arith.mulf %187, %191 : vector<128x128xf32>
    %193 = vector.broadcast %173 : vector<1x128xf32> to vector<128x128xf32>
    %194 = arith.mulf %192, %193 : vector<128x128xf32>
    %195 = vector.broadcast %174 : vector<1x128xf32> to vector<128x128xf32>
    %196 = arith.addf %194, %195 : vector<128x128xf32>
    %197 = arith.truncf %196 : vector<128x128xf32> to vector<128x128xbf16>
    %cst_77 = arith.constant 0.000000e+00 : f32
    %198 = vector.broadcast %cst_77 : f32 to vector<128x128xf32>
    %c0_78 = arith.constant 0 : index
    %c0_79 = arith.constant 0 : index
    %199 = vector.load %arg20[%c0_78, %c0_79] : memref<128x512xbf16, #tpu.memory_space<vmem>>, vector<128x128xbf16>
    %cst_80 = arith.constant dense<0.000000e+00> : vector<128x128xf32>
    %200 = tpu.matmul %197, %199, %cst_80 {dimension_numbers = #tpu.dot_dimension_numbers<[1], [0], [0], [1], [0, 0, 1, 1], [], []>} : vector<128x128xbf16>, vector<128x128xbf16>, vector<128x128xf32> -> vector<128x128xf32>
    %c0_81 = arith.constant 0 : index
    %c0_82 = arith.constant 0 : index
    %201 = vector.load %arg21[%c0_81, %c0_82] : memref<1x512xf32, #tpu.memory_space<vmem>>, vector<1x128xf32>
    %202 = vector.broadcast %201 : vector<1x128xf32> to vector<128x128xf32>
    %203 = arith.addf %200, %202 : vector<128x128xf32>
    %cst_83 = arith.constant 1.702000e+00 : f32
    %204 = vector.broadcast %cst_83 : f32 to vector<128x128xf32>
    %205 = arith.mulf %204, %203 : vector<128x128xf32>
    %206 = arith.negf %205 : vector<128x128xf32>
    %207 = math.exp %206 : vector<128x128xf32>
    %cst_84 = arith.constant 1.000000e+00 : f32
    %208 = vector.broadcast %cst_84 : f32 to vector<128x128xf32>
    %209 = arith.addf %208, %207 : vector<128x128xf32>
    %210 = arith.divf %208, %209 : vector<128x128xf32>
    %211 = arith.mulf %203, %210 : vector<128x128xf32>
    %212 = arith.truncf %211 : vector<128x128xf32> to vector<128x128xbf16>
    %c0_85 = arith.constant 0 : index
    %c0_86 = arith.constant 0 : index
    %213 = vector.load %arg22[%c0_85, %c0_86] : memref<512x128xbf16, #tpu.memory_space<vmem>>, vector<128x128xbf16>
    %cst_87 = arith.constant dense<0.000000e+00> : vector<128x128xf32>
    %214 = tpu.matmul %212, %213, %cst_87 {dimension_numbers = #tpu.dot_dimension_numbers<[1], [0], [0], [1], [0, 0, 1, 1], [], []>} : vector<128x128xbf16>, vector<128x128xbf16>, vector<128x128xf32> -> vector<128x128xf32>
    %215 = arith.addf %198, %214 : vector<128x128xf32>
    %c0_88 = arith.constant 0 : index
    %c128 = arith.constant 128 : index
    %216 = vector.load %arg20[%c0_88, %c128] : memref<128x512xbf16, #tpu.memory_space<vmem>>, vector<128x128xbf16>
    %cst_89 = arith.constant dense<0.000000e+00> : vector<128x128xf32>
    %217 = tpu.matmul %197, %216, %cst_89 {dimension_numbers = #tpu.dot_dimension_numbers<[1], [0], [0], [1], [0, 0, 1, 1], [], []>} : vector<128x128xbf16>, vector<128x128xbf16>, vector<128x128xf32> -> vector<128x128xf32>
    %c0_90 = arith.constant 0 : index
    %c128_91 = arith.constant 128 : index
    %218 = vector.load %arg21[%c0_90, %c128_91] : memref<1x512xf32, #tpu.memory_space<vmem>>, vector<1x128xf32>
    %219 = vector.broadcast %218 : vector<1x128xf32> to vector<128x128xf32>
    %220 = arith.addf %217, %219 : vector<128x128xf32>
    %cst_92 = arith.constant 1.702000e+00 : f32
    %221 = vector.broadcast %cst_92 : f32 to vector<128x128xf32>
    %222 = arith.mulf %221, %220 : vector<128x128xf32>
    %223 = arith.negf %222 : vector<128x128xf32>
    %224 = math.exp %223 : vector<128x128xf32>
    %cst_93 = arith.constant 1.000000e+00 : f32
    %225 = vector.broadcast %cst_93 : f32 to vector<128x128xf32>
    %226 = arith.addf %225, %224 : vector<128x128xf32>
    %227 = arith.divf %225, %226 : vector<128x128xf32>
    %228 = arith.mulf %220, %227 : vector<128x128xf32>
    %229 = arith.truncf %228 : vector<128x128xf32> to vector<128x128xbf16>
    %c128_94 = arith.constant 128 : index
    %c0_95 = arith.constant 0 : index
    %230 = vector.load %arg22[%c128_94, %c0_95] : memref<512x128xbf16, #tpu.memory_space<vmem>>, vector<128x128xbf16>
    %cst_96 = arith.constant dense<0.000000e+00> : vector<128x128xf32>
    %231 = tpu.matmul %229, %230, %cst_96 {dimension_numbers = #tpu.dot_dimension_numbers<[1], [0], [0], [1], [0, 0, 1, 1], [], []>} : vector<128x128xbf16>, vector<128x128xbf16>, vector<128x128xf32> -> vector<128x128xf32>
    %232 = arith.addf %215, %231 : vector<128x128xf32>
    %c0_97 = arith.constant 0 : index
    %c256 = arith.constant 256 : index
    %233 = vector.load %arg20[%c0_97, %c256] : memref<128x512xbf16, #tpu.memory_space<vmem>>, vector<128x128xbf16>
    %cst_98 = arith.constant dense<0.000000e+00> : vector<128x128xf32>
    %234 = tpu.matmul %197, %233, %cst_98 {dimension_numbers = #tpu.dot_dimension_numbers<[1], [0], [0], [1], [0, 0, 1, 1], [], []>} : vector<128x128xbf16>, vector<128x128xbf16>, vector<128x128xf32> -> vector<128x128xf32>
    %c0_99 = arith.constant 0 : index
    %c256_100 = arith.constant 256 : index
    %235 = vector.load %arg21[%c0_99, %c256_100] : memref<1x512xf32, #tpu.memory_space<vmem>>, vector<1x128xf32>
    %236 = vector.broadcast %235 : vector<1x128xf32> to vector<128x128xf32>
    %237 = arith.addf %234, %236 : vector<128x128xf32>
    %cst_101 = arith.constant 1.702000e+00 : f32
    %238 = vector.broadcast %cst_101 : f32 to vector<128x128xf32>
    %239 = arith.mulf %238, %237 : vector<128x128xf32>
    %240 = arith.negf %239 : vector<128x128xf32>
    %241 = math.exp %240 : vector<128x128xf32>
    %cst_102 = arith.constant 1.000000e+00 : f32
    %242 = vector.broadcast %cst_102 : f32 to vector<128x128xf32>
    %243 = arith.addf %242, %241 : vector<128x128xf32>
    %244 = arith.divf %242, %243 : vector<128x128xf32>
    %245 = arith.mulf %237, %244 : vector<128x128xf32>
    %246 = arith.truncf %245 : vector<128x128xf32> to vector<128x128xbf16>
    %c256_103 = arith.constant 256 : index
    %c0_104 = arith.constant 0 : index
    %247 = vector.load %arg22[%c256_103, %c0_104] : memref<512x128xbf16, #tpu.memory_space<vmem>>, vector<128x128xbf16>
    %cst_105 = arith.constant dense<0.000000e+00> : vector<128x128xf32>
    %248 = tpu.matmul %246, %247, %cst_105 {dimension_numbers = #tpu.dot_dimension_numbers<[1], [0], [0], [1], [0, 0, 1, 1], [], []>} : vector<128x128xbf16>, vector<128x128xbf16>, vector<128x128xf32> -> vector<128x128xf32>
    %249 = arith.addf %232, %248 : vector<128x128xf32>
    %c0_106 = arith.constant 0 : index
    %c384 = arith.constant 384 : index
    %250 = vector.load %arg20[%c0_106, %c384] : memref<128x512xbf16, #tpu.memory_space<vmem>>, vector<128x128xbf16>
    %cst_107 = arith.constant dense<0.000000e+00> : vector<128x128xf32>
    %251 = tpu.matmul %197, %250, %cst_107 {dimension_numbers = #tpu.dot_dimension_numbers<[1], [0], [0], [1], [0, 0, 1, 1], [], []>} : vector<128x128xbf16>, vector<128x128xbf16>, vector<128x128xf32> -> vector<128x128xf32>
    %c0_108 = arith.constant 0 : index
    %c384_109 = arith.constant 384 : index
    %252 = vector.load %arg21[%c0_108, %c384_109] : memref<1x512xf32, #tpu.memory_space<vmem>>, vector<1x128xf32>
    %253 = vector.broadcast %252 : vector<1x128xf32> to vector<128x128xf32>
    %254 = arith.addf %251, %253 : vector<128x128xf32>
    %cst_110 = arith.constant 1.702000e+00 : f32
    %255 = vector.broadcast %cst_110 : f32 to vector<128x128xf32>
    %256 = arith.mulf %255, %254 : vector<128x128xf32>
    %257 = arith.negf %256 : vector<128x128xf32>
    %258 = math.exp %257 : vector<128x128xf32>
    %cst_111 = arith.constant 1.000000e+00 : f32
    %259 = vector.broadcast %cst_111 : f32 to vector<128x128xf32>
    %260 = arith.addf %259, %258 : vector<128x128xf32>
    %261 = arith.divf %259, %260 : vector<128x128xf32>
    %262 = arith.mulf %254, %261 : vector<128x128xf32>
    %263 = arith.truncf %262 : vector<128x128xf32> to vector<128x128xbf16>
    %c384_112 = arith.constant 384 : index
    %c0_113 = arith.constant 0 : index
    %264 = vector.load %arg22[%c384_112, %c0_113] : memref<512x128xbf16, #tpu.memory_space<vmem>>, vector<128x128xbf16>
    %cst_114 = arith.constant dense<0.000000e+00> : vector<128x128xf32>
    %265 = tpu.matmul %263, %264, %cst_114 {dimension_numbers = #tpu.dot_dimension_numbers<[1], [0], [0], [1], [0, 0, 1, 1], [], []>} : vector<128x128xbf16>, vector<128x128xbf16>, vector<128x128xf32> -> vector<128x128xf32>
    %266 = arith.addf %249, %265 : vector<128x128xf32>
    %267 = arith.addf %172, %266 : vector<128x128xf32>
    %c0_115 = arith.constant 0 : index
    %c0_116 = arith.constant 0 : index
    %268 = vector.load %arg23[%c0_115, %c0_116] : memref<1x128xf32, #tpu.memory_space<vmem>>, vector<1x128xf32>
    %269 = vector.broadcast %268 : vector<1x128xf32> to vector<128x128xf32>
    %270 = arith.addf %267, %269 : vector<128x128xf32>
    %c0_117 = arith.constant 0 : index
    %c0_118 = arith.constant 0 : index
    %271 = vector.load %arg24[%c0_117, %c0_118] : memref<128x128xf32, #tpu.memory_space<vmem>>, vector<128x128xf32>
    tpu.vector_store %arg24[%c0_117, %c0_118], %270 {strides = array<i32>} : memref<128x128xf32, #tpu.memory_space<vmem>>, vector<128x128xf32>,
    return
  }
}

</mosaic_0001>

<llo_original>
// kernel: stadapt_block_forward.1
$region0: #{stadapt_block_forward.1}
  #allocation0 [shape = 'u32[]', space=smem, size = 0x4, offset = 0x4, fixed_abs, tag = 'smem constant byte address 0x4 - core index']
  #allocation1 [shape = 'u32[144,128]{1,0:T(1,128)}', space=vmem, size = 0x12000, scoped, tag = 'internal scratch']
  %s0 = inlined_call_operand.vmem [shape: f32[128,128], index: 0, kind: input, shape index: {}]
  %s1 = inlined_call_operand.vmem [shape: f32[128,128], index: 1, kind: input, shape index: {}]
  %s2 = inlined_call_operand.vmem [shape: f32[128,1], index: 2, kind: input, shape index: {}]
  %s3 = inlined_call_operand.vmem [shape: f32[128,1], index: 3, kind: input, shape index: {}]
  %s4 = inlined_call_operand.vmem [shape: f32[128,1], index: 4, kind: input, shape index: {}]
  %s5 = inlined_call_operand.vmem [shape: f32[4,128], index: 5, kind: input, shape index: {}]
  %s6 = inlined_call_operand.vmem [shape: bf16[128,128], index: 6, kind: input, shape index: {}]
  %s7 = inlined_call_operand.vmem [shape: f32[1,128], index: 7, kind: input, shape index: {}]
  %s8 = inlined_call_operand.vmem [shape: f32[3,128], index: 8, kind: input, shape index: {}]
  %s9 = inlined_call_operand.vmem [shape: f32[1,128], index: 9, kind: input, shape index: {}]
  %s10 = inlined_call_operand.vmem [shape: bf16[128,128], index: 10, kind: input, shape index: {}]
  %s11 = inlined_call_operand.vmem [shape: f32[1,128], index: 11, kind: input, shape index: {}]
  %s12 = inlined_call_operand.vmem [shape: f32[1,128], index: 12, kind: input, shape index: {}]
  %s13 = inlined_call_operand.vmem [shape: f32[1,128], index: 13, kind: input, shape index: {}]
  %s14 = inlined_call_operand.vmem [shape: bf16[128,384], index: 14, kind: input, shape index: {}]
  %s15 = inlined_call_operand.vmem [shape: f32[1,384], index: 15, kind: input, shape index: {}]
  %s16 = inlined_call_operand.vmem [shape: bf16[128,128], index: 16, kind: input, shape index: {}]
  %s17 = inlined_call_operand.vmem [shape: f32[1,128], index: 17, kind: input, shape index: {}]
  %s18 = inlined_call_operand.vmem [shape: f32[1,128], index: 18, kind: input, shape index: {}]
  %s19 = inlined_call_operand.vmem [shape: f32[1,128], index: 19, kind: input, shape index: {}]
  %s20 = inlined_call_operand.vmem [shape: bf16[128,512], index: 20, kind: input, shape index: {}]
  %s21 = inlined_call_operand.vmem [shape: f32[1,512], index: 21, kind: input, shape index: {}]
  %s22 = inlined_call_operand.vmem [shape: bf16[512,128], index: 22, kind: input, shape index: {}]
  %s23 = inlined_call_operand.vmem [shape: f32[1,128], index: 23, kind: input, shape index: {}]
  %s24 = inlined_call_operand.vmem [shape: f32[128,128], index: 24, kind: output, shape index: {}]
  %s25 = sld [smem:[#allocation0]]
  $region106: #{stadapt_block_forward.1} parent=0
    _
  %s27 = ssub.s32 1, %s25
  %s28 = scalar_select 0, %s27, %s25
  // Predicated region
  $region2: #{stadapt_block_forward.1} parent=0 // pred_check
    _
  $region3: #{stadapt_block_forward.1} parent=0 // pred_check_branch
    %30 = sbr.rel (0) target = $region5
  $region4: #{stadapt_block_forward.1} parent=0 // pred_region
    _
  $region5: #{stadapt_block_forward.1} parent=0 // pred_fallthru
    _
  // Predicated region
  $region6: #{stadapt_block_forward.1} parent=0 // pred_check
    _
  $region7: #{stadapt_block_forward.1} parent=0 // pred_check_branch
    %32 = sbr.rel (0) target = $region9
  $region8: #{stadapt_block_forward.1} parent=0 // pred_region
    _
  $region9: #{stadapt_block_forward.1} parent=0 // pred_fallthru
    _
  // Predicated region
  $region10: #{stadapt_block_forward.1} parent=0 // pred_check
    _
  $region11: #{stadapt_block_forward.1} parent=0 // pred_check_branch
    %34 = sbr.rel (0) target = $region13
  $region12: #{stadapt_block_forward.1} parent=0 // pred_region
    _
  $region13: #{stadapt_block_forward.1} parent=0 // pred_fallthru
    _
  // Predicated region
  $region14: #{stadapt_block_forward.1} parent=0 // pred_check
    _
  $region15: #{stadapt_block_forward.1} parent=0 // pred_check_branch
    %36 = sbr.rel (0) target = $region17
  $region16: #{stadapt_block_forward.1} parent=0 // pred_region
    _
  $region17: #{stadapt_block_forward.1} parent=0 // pred_fallthru
    _
  // Predicated region
  $region18: #{stadapt_block_forward.1} parent=0 // pred_check
    _
  $region19: #{stadapt_block_forward.1} parent=0 // pred_check_branch
    %38 = sbr.rel (0) target = $region21
  $region20: #{stadapt_block_forward.1} parent=0 // pred_region
    _
  $region21: #{stadapt_block_forward.1} parent=0 // pred_fallthru
    _
  // Predicated region
  $region22: #{stadapt_block_forward.1} parent=0 // pred_check
    _
  $region23: #{stadapt_block_forward.1} parent=0 // pred_check_branch
    %40 = sbr.rel (0) target = $region25
  $region24: #{stadapt_block_forward.1} parent=0 // pred_region
    _
  $region25: #{stadapt_block_forward.1} parent=0 // pred_fallthru
    _
  // Predicated region
  $region26: #{stadapt_block_forward.1} parent=0 // pred_check
    _
  $region27: #{stadapt_block_forward.1} parent=0 // pred_check_branch
    %42 = sbr.rel (0) target = $region29
  $region28: #{stadapt_block_forward.1} parent=0 // pred_region
    _
  $region29: #{stadapt_block_forward.1} parent=0 // pred_fallthru
    _
  // Predicated region
  $region30: #{stadapt_block_forward.1} parent=0 // pred_check
    _
  $region31: #{stadapt_block_forward.1} parent=0 // pred_check_branch
    %44 = sbr.rel (0) target = $region33
  $region32: #{stadapt_block_forward.1} parent=0 // pred_region
    _
  $region33: #{stadapt_block_forward.1} parent=0 // pred_fallthru
    _
  // Predicated region
  $region34: #{stadapt_block_forward.1} parent=0 // pred_check
    _
  $region35: #{stadapt_block_forward.1} parent=0 // pred_check_branch
    %46 = sbr.rel (0) target = $region37
  $region36: #{stadapt_block_forward.1} parent=0 // pred_region
    _
  $region37: #{stadapt_block_forward.1} parent=0 // pred_fallthru
    _
  // Predicated region
  $region38: #{stadapt_block_forward.1} parent=0 // pred_check
    _
  $region39: #{stadapt_block_forward.1} parent=0 // pred_check_branch
    %48 = sbr.rel (0) target = $region41
  $region40: #{stadapt_block_forward.1} parent=0 // pred_region
    _
  $region41: #{stadapt_block_forward.1} parent=0 // pred_fallthru
    _
  // Predicated region
  $region42: #{stadapt_block_forward.1} parent=0 // pred_check
    _
  $region43: #{stadapt_block_forward.1} parent=0 // pred_check_branch
    %50 = sbr.rel (0) target = $region45
  $region44: #{stadapt_block_forward.1} parent=0 // pred_region
    _
  $region45: #{stadapt_block_forward.1} parent=0 // pred_fallthru
    _
  // Predicated region
  $region46: #{stadapt_block_forward.1} parent=0 // pred_check
    _
  $region47: #{stadapt_block_forward.1} parent=0 // pred_check_branch
    %52 = sbr.rel (0) target = $region49
  $region48: #{stadapt_block_forward.1} parent=0 // pred_region
    _
  $region49: #{stadapt_block_forward.1} parent=0 // pred_fallthru
    _
  // Predicated region
  $region50: #{stadapt_block_forward.1} parent=0 // pred_check
    _
  $region51: #{stadapt_block_forward.1} parent=0 // pred_check_branch
    %54 = sbr.rel (0) target = $region53
  $region52: #{stadapt_block_forward.1} parent=0 // pred_region
    _
  $region53: #{stadapt_block_forward.1} parent=0 // pred_fallthru
    _
  // Predicated region
  $region54: #{stadapt_block_forward.1} parent=0 // pred_check
    _
  $region55: #{stadapt_block_forward.1} parent=0 // pred_check_branch
    %56 = sbr.rel (0) target = $region57
  $region56: #{stadapt_block_forward.1} parent=0 // pred_region
    _
  $region57: #{stadapt_block_forward.1} parent=0 // pred_fallthru
    _
  // Predicated region
  $region58: #{stadapt_block_forward.1} parent=0 // pred_check
    _
  $region59: #{stadapt_block_forward.1} parent=0 // pred_check_branch
    %58 = sbr.rel (0) target = $region61
  $region60: #{stadapt_block_forward.1} parent=0 // pred_region
    _
  $region61: #{stadapt_block_forward.1} parent=0 // pred_fallthru
    _
  // Predicated region
  $region62: #{stadapt_block_forward.1} parent=0 // pred_check
    _
  $region63: #{stadapt_block_forward.1} parent=0 // pred_check_branch
    %60 = sbr.rel (0) target = $region65
  $region64: #{stadapt_block_forward.1} parent=0 // pred_region
    _
  $region65: #{stadapt_block_forward.1} parent=0 // pred_fallthru
    _
  // Predicated region
  $region66: #{stadapt_block_forward.1} parent=0 // pred_check
    _
  $region67: #{stadapt_block_forward.1} parent=0 // pred_check_branch
    %62 = sbr.rel (0) target = $region69
  $region68: #{stadapt_block_forward.1} parent=0 // pred_region
    _
  $region69: #{stadapt_block_forward.1} parent=0 // pred_fallthru
    _
  // Predicated region
  $region70: #{stadapt_block_forward.1} parent=0 // pred_check
    _
  $region71: #{stadapt_block_forward.1} parent=0 // pred_check_branch
    %64 = sbr.rel (0) target = $region73
  $region72: #{stadapt_block_forward.1} parent=0 // pred_region
    _
  $region73: #{stadapt_block_forward.1} parent=0 // pred_fallthru
    _
  // Predicated region
  $region74: #{stadapt_block_forward.1} parent=0 // pred_check
    _
  $region75: #{stadapt_block_forward.1} parent=0 // pred_check_branch
    %66 = sbr.rel (0) target = $region77
  $region76: #{stadapt_block_forward.1} parent=0 // pred_region
    _
  $region77: #{stadapt_block_forward.1} parent=0 // pred_fallthru
    _
  // Predicated region
  $region78: #{stadapt_block_forward.1} parent=0 // pred_check
    _
  $region79: #{stadapt_block_forward.1} parent=0 // pred_check_branch
    %68 = sbr.rel (0) target = $region81
  $region80: #{stadapt_block_forward.1} parent=0 // pred_region
    _
  $region81: #{stadapt_block_forward.1} parent=0 // pred_fallthru
    _
  // Predicated region
  $region82: #{stadapt_block_forward.1} parent=0 // pred_check
    _
  $region83: #{stadapt_block_forward.1} parent=0 // pred_check_branch
    %70 = sbr.rel (0) target = $region85
  $region84: #{stadapt_block_forward.1} parent=0 // pred_region
    _
  $region85: #{stadapt_block_forward.1} parent=0 // pred_fallthru
    _
  // Predicated region
  $region86: #{stadapt_block_forward.1} parent=0 // pred_check
    _
  $region87: #{stadapt_block_forward.1} parent=0 // pred_check_branch
    %72 = sbr.rel (0) target = $region89
  $region88: #{stadapt_block_forward.1} parent=0 // pred_region
    _
  $region89: #{stadapt_block_forward.1} parent=0 // pred_fallthru
    _
  // Predicated region
  $region90: #{stadapt_block_forward.1} parent=0 // pred_check
    _
  $region91: #{stadapt_block_forward.1} parent=0 // pred_check_branch
    %74 = sbr.rel (0) target = $region93
  $region92: #{stadapt_block_forward.1} parent=0 // pred_region
    _
  $region93: #{stadapt_block_forward.1} parent=0 // pred_fallthru
    _
  // Predicated region
  $region94: #{stadapt_block_forward.1} parent=0 // pred_check
    _
  $region95: #{stadapt_block_forward.1} parent=0 // pred_check_branch
    %76 = sbr.rel (0) target = $region97
  $region96: #{stadapt_block_forward.1} parent=0 // pred_region
    _
  $region97: #{stadapt_block_forward.1} parent=0 // pred_fallthru
    _
  %v78 = vld [vmem:[%s0] sm:$0xff]
  %v79 = vld [vmem:[%s0 + $0x8] sm:$0xff]
  %v80 = vld [vmem:[%s0 + $0x10] sm:$0xff]
  %v81 = vld [vmem:[%s0 + $0x18] sm:$0xff]
  %v82 = vld [vmem:[%s0 + $0x20] sm:$0xff]
  %v83 = vld [vmem:[%s0 + $0x28] sm:$0xff]
  %v84 = vld [vmem:[%s0 + $0x30] sm:$0xff]
  %v85 = vld [vmem:[%s0 + $0x38] sm:$0xff]
  %v86 = vld [vmem:[%s0 + $0x40] sm:$0xff]
  %v87 = vld [vmem:[%s0 + $0x48] sm:$0xff]
  %v88 = vld [vmem:[%s0 + $0x50] sm:$0xff]
  %v89 = vld [vmem:[%s0 + $0x58] sm:$0xff]
  %v90 = vld [vmem:[%s0 + $0x60] sm:$0xff]
  %v91 = vld [vmem:[%s0 + $0x68] sm:$0xff]
  %v92 = vld [vmem:[%s0 + $0x70] sm:$0xff]
  %v93 = vld [vmem:[%s0 + $0x78] sm:$0xff]
  %v94 = vpack.c.bf16 %v79, %v78
  %v95 = vpack.c.bf16 %v81, %v80
  %v96 = vpack.c.bf16 %v83, %v82
  %v97 = vpack.c.bf16 %v85, %v84
  %v98 = vpack.c.bf16 %v87, %v86
  %v99 = vpack.c.bf16 %v89, %v88
  %v100 = vpack.c.bf16 %v91, %v90
  %v101 = vpack.c.bf16 %v93, %v92
  %v102 = vld [vmem:[%s6] sm:$0xf]
  %v103 = vld [vmem:[%s6 + $0x4] sm:$0xf]
  %v104 = vld [vmem:[%s6 + $0x8] sm:$0xf]
  %v105 = vld [vmem:[%s6 + $0xc] sm:$0xf]
  %v106 = vld [vmem:[%s6 + $0x10] sm:$0xf]
  %v107 = vld [vmem:[%s6 + $0x14] sm:$0xf]
  %v108 = vld [vmem:[%s6 + $0x18] sm:$0xf]
  %v109 = vld [vmem:[%s6 + $0x1c] sm:$0xf]
  %v110 = vld [vmem:[%s6 + $0x20] sm:$0xf]
  %v111 = vld [vmem:[%s6 + $0x24] sm:$0xf]
  %v112 = vld [vmem:[%s6 + $0x28] sm:$0xf]
  %v113 = vld [vmem:[%s6 + $0x2c] sm:$0xf]
  %v114 = vld [vmem:[%s6 + $0x30] sm:$0xf]
  %v115 = vld [vmem:[%s6 + $0x34] sm:$0xf]
  %v116 = vld [vmem:[%s6 + $0x38] sm:$0xf]
  %v117 = vld [vmem:[%s6 + $0x3c] sm:$0xf]
  %v118 = vld [vmem:[%s7] sm:$0x1]
  %v120 = vlaneseq
  %v121 = vshrl.u32 %v120, 7
  %v122 = vsub.s32 0, %v121
  %v123 = vrot.slane %v118, %v122
  %v141 = vunpack.c.l.b16 %v102
  %v142 = vunpack.c.l.b16 %v103
  %v143 = vunpack.c.l.b16 %v104
  %v144 = vunpack.c.l.b16 %v105
  %v145 = vunpack.c.l.b16 %v106
  %v146 = vunpack.c.l.b16 %v107
  %v147 = vunpack.c.l.b16 %v108
  %v148 = vunpack.c.l.b16 %v109
  %v149 = vunpack.c.l.b16 %v110
  %v150 = vunpack.c.l.b16 %v111
  %v151 = vunpack.c.l.b16 %v112
  %v152 = vunpack.c.l.b16 %v113
  %v153 = vunpack.c.l.b16 %v114
  %v154 = vunpack.c.l.b16 %v115
  %v155 = vunpack.c.l.b16 %v116
  %v156 = vunpack.c.l.b16 %v117
  %v157 = vpack.c.b16 %v142, %v141
  %v158 = vpack.c.b16 %v144, %v143
  %v159 = vpack.c.b16 %v146, %v145
  %v160 = vpack.c.b16 %v148, %v147
  %v161 = vpack.c.b16 %v150, %v149
  %v162 = vpack.c.b16 %v152, %v151
  %v163 = vpack.c.b16 %v154, %v153
  %v164 = vpack.c.b16 %v156, %v155
  %173 = vmatprep.subr.bf16.mxu0 0
  %174 = vmatpush1.bf16.msra.mxu0 %v157
  %175 = vmatprep.subr.bf16.mxu0 0
  %176 = vmatpush1.bf16.msra.mxu0 %v158
  %177 = vmatprep.subr.bf16.mxu0 0
  %178 = vmatpush1.bf16.msra.mxu0 %v159
  %179 = vmatprep.subr.bf16.mxu0 0
  %180 = vmatpush1.bf16.msra.mxu0 %v160
  %181 = vmatprep.subr.bf16.mxu0 0
  %182 = vmatpush1.bf16.msra.mxu0 %v161
  %183 = vmatprep.subr.bf16.mxu0 0
  %184 = vmatpush1.bf16.msra.mxu0 %v162
  %185 = vmatprep.subr.bf16.mxu0 0
  %186 = vmatpush1.bf16.msra.mxu0 %v163
  %187 = vmatprep.subr.bf16.mxu0 0
  %188 = vmatpush1.bf16.msra.mxu0 %v164
  %189 = vmatprep.subr.bf16.mxu0 0
  %190 = vmatpush1.bf16.msra.mxu0 0
  %191 = vmatprep.subr.bf16.mxu0 0
  %192 = vmatpush1.bf16.msra.mxu0 0
  %193 = vmatprep.subr.bf16.mxu0 0
  %194 = vmatpush1.bf16.msra.mxu0 0
  %195 = vmatprep.subr.bf16.mxu0 0
  %196 = vmatpush1.bf16.msra.mxu0 0
  %197 = vmatprep.subr.bf16.mxu0 0
  %198 = vmatpush1.bf16.msra.mxu0 0
  %199 = vmatprep.subr.bf16.mxu0 0
  %200 = vmatpush1.bf16.msra.mxu0 0
  %201 = vmatprep.subr.bf16.mxu0 0
  %202 = vmatpush1.bf16.msra.mxu0 0
  %203 = vmatprep.subr.bf16.mxu0 0
  %204 = vmatpush1.bf16.msra.mxu0 0
  %205 = vmatprep.mubr.bf16.mxu0 0
  %206 = vmatmul.mubr.bf16.gmra.mrb[0].mxu0 %v94
  %v207 = vpop.f32.mrb[0].mxu0
  %v208 = vadd.f32 %v123, %v207
  %v209 = vpop.f32.mrb[0].mxu0
  %v210 = vpop.f32.mrb[0].mxu0
  %v211 = vadd.f32 %v123, %v210
  %v212 = vpop.f32.mrb[0].mxu0
  %213 = vmatprep.mubr.bf16.mxu0 0
  %214 = vmatmul.mubr.bf16.gmra.mrb[0].mxu0 %v95
  %v215 = vpop.f32.mrb[0].mxu0
  %v216 = vadd.f32 %v123, %v215
  %v217 = vpop.f32.mrb[0].mxu0
  %v218 = vpop.f32.mrb[0].mxu0
  %v219 = vadd.f32 %v123, %v218
  %v220 = vpop.f32.mrb[0].mxu0
  %221 = vmatprep.mubr.bf16.mxu0 0
  %222 = vmatmul.mubr.bf16.gmra.mrb[0].mxu0 %v96
  %v223 = vpop.f32.mrb[0].mxu0
  %v224 = vadd.f32 %v123, %v223
  %v225 = vpop.f32.mrb[0].mxu0
  %v226 = vpop.f32.mrb[0].mxu0
  %v227 = vadd.f32 %v123, %v226
  %v228 = vpop.f32.mrb[0].mxu0
  %229 = vmatprep.mubr.bf16.mxu0 0
  %230 = vmatmul.mubr.bf16.gmra.mrb[0].mxu0 %v97
  %v231 = vpop.f32.mrb[0].mxu0
  %v232 = vadd.f32 %v123, %v231
  %v233 = vpop.f32.mrb[0].mxu0
  %v234 = vpop.f32.mrb[0].mxu0
  %v235 = vadd.f32 %v123, %v234
  %v236 = vpop.f32.mrb[0].mxu0
  %237 = vmatprep.mubr.bf16.mxu0 0
  %238 = vmatmul.mubr.bf16.gmra.mrb[0].mxu0 %v98
  %v239 = vpop.f32.mrb[0].mxu0
  %v240 = vadd.f32 %v123, %v239
  %v241 = vpop.f32.mrb[0].mxu0
  %v242 = vpop.f32.mrb[0].mxu0
  %v243 = vadd.f32 %v123, %v242
  %v244 = vpop.f32.mrb[0].mxu0
  %245 = vmatprep.mubr.bf16.mxu0 0
  %246 = vmatmul.mubr.bf16.gmra.mrb[0].mxu0 %v99
  %v247 = vpop.f32.mrb[0].mxu0
  %v248 = vadd.f32 %v123, %v247
  %v249 = vpop.f32.mrb[0].mxu0
  %v250 = vpop.f32.mrb[0].mxu0
  %v251 = vadd.f32 %v123, %v250
  %v252 = vpop.f32.mrb[0].mxu0
  %253 = vmatprep.mubr.bf16.mxu0 0
  %254 = vmatmul.mubr.bf16.gmra.mrb[0].mxu0 %v100
  %v255 = vpop.f32.mrb[0].mxu0
  %v256 = vadd.f32 %v123, %v255
  %v257 = vpop.f32.mrb[0].mxu0
  %v258 = vpop.f32.mrb[0].mxu0
  %v259 = vadd.f32 %v123, %v258
  %v260 = vpop.f32.mrb[0].mxu0
  %261 = vmatprep.mubr.bf16.mxu0 0
  %262 = vmatmul.mubr.bf16.gmra.mrb[0].mxu0 %v101
  %v263 = vpop.f32.mrb[0].mxu0
  %v264 = vadd.f32 %v123, %v263
  %v265 = vpop.f32.mrb[0].mxu0
  %v266 = vpop.f32.mrb[0].mxu0
  %v267 = vadd.f32 %v123, %v266
  %v268 = vpop.f32.mrb[0].mxu0
  %269 = vdwg.mxu0
  %v270 = vrot.slane %v208, 7
  %v271 = vrot.slane %v211, 7
  %v272 = vrot.slane %v216, 7
  %v273 = vrot.slane %v219, 7
  %v274 = vrot.slane %v224, 7
  %v275 = vrot.slane %v227, 7
  %v276 = vrot.slane %v232, 7
  %v277 = vrot.slane %v235, 7
  %v278 = vrot.slane %v240, 7
  %v279 = vrot.slane %v243, 7
  %v280 = vrot.slane %v248, 7
  %v281 = vrot.slane %v251, 7
  %v282 = vrot.slane %v256, 7
  %v283 = vrot.slane %v259, 7
  %v284 = vrot.slane %v264, 7
  %v285 = vrot.slane %v267, 7
  %v286 = vlaneseq
  %v287 = vshrl.u32 %v286, 7
  %vm288 = vcmp.lt.s32.totalorder %v287, 1
  %v289 = vsel %vm288, %v284, %v285
  %v290 = vsel %vm288, %v283, %v284
  %v291 = vsel %vm288, %v282, %v283
  %v292 = vsel %vm288, %v281, %v282
  %v293 = vsel %vm288, %v280, %v281
  %v294 = vsel %vm288, %v279, %v280
  %v295 = vsel %vm288, %v278, %v279
  %v296 = vsel %vm288, %v277, %v278
  %v297 = vsel %vm288, %v276, %v277
  %v298 = vsel %vm288, %v275, %v276
  %v299 = vsel %vm288, %v274, %v275
  %v300 = vsel %vm288, %v273, %v274
  %v301 = vsel %vm288, %v272, %v273
  %v302 = vsel %vm288, %v271, %v272
  %v303 = vsel %vm288, %v270, %v271
  %v304 = vsel %vm288, %v285, %v270
  %v305 = vld [vmem:[%s3] sm:$0xff]
  %v306 = vld [vmem:[%s3 + $0x8] sm:$0xff]
  %v307 = vld [vmem:[%s3 + $0x10] sm:$0xff]
  %v308 = vld [vmem:[%s3 + $0x18] sm:$0xff]
  %v309 = vld [vmem:[%s3 + $0x20] sm:$0xff]
  %v310 = vld [vmem:[%s3 + $0x28] sm:$0xff]
  %v311 = vld [vmem:[%s3 + $0x30] sm:$0xff]
  %v312 = vld [vmem:[%s3 + $0x38] sm:$0xff]
  %v313 = vld [vmem:[%s3 + $0x40] sm:$0xff]
  %v314 = vld [vmem:[%s3 + $0x48] sm:$0xff]
  %v315 = vld [vmem:[%s3 + $0x50] sm:$0xff]
  %v316 = vld [vmem:[%s3 + $0x58] sm:$0xff]
  %v317 = vld [vmem:[%s3 + $0x60] sm:$0xff]
  %v318 = vld [vmem:[%s3 + $0x68] sm:$0xff]
  %v319 = vld [vmem:[%s3 + $0x70] sm:$0xff]
  %v320 = vld [vmem:[%s3 + $0x78] sm:$0xff]
  %322 = vset.pattern.permute.xlu0 0
  %323 = vperm.xlu0 %322, %v305
  %v324 = vpop.permute.xlu0 %323
  %327 = vset.pattern.permute.xlu0 0
  %328 = vperm.xlu0 %327, %v306
  %v329 = vpop.permute.xlu0 %328
  %332 = vset.pattern.permute.xlu0 0
  %333 = vperm.xlu0 %332, %v307
  %v334 = vpop.permute.xlu0 %333
  %337 = vset.pattern.permute.xlu0 0
  %338 = vperm.xlu0 %337, %v308
  %v339 = vpop.permute.xlu0 %338
  %342 = vset.pattern.permute.xlu0 0
  %343 = vperm.xlu0 %342, %v309
  %v344 = vpop.permute.xlu0 %343
  %347 = vset.pattern.permute.xlu0 0
  %348 = vperm.xlu0 %347, %v310
  %v349 = vpop.permute.xlu0 %348
  %352 = vset.pattern.permute.xlu0 0
  %353 = vperm.xlu0 %352, %v311
  %v354 = vpop.permute.xlu0 %353
  %357 = vset.pattern.permute.xlu0 0
  %358 = vperm.xlu0 %357, %v312
  %v359 = vpop.permute.xlu0 %358
  %362 = vset.pattern.permute.xlu0 0
  %363 = vperm.xlu0 %362, %v313
  %v364 = vpop.permute.xlu0 %363
  %367 = vset.pattern.permute.xlu0 0
  %368 = vperm.xlu0 %367, %v314
  %v369 = vpop.permute.xlu0 %368
  %372 = vset.pattern.permute.xlu0 0
  %373 = vperm.xlu0 %372, %v315
  %v374 = vpop.permute.xlu0 %373
  %377 = vset.pattern.permute.xlu0 0
  %378 = vperm.xlu0 %377, %v316
  %v379 = vpop.permute.xlu0 %378
  %382 = vset.pattern.permute.xlu0 0
  %383 = vperm.xlu0 %382, %v317
  %v384 = vpop.permute.xlu0 %383
  %387 = vset.pattern.permute.xlu0 0
  %388 = vperm.xlu0 %387, %v318
  %v389 = vpop.permute.xlu0 %388
  %392 = vset.pattern.permute.xlu0 0
  %393 = vperm.xlu0 %392, %v319
  %v394 = vpop.permute.xlu0 %393
  %397 = vset.pattern.permute.xlu0 0
  %398 = vperm.xlu0 %397, %v320
  %v399 = vpop.permute.xlu0 %398
  %v401 = vmul.f32 %v290, %v324
  %v402 = vmul.f32 %v289, %v329
  %v403 = vmul.f32 %v304, %v334
  %v404 = vmul.f32 %v303, %v339
  %v405 = vmul.f32 %v302, %v344
  %v406 = vmul.f32 %v301, %v349
  %v407 = vmul.f32 %v300, %v354
  %v408 = vmul.f32 %v299, %v359
  %v409 = vmul.f32 %v298, %v364
  %v410 = vmul.f32 %v297, %v369
  %v411 = vmul.f32 %v296, %v374
  %v412 = vmul.f32 %v295, %v379
  %v413 = vmul.f32 %v294, %v384
  %v414 = vmul.f32 %v293, %v389
  %v415 = vmul.f32 %v292, %v394
  %v416 = vmul.f32 %v291, %v399
  %v417 = vrot.slane %v208, 1
  %v418 = vrot.slane %v211, 1
  %v419 = vrot.slane %v216, 1
  %v420 = vrot.slane %v219, 1
  %v421 = vrot.slane %v224, 1
  %v422 = vrot.slane %v227, 1
  %v423 = vrot.slane %v232, 1
  %v424 = vrot.slane %v235, 1
  %v425 = vrot.slane %v240, 1
  %v426 = vrot.slane %v243, 1
  %v427 = vrot.slane %v248, 1
  %v428 = vrot.slane %v251, 1
  %v429 = vrot.slane %v256, 1
  %v430 = vrot.slane %v259, 1
  %v431 = vrot.slane %v264, 1
  %v432 = vrot.slane %v267, 1
  %vm433 = vcmp.lt.s32.totalorder %v287, 7
  %v434 = vsel %vm433, %v431, %v432
  %v435 = vsel %vm433, %v430, %v431
  %v436 = vsel %vm433, %v429, %v430
  %v437 = vsel %vm433, %v428, %v429
  %v438 = vsel %vm433, %v427, %v428
  %v439 = vsel %vm433, %v426, %v427
  %v440 = vsel %vm433, %v425, %v426
  %v441 = vsel %vm433, %v424, %v425
  %v442 = vsel %vm433, %v423, %v424
  %v443 = vsel %vm433, %v422, %v423
  %v444 = vsel %vm433, %v421, %v422
  %v445 = vsel %vm433, %v420, %v421
  %v446 = vsel %vm433, %v419, %v420
  %v447 = vsel %vm433, %v418, %v419
  %v448 = vsel %vm433, %v417, %v418
  %v449 = vsel %vm433, %v432, %v417
  %v450 = vld [vmem:[%s4] sm:$0xff]
  %v451 = vld [vmem:[%s4 + $0x8] sm:$0xff]
  %v452 = vld [vmem:[%s4 + $0x10] sm:$0xff]
  %v453 = vld [vmem:[%s4 + $0x18] sm:$0xff]
  %v454 = vld [vmem:[%s4 + $0x20] sm:$0xff]
  %v455 = vld [vmem:[%s4 + $0x28] sm:$0xff]
  %v456 = vld [vmem:[%s4 + $0x30] sm:$0xff]
  %v457 = vld [vmem:[%s4 + $0x38] sm:$0xff]
  %v458 = vld [vmem:[%s4 + $0x40] sm:$0xff]
  %v459 = vld [vmem:[%s4 + $0x48] sm:$0xff]
  %v460 = vld [vmem:[%s4 + $0x50] sm:$0xff]
  %v461 = vld [vmem:[%s4 + $0x58] sm:$0xff]
  %v462 = vld [vmem:[%s4 + $0x60] sm:$0xff]
  %v463 = vld [vmem:[%s4 + $0x68] sm:$0xff]
  %v464 = vld [vmem:[%s4 + $0x70] sm:$0xff]
  %v465 = vld [vmem:[%s4 + $0x78] sm:$0xff]
  %467 = vset.pattern.permute.xlu0 0
  %468 = vperm.xlu0 %467, %v450
  %v469 = vpop.permute.xlu0 %468
  %472 = vset.pattern.permute.xlu0 0
  %473 = vperm.xlu0 %472, %v451
  %v474 = vpop.permute.xlu0 %473
  %477 = vset.pattern.permute.xlu0 0
  %478 = vperm.xlu0 %477, %v452
  %v479 = vpop.permute.xlu0 %478
  %482 = vset.pattern.permute.xlu0 0
  %483 = vperm.xlu0 %482, %v453
  %v484 = vpop.permute.xlu0 %483
  %487 = vset.pattern.permute.xlu0 0
  %488 = vperm.xlu0 %487, %v454
  %v489 = vpop.permute.xlu0 %488
  %492 = vset.pattern.permute.xlu0 0
  %493 = vperm.xlu0 %492, %v455
  %v494 = vpop.permute.xlu0 %493
  %497 = vset.pattern.permute.xlu0 0
  %498 = vperm.xlu0 %497, %v456
  %v499 = vpop.permute.xlu0 %498
  %502 = vset.pattern.permute.xlu0 0
  %503 = vperm.xlu0 %502, %v457
  %v504 = vpop.permute.xlu0 %503
  %507 = vset.pattern.permute.xlu0 0
  %508 = vperm.xlu0 %507, %v458
  %v509 = vpop.permute.xlu0 %508
  %512 = vset.pattern.permute.xlu0 0
  %513 = vperm.xlu0 %512, %v459
  %v514 = vpop.permute.xlu0 %513
  %517 = vset.pattern.permute.xlu0 0
  %518 = vperm.xlu0 %517, %v460
  %v519 = vpop.permute.xlu0 %518
  %522 = vset.pattern.permute.xlu0 0
  %523 = vperm.xlu0 %522, %v461
  %v524 = vpop.permute.xlu0 %523
  %527 = vset.pattern.permute.xlu0 0
  %528 = vperm.xlu0 %527, %v462
  %v529 = vpop.permute.xlu0 %528
  %532 = vset.pattern.permute.xlu0 0
  %533 = vperm.xlu0 %532, %v463
  %v534 = vpop.permute.xlu0 %533
  %537 = vset.pattern.permute.xlu0 0
  %538 = vperm.xlu0 %537, %v464
  %v539 = vpop.permute.xlu0 %538
  %542 = vset.pattern.permute.xlu0 0
  %543 = vperm.xlu0 %542, %v465
  %v544 = vpop.permute.xlu0 %543
  %v546 = vmul.f32 %v446, %v469
  %v547 = vmul.f32 %v445, %v474
  %v548 = vmul.f32 %v444, %v479
  %v549 = vmul.f32 %v443, %v484
  %v550 = vmul.f32 %v442, %v489
  %v551 = vmul.f32 %v441, %v494
  %v552 = vmul.f32 %v440, %v499
  %v553 = vmul.f32 %v439, %v504
  %v554 = vmul.f32 %v438, %v509
  %v555 = vmul.f32 %v437, %v514
  %v556 = vmul.f32 %v436, %v519
  %v557 = vmul.f32 %v435, %v524
  %v558 = vmul.f32 %v434, %v529
  %v559 = vmul.f32 %v449, %v534
  %v560 = vmul.f32 %v448, %v539
  %v561 = vmul.f32 %v447, %v544
  %v562 = vld [vmem:[%s8] sm:$0x1]
  %v563 = vlaneseq
  %v564 = vshrl.u32 %v563, 7
  %v565 = vsub.s32 0, %v564
  %v566 = vrot.slane %v562, %v565
  %v567 = vmul.f32 %v401, %v566
  %v568 = vmul.f32 %v402, %v566
  %v569 = vmul.f32 %v403, %v566
  %v570 = vmul.f32 %v404, %v566
  %v571 = vmul.f32 %v405, %v566
  %v572 = vmul.f32 %v406, %v566
  %v573 = vmul.f32 %v407, %v566
  %v574 = vmul.f32 %v408, %v566
  %v575 = vmul.f32 %v409, %v566
  %v576 = vmul.f32 %v410, %v566
  %v577 = vmul.f32 %v411, %v566
  %v578 = vmul.f32 %v412, %v566
  %v579 = vmul.f32 %v413, %v566
  %v580 = vmul.f32 %v414, %v566
  %v581 = vmul.f32 %v415, %v566
  %v582 = vmul.f32 %v416, %v566
  %v583 = vld [vmem:[%s8 + $0x1] sm:$0x1]
  %v584 = vlaneseq
  %v585 = vshrl.u32 %v584, 7
  %v586 = vsub.s32 0, %v585
  %v587 = vrot.slane %v583, %v586
  %v588 = vmul.f32 %v208, %v587
  %v589 = vmul.f32 %v211, %v587
  %v590 = vmul.f32 %v216, %v587
  %v591 = vmul.f32 %v219, %v587
  %v592 = vmul.f32 %v224, %v587
  %v593 = vmul.f32 %v227, %v587
  %v594 = vmul.f32 %v232, %v587
  %v595 = vmul.f32 %v235, %v587
  %v596 = vmul.f32 %v240, %v587
  %v597 = vmul.f32 %v243, %v587
  %v598 = vmul.f32 %v248, %v587
  %v599 = vmul.f32 %v251, %v587
  %v600 = vmul.f32 %v256, %v587
  %v601 = vmul.f32 %v259, %v587
  %v602 = vmul.f32 %v264, %v587
  %v603 = vmul.f32 %v267, %v587
  %v604 = vadd.f32 %v567, %v588
  %v605 = vadd.f32 %v568, %v589
  %v606 = vadd.f32 %v569, %v590
  %v607 = vadd.f32 %v570, %v591
  %v608 = vadd.f32 %v571, %v592
  %v609 = vadd.f32 %v572, %v593
  %v610 = vadd.f32 %v573, %v594
  %v611 = vadd.f32 %v574, %v595
  %v612 = vadd.f32 %v575, %v596
  %v613 = vadd.f32 %v576, %v597
  %v614 = vadd.f32 %v577, %v598
  %v615 = vadd.f32 %v578, %v599
  %v616 = vadd.f32 %v579, %v600
  %v617 = vadd.f32 %v580, %v601
  %v618 = vadd.f32 %v581, %v602
  %v619 = vadd.f32 %v582, %v603
  %v620 = vld [vmem:[%s8 + $0x2] sm:$0x1]
  %v621 = vlaneseq
  %v622 = vshrl.u32 %v621, 7
  %v623 = vsub.s32 0, %v622
  %v624 = vrot.slane %v620, %v623
  %v625 = vmul.f32 %v546, %v624
  %v626 = vmul.f32 %v547, %v624
  %v627 = vmul.f32 %v548, %v624
  %v628 = vmul.f32 %v549, %v624
  %v629 = vmul.f32 %v550, %v624
  %v630 = vmul.f32 %v551, %v624
  %v631 = vmul.f32 %v552, %v624
  %v632 = vmul.f32 %v553, %v624
  %v633 = vmul.f32 %v554, %v624
  %v634 = vmul.f32 %v555, %v624
  %v635 = vmul.f32 %v556, %v624
  %v636 = vmul.f32 %v557, %v624
  %v637 = vmul.f32 %v558, %v624
  %v638 = vmul.f32 %v559, %v624
  %v639 = vmul.f32 %v560, %v624
  %v640 = vmul.f32 %v561, %v624
  %v641 = vadd.f32 %v604, %v625
  %v642 = vadd.f32 %v605, %v626
  %v643 = vadd.f32 %v606, %v627
  %v644 = vadd.f32 %v607, %v628
  %v645 = vadd.f32 %v608, %v629
  %v646 = vadd.f32 %v609, %v630
  %v647 = vadd.f32 %v610, %v631
  %v648 = vadd.f32 %v611, %v632
  %v649 = vadd.f32 %v612, %v633
  %v650 = vadd.f32 %v613, %v634
  %v651 = vadd.f32 %v614, %v635
  %v652 = vadd.f32 %v615, %v636
  %v653 = vadd.f32 %v616, %v637
  %v654 = vadd.f32 %v617, %v638
  %v655 = vadd.f32 %v618, %v639
  %v656 = vadd.f32 %v619, %v640
  %v657 = vld [vmem:[%s9] sm:$0x1]
  %v659 = vlaneseq
  %v660 = vshrl.u32 %v659, 7
  %v661 = vsub.s32 0, %v660
  %v662 = vrot.slane %v657, %v661
  %v664 = vadd.f32 %v641, %v662
  %v665 = vadd.f32 %v642, %v662
  %v666 = vadd.f32 %v643, %v662
  %v667 = vadd.f32 %v644, %v662
  %v668 = vadd.f32 %v645, %v662
  %v669 = vadd.f32 %v646, %v662
  %v670 = vadd.f32 %v647, %v662
  %v671 = vadd.f32 %v648, %v662
  %v672 = vadd.f32 %v649, %v662
  %v673 = vadd.f32 %v650, %v662
  %v674 = vadd.f32 %v651, %v662
  %v675 = vadd.f32 %v652, %v662
  %v676 = vadd.f32 %v653, %v662
  %v677 = vadd.f32 %v654, %v662
  %v678 = vadd.f32 %v655, %v662
  %v679 = vadd.f32 %v656, %v662
  %v680 = vpack.c.bf16 %v665, %v664
  %v681 = vpack.c.bf16 %v667, %v666
  %v682 = vpack.c.bf16 %v669, %v668
  %v683 = vpack.c.bf16 %v671, %v670
  %v684 = vpack.c.bf16 %v673, %v672
  %v685 = vpack.c.bf16 %v675, %v674
  %v686 = vpack.c.bf16 %v677, %v676
  %v687 = vpack.c.bf16 %v679, %v678
  %v688 = vld [vmem:[%s10] sm:$0xf]
  %v689 = vld [vmem:[%s10 + $0x4] sm:$0xf]
  %v690 = vld [vmem:[%s10 + $0x8] sm:$0xf]
  %v691 = vld [vmem:[%s10 + $0xc] sm:$0xf]
  %v692 = vld [vmem:[%s10 + $0x10] sm:$0xf]
  %v693 = vld [vmem:[%s10 + $0x14] sm:$0xf]
  %v694 = vld [vmem:[%s10 + $0x18] sm:$0xf]
  %v695 = vld [vmem:[%s10 + $0x1c] sm:$0xf]
  %v696 = vld [vmem:[%s10 + $0x20] sm:$0xf]
  %v697 = vld [vmem:[%s10 + $0x24] sm:$0xf]
  %v698 = vld [vmem:[%s10 + $0x28] sm:$0xf]
  %v699 = vld [vmem:[%s10 + $0x2c] sm:$0xf]
  %v700 = vld [vmem:[%s10 + $0x30] sm:$0xf]
  %v701 = vld [vmem:[%s10 + $0x34] sm:$0xf]
  %v702 = vld [vmem:[%s10 + $0x38] sm:$0xf]
  %v703 = vld [vmem:[%s10 + $0x3c] sm:$0xf]
  %v704 = vld [vmem:[%s11] sm:$0x1]
  %v706 = vlaneseq
  %v707 = vshrl.u32 %v706, 7
  %v708 = vsub.s32 0, %v707
  %v709 = vrot.slane %v704, %v708
  %v727 = vunpack.c.l.b16 %v688
  %v728 = vunpack.c.l.b16 %v689
  %v729 = vunpack.c.l.b16 %v690
  %v730 = vunpack.c.l.b16 %v691
  %v731 = vunpack.c.l.b16 %v692
  %v732 = vunpack.c.l.b16 %v693
  %v733 = vunpack.c.l.b16 %v694
  %v734 = vunpack.c.l.b16 %v695
  %v735 = vunpack.c.l.b16 %v696
  %v736 = vunpack.c.l.b16 %v697
  %v737 = vunpack.c.l.b16 %v698
  %v738 = vunpack.c.l.b16 %v699
  %v739 = vunpack.c.l.b16 %v700
  %v740 = vunpack.c.l.b16 %v701
  %v741 = vunpack.c.l.b16 %v702
  %v742 = vunpack.c.l.b16 %v703
  %v743 = vpack.c.b16 %v728, %v727
  %v744 = vpack.c.b16 %v730, %v729
  %v745 = vpack.c.b16 %v732, %v731
  %v746 = vpack.c.b16 %v734, %v733
  %v747 = vpack.c.b16 %v736, %v735
  %v748 = vpack.c.b16 %v738, %v737
  %v749 = vpack.c.b16 %v740, %v739
  %v750 = vpack.c.b16 %v742, %v741
  %759 = vmatprep.subr.bf16.mxu0 0
  %760 = vmatpush1.bf16.msra.mxu0 %v743
  %761 = vmatprep.subr.bf16.mxu0 0
  %762 = vmatpush1.bf16.msra.mxu0 %v744
  %763 = vmatprep.subr.bf16.mxu0 0
  %764 = vmatpush1.bf16.msra.mxu0 %v745
  %765 = vmatprep.subr.bf16.mxu0 0
  %766 = vmatpush1.bf16.msra.mxu0 %v746
  %767 = vmatprep.subr.bf16.mxu0 0
  %768 = vmatpush1.bf16.msra.mxu0 %v747
  %769 = vmatprep.subr.bf16.mxu0 0
  %770 = vmatpush1.bf16.msra.mxu0 %v748
  %771 = vmatprep.subr.bf16.mxu0 0
  %772 = vmatpush1.bf16.msra.mxu0 %v749
  %773 = vmatprep.subr.bf16.mxu0 0
  %774 = vmatpush1.bf16.msra.mxu0 %v750
  %775 = vmatprep.subr.bf16.mxu0 0
  %776 = vmatpush1.bf16.msra.mxu0 0
  %777 = vmatprep.subr.bf16.mxu0 0
  %778 = vmatpush1.bf16.msra.mxu0 0
  %779 = vmatprep.subr.bf16.mxu0 0
  %780 = vmatpush1.bf16.msra.mxu0 0
  %781 = vmatprep.subr.bf16.mxu0 0
  %782 = vmatpush1.bf16.msra.mxu0 0
  %783 = vmatprep.subr.bf16.mxu0 0
  %784 = vmatpush1.bf16.msra.mxu0 0
  %785 = vmatprep.subr.bf16.mxu0 0
  %786 = vmatpush1.bf16.msra.mxu0 0
  %787 = vmatprep.subr.bf16.mxu0 0
  %788 = vmatpush1.bf16.msra.mxu0 0
  %789 = vmatprep.subr.bf16.mxu0 0
  %790 = vmatpush1.bf16.msra.mxu0 0
  %791 = vmatprep.mubr.bf16.mxu0 0
  %792 = vmatmul.mubr.bf16.gmra.mrb[0].mxu0 %v680
  %v793 = vpop.f32.mrb[0].mxu0
  %v794 = vadd.f32 %v709, %v793
  %v795 = vpop.f32.mrb[0].mxu0
  %v796 = vpop.f32.mrb[0].mxu0
  %v797 = vadd.f32 %v709, %v796
  %v798 = vpop.f32.mrb[0].mxu0
  %799 = vmatprep.mubr.bf16.mxu0 0
  %800 = vmatmul.mubr.bf16.gmra.mrb[0].mxu0 %v681
  %v801 = vpop.f32.mrb[0].mxu0
  %v802 = vadd.f32 %v709, %v801
  %v803 = vpop.f32.mrb[0].mxu0
  %v804 = vpop.f32.mrb[0].mxu0
  %v805 = vadd.f32 %v709, %v804
  %v806 = vpop.f32.mrb[0].mxu0
  %807 = vmatprep.mubr.bf16.mxu0 0
  %808 = vmatmul.mubr.bf16.gmra.mrb[0].mxu0 %v682
  %v809 = vpop.f32.mrb[0].mxu0
  %v810 = vadd.f32 %v709, %v809
  %v811 = vpop.f32.mrb[0].mxu0
  %v812 = vpop.f32.mrb[0].mxu0
  %v813 = vadd.f32 %v709, %v812
  %v814 = vpop.f32.mrb[0].mxu0
  %815 = vmatprep.mubr.bf16.mxu0 0
  %816 = vmatmul.mubr.bf16.gmra.mrb[0].mxu0 %v683
  %v817 = vpop.f32.mrb[0].mxu0
  %v818 = vadd.f32 %v709, %v817
  %v819 = vpop.f32.mrb[0].mxu0
  %v820 = vpop.f32.mrb[0].mxu0
  %v821 = vadd.f32 %v709, %v820
  %v822 = vpop.f32.mrb[0].mxu0
  %823 = vmatprep.mubr.bf16.mxu0 0
  %824 = vmatmul.mubr.bf16.gmra.mrb[0].mxu0 %v684
  %v825 = vpop.f32.mrb[0].mxu0
  %v826 = vadd.f32 %v709, %v825
  %v827 = vpop.f32.mrb[0].mxu0
  %v828 = vpop.f32.mrb[0].mxu0
  %v829 = vadd.f32 %v709, %v828
  %v830 = vpop.f32.mrb[0].mxu0
  %831 = vmatprep.mubr.bf16.mxu0 0
  %832 = vmatmul.mubr.bf16.gmra.mrb[0].mxu0 %v685
  %v833 = vpop.f32.mrb[0].mxu0
  %v834 = vadd.f32 %v709, %v833
  %v835 = vpop.f32.mrb[0].mxu0
  %v836 = vpop.f32.mrb[0].mxu0
  %v837 = vadd.f32 %v709, %v836
  %v838 = vpop.f32.mrb[0].mxu0
  %839 = vmatprep.mubr.bf16.mxu0 0
  %840 = vmatmul.mubr.bf16.gmra.mrb[0].mxu0 %v686
  %v841 = vpop.f32.mrb[0].mxu0
  %v842 = vadd.f32 %v709, %v841
  %v843 = vpop.f32.mrb[0].mxu0
  %v844 = vpop.f32.mrb[0].mxu0
  %v845 = vadd.f32 %v709, %v844
  %v846 = vpop.f32.mrb[0].mxu0
  %847 = vmatprep.mubr.bf16.mxu0 0
  %848 = vmatmul.mubr.bf16.gmra.mrb[0].mxu0 %v687
  %v849 = vpop.f32.mrb[0].mxu0
  %v850 = vadd.f32 %v709, %v849
  %v851 = vpop.f32.mrb[0].mxu0
  %v852 = vpop.f32.mrb[0].mxu0
  %v853 = vadd.f32 %v709, %v852
  %v854 = vpop.f32.mrb[0].mxu0
  %855 = vdwg.mxu0
  %v856 = vld [vmem:[%s2] sm:$0xff]
  %v857 = vld [vmem:[%s2 + $0x8] sm:$0xff]
  %v858 = vld [vmem:[%s2 + $0x10] sm:$0xff]
  %v859 = vld [vmem:[%s2 + $0x18] sm:$0xff]
  %v860 = vld [vmem:[%s2 + $0x20] sm:$0xff]
  %v861 = vld [vmem:[%s2 + $0x28] sm:$0xff]
  %v862 = vld [vmem:[%s2 + $0x30] sm:$0xff]
  %v863 = vld [vmem:[%s2 + $0x38] sm:$0xff]
  %v864 = vld [vmem:[%s2 + $0x40] sm:$0xff]
  %v865 = vld [vmem:[%s2 + $0x48] sm:$0xff]
  %v866 = vld [vmem:[%s2 + $0x50] sm:$0xff]
  %v867 = vld [vmem:[%s2 + $0x58] sm:$0xff]
  %v868 = vld [vmem:[%s2 + $0x60] sm:$0xff]
  %v869 = vld [vmem:[%s2 + $0x68] sm:$0xff]
  %v870 = vld [vmem:[%s2 + $0x70] sm:$0xff]
  %v871 = vld [vmem:[%s2 + $0x78] sm:$0xff]
  %873 = vset.pattern.permute.xlu0 0
  %874 = vperm.xlu0 %873, %v856
  %v875 = vpop.permute.xlu0 %874
  %878 = vset.pattern.permute.xlu0 0
  %879 = vperm.xlu0 %878, %v857
  %v880 = vpop.permute.xlu0 %879
  %883 = vset.pattern.permute.xlu0 0
  %884 = vperm.xlu0 %883, %v858
  %v885 = vpop.permute.xlu0 %884
  %888 = vset.pattern.permute.xlu0 0
  %889 = vperm.xlu0 %888, %v859
  %v890 = vpop.permute.xlu0 %889
  %893 = vset.pattern.permute.xlu0 0
  %894 = vperm.xlu0 %893, %v860
  %v895 = vpop.permute.xlu0 %894
  %898 = vset.pattern.permute.xlu0 0
  %899 = vperm.xlu0 %898, %v861
  %v900 = vpop.permute.xlu0 %899
  %903 = vset.pattern.permute.xlu0 0
  %904 = vperm.xlu0 %903, %v862
  %v905 = vpop.permute.xlu0 %904
  %908 = vset.pattern.permute.xlu0 0
  %909 = vperm.xlu0 %908, %v863
  %v910 = vpop.permute.xlu0 %909
  %913 = vset.pattern.permute.xlu0 0
  %914 = vperm.xlu0 %913, %v864
  %v915 = vpop.permute.xlu0 %914
  %918 = vset.pattern.permute.xlu0 0
  %919 = vperm.xlu0 %918, %v865
  %v920 = vpop.permute.xlu0 %919
  %923 = vset.pattern.permute.xlu0 0
  %924 = vperm.xlu0 %923, %v866
  %v925 = vpop.permute.xlu0 %924
  %928 = vset.pattern.permute.xlu0 0
  %929 = vperm.xlu0 %928, %v867
  %v930 = vpop.permute.xlu0 %929
  %933 = vset.pattern.permute.xlu0 0
  %934 = vperm.xlu0 %933, %v868
  %v935 = vpop.permute.xlu0 %934
  %938 = vset.pattern.permute.xlu0 0
  %939 = vperm.xlu0 %938, %v869
  %v940 = vpop.permute.xlu0 %939
  %943 = vset.pattern.permute.xlu0 0
  %944 = vperm.xlu0 %943, %v870
  %v945 = vpop.permute.xlu0 %944
  %948 = vset.pattern.permute.xlu0 0
  %949 = vperm.xlu0 %948, %v871
  %v950 = vpop.permute.xlu0 %949
  %v952 = vmul.f32 %v794, %v875
  %v953 = vmul.f32 %v797, %v880
  %v954 = vmul.f32 %v802, %v885
  %v955 = vmul.f32 %v805, %v890
  %v956 = vmul.f32 %v810, %v895
  %v957 = vmul.f32 %v813, %v900
  %v958 = vmul.f32 %v818, %v905
  %v959 = vmul.f32 %v821, %v910
  %v960 = vmul.f32 %v826, %v915
  %v961 = vmul.f32 %v829, %v920
  %v962 = vmul.f32 %v834, %v925
  %v963 = vmul.f32 %v837, %v930
  %v964 = vmul.f32 %v842, %v935
  %v965 = vmul.f32 %v845, %v940
  %v966 = vmul.f32 %v850, %v945
  %v967 = vmul.f32 %v853, %v950
  %v968 = vadd.f32 %v78, %v952
  %v969 = vadd.f32 %v79, %v953
  %v970 = vadd.f32 %v80, %v954
  %v971 = vadd.f32 %v81, %v955
  %v972 = vadd.f32 %v82, %v956
  %v973 = vadd.f32 %v83, %v957
  %v974 = vadd.f32 %v84, %v958
  %v975 = vadd.f32 %v85, %v959
  %v976 = vadd.f32 %v86, %v960
  %v977 = vadd.f32 %v87, %v961
  %v978 = vadd.f32 %v88, %v962
  %v979 = vadd.f32 %v89, %v963
  %v980 = vadd.f32 %v90, %v964
  %v981 = vadd.f32 %v91, %v965
  %v982 = vadd.f32 %v92, %v966
  %v983 = vadd.f32 %v93, %v967
  %v984 = vld [vmem:[%s12] sm:$0x1]
  %v985 = vld [vmem:[%s13] sm:$0x1]
  %986 = vadd.xlane.f32.xlu0 %v968
  %v987 = vpop.xlane.xlu0 %986
  %988 = vadd.xlane.f32.xlu0 %v969
  %v989 = vpop.xlane.xlu0 %988
  %990 = vadd.xlane.f32.xlu0 %v970
  %v991 = vpop.xlane.xlu0 %990
  %992 = vadd.xlane.f32.xlu0 %v971
  %v993 = vpop.xlane.xlu0 %992
  %994 = vadd.xlane.f32.xlu0 %v972
  %v995 = vpop.xlane.xlu0 %994
  %996 = vadd.xlane.f32.xlu0 %v973
  %v997 = vpop.xlane.xlu0 %996
  %998 = vadd.xlane.f32.xlu0 %v974
  %v999 = vpop.xlane.xlu0 %998
  %1000 = vadd.xlane.f32.xlu0 %v975
  %v1001 = vpop.xlane.xlu0 %1000
  %1002 = vadd.xlane.f32.xlu0 %v976
  %v1003 = vpop.xlane.xlu0 %1002
  %1004 = vadd.xlane.f32.xlu0 %v977
  %v1005 = vpop.xlane.xlu0 %1004
  %1006 = vadd.xlane.f32.xlu0 %v978
  %v1007 = vpop.xlane.xlu0 %1006
  %1008 = vadd.xlane.f32.xlu0 %v979
  %v1009 = vpop.xlane.xlu0 %1008
  %1010 = vadd.xlane.f32.xlu0 %v980
  %v1011 = vpop.xlane.xlu0 %1010
  %1012 = vadd.xlane.f32.xlu0 %v981
  %v1013 = vpop.xlane.xlu0 %1012
  %1014 = vadd.xlane.f32.xlu0 %v982
  %v1015 = vpop.xlane.xlu0 %1014
  %1016 = vadd.xlane.f32.xlu0 %v983
  %v1017 = vpop.xlane.xlu0 %1016
  %v1018 = vrcp.pop 128.0
  %v1019 = vmul.f32 %v987, %v1018
  %v1020 = vmul.f32 %v989, %v1018
  %v1021 = vmul.f32 %v991, %v1018
  %v1022 = vmul.f32 %v993, %v1018
  %v1023 = vmul.f32 %v995, %v1018
  %v1024 = vmul.f32 %v997, %v1018
  %v1025 = vmul.f32 %v999, %v1018
  %v1026 = vmul.f32 %v1001, %v1018
  %v1027 = vmul.f32 %v1003, %v1018
  %v1028 = vmul.f32 %v1005, %v1018
  %v1029 = vmul.f32 %v1007, %v1018
  %v1030 = vmul.f32 %v1009, %v1018
  %v1031 = vmul.f32 %v1011, %v1018
  %v1032 = vmul.f32 %v1013, %v1018
  %v1033 = vmul.f32 %v1015, %v1018
  %v1034 = vmul.f32 %v1017, %v1018
  %v1035 = vsub.f32 %v968, %v1019
  %v1036 = vsub.f32 %v969, %v1020
  %v1037 = vsub.f32 %v970, %v1021
  %v1038 = vsub.f32 %v971, %v1022
  %v1039 = vsub.f32 %v972, %v1023
  %v1040 = vsub.f32 %v973, %v1024
  %v1041 = vsub.f32 %v974, %v1025
  %v1042 = vsub.f32 %v975, %v1026
  %v1043 = vsub.f32 %v976, %v1027
  %v1044 = vsub.f32 %v977, %v1028
  %v1045 = vsub.f32 %v978, %v1029
  %v1046 = vsub.f32 %v979, %v1030
  %v1047 = vsub.f32 %v980, %v1031
  %v1048 = vsub.f32 %v981, %v1032
  %v1049 = vsub.f32 %v982, %v1033
  %v1050 = vsub.f32 %v983, %v1034
  %v1051 = vmul.f32 %v1035, %v1035
  %v1052 = vmul.f32 %v1036, %v1036
  %v1053 = vmul.f32 %v1037, %v1037
  %v1054 = vmul.f32 %v1038, %v1038
  %v1055 = vmul.f32 %v1039, %v1039
  %v1056 = vmul.f32 %v1040, %v1040
  %v1057 = vmul.f32 %v1041, %v1041
  %v1058 = vmul.f32 %v1042, %v1042
  %v1059 = vmul.f32 %v1043, %v1043
  %v1060 = vmul.f32 %v1044, %v1044
  %v1061 = vmul.f32 %v1045, %v1045
  %v1062 = vmul.f32 %v1046, %v1046
  %v1063 = vmul.f32 %v1047, %v1047
  %v1064 = vmul.f32 %v1048, %v1048
  %v1065 = vmul.f32 %v1049, %v1049
  %v1066 = vmul.f32 %v1050, %v1050
  %1067 = vadd.xlane.f32.xlu0 %v1051
  %v1068 = vpop.xlane.xlu0 %1067
  %1069 = vadd.xlane.f32.xlu0 %v1052
  %v1070 = vpop.xlane.xlu0 %1069
  %1071 = vadd.xlane.f32.xlu0 %v1053
  %v1072 = vpop.xlane.xlu0 %1071
  %1073 = vadd.xlane.f32.xlu0 %v1054
  %v1074 = vpop.xlane.xlu0 %1073
  %1075 = vadd.xlane.f32.xlu0 %v1055
  %v1076 = vpop.xlane.xlu0 %1075
  %1077 = vadd.xlane.f32.xlu0 %v1056
  %v1078 = vpop.xlane.xlu0 %1077
  %1079 = vadd.xlane.f32.xlu0 %v1057
  %v1080 = vpop.xlane.xlu0 %1079
  %1081 = vadd.xlane.f32.xlu0 %v1058
  %v1082 = vpop.xlane.xlu0 %1081
  %1083 = vadd.xlane.f32.xlu0 %v1059
  %v1084 = vpop.xlane.xlu0 %1083
  %1085 = vadd.xlane.f32.xlu0 %v1060
  %v1086 = vpop.xlane.xlu0 %1085
  %1087 = vadd.xlane.f32.xlu0 %v1061
  %v1088 = vpop.xlane.xlu0 %1087
  %1089 = vadd.xlane.f32.xlu0 %v1062
  %v1090 = vpop.xlane.xlu0 %1089
  %1091 = vadd.xlane.f32.xlu0 %v1063
  %v1092 = vpop.xlane.xlu0 %1091
  %1093 = vadd.xlane.f32.xlu0 %v1064
  %v1094 = vpop.xlane.xlu0 %1093
  %1095 = vadd.xlane.f32.xlu0 %v1065
  %v1096 = vpop.xlane.xlu0 %1095
  %1097 = vadd.xlane.f32.xlu0 %v1066
  %v1098 = vpop.xlane.xlu0 %1097
  %v1099 = vmul.f32 %v1068, %v1018
  %v1100 = vmul.f32 %v1070, %v1018
  %v1101 = vmul.f32 %v1072, %v1018
  %v1102 = vmul.f32 %v1074, %v1018
  %v1103 = vmul.f32 %v1076, %v1018
  %v1104 = vmul.f32 %v1078, %v1018
  %v1105 = vmul.f32 %v1080, %v1018
  %v1106 = vmul.f32 %v1082, %v1018
  %v1107 = vmul.f32 %v1084, %v1018
  %v1108 = vmul.f32 %v1086, %v1018
  %v1109 = vmul.f32 %v1088, %v1018
  %v1110 = vmul.f32 %v1090, %v1018
  %v1111 = vmul.f32 %v1092, %v1018
  %v1112 = vmul.f32 %v1094, %v1018
  %v1113 = vmul.f32 %v1096, %v1018
  %v1114 = vmul.f32 %v1098, %v1018
  %v1115 = vadd.f32 %v1099, 1e-05
  %v1116 = vadd.f32 %v1100, 1e-05
  %v1117 = vadd.f32 %v1101, 1e-05
  %v1118 = vadd.f32 %v1102, 1e-05
  %v1119 = vadd.f32 %v1103, 1e-05
  %v1120 = vadd.f32 %v1104, 1e-05
  %v1121 = vadd.f32 %v1105, 1e-05
  %v1122 = vadd.f32 %v1106, 1e-05
  %v1123 = vadd.f32 %v1107, 1e-05
  %v1124 = vadd.f32 %v1108, 1e-05
  %v1125 = vadd.f32 %v1109, 1e-05
  %v1126 = vadd.f32 %v1110, 1e-05
  %v1127 = vadd.f32 %v1111, 1e-05
  %v1128 = vadd.f32 %v1112, 1e-05
  %v1129 = vadd.f32 %v1113, 1e-05
  %v1130 = vadd.f32 %v1114, 1e-05
  %v1131 = vrsqrt.pop %v1115
  %v1132 = vrsqrt.pop %v1116
  %v1133 = vrsqrt.pop %v1117
  %v1134 = vrsqrt.pop %v1118
  %v1135 = vrsqrt.pop %v1119
  %v1136 = vrsqrt.pop %v1120
  %v1137 = vrsqrt.pop %v1121
  %v1138 = vrsqrt.pop %v1122
  %v1139 = vrsqrt.pop %v1123
  %v1140 = vrsqrt.pop %v1124
  %v1141 = vrsqrt.pop %v1125
  %v1142 = vrsqrt.pop %v1126
  %v1143 = vrsqrt.pop %v1127
  %v1144 = vrsqrt.pop %v1128
  %v1145 = vrsqrt.pop %v1129
  %v1146 = vrsqrt.pop %v1130
  %v1147 = vmul.f32 %v1035, %v1131
  %v1148 = vmul.f32 %v1036, %v1132
  %v1149 = vmul.f32 %v1037, %v1133
  %v1150 = vmul.f32 %v1038, %v1134
  %v1151 = vmul.f32 %v1039, %v1135
  %v1152 = vmul.f32 %v1040, %v1136
  %v1153 = vmul.f32 %v1041, %v1137
  %v1154 = vmul.f32 %v1042, %v1138
  %v1155 = vmul.f32 %v1043, %v1139
  %v1156 = vmul.f32 %v1044, %v1140
  %v1157 = vmul.f32 %v1045, %v1141
  %v1158 = vmul.f32 %v1046, %v1142
  %v1159 = vmul.f32 %v1047, %v1143
  %v1160 = vmul.f32 %v1048, %v1144
  %v1161 = vmul.f32 %v1049, %v1145
  %v1162 = vmul.f32 %v1050, %v1146
  %v1164 = vlaneseq
  %v1165 = vshrl.u32 %v1164, 7
  %v1166 = vsub.s32 0, %v1165
  %v1167 = vrot.slane %v984, %v1166
  %v1169 = vmul.f32 %v1147, %v1167
  %v1170 = vmul.f32 %v1148, %v1167
  %v1171 = vmul.f32 %v1149, %v1167
  %v1172 = vmul.f32 %v1150, %v1167
  %v1173 = vmul.f32 %v1151, %v1167
  %v1174 = vmul.f32 %v1152, %v1167
  %v1175 = vmul.f32 %v1153, %v1167
  %v1176 = vmul.f32 %v1154, %v1167
  %v1177 = vmul.f32 %v1155, %v1167
  %v1178 = vmul.f32 %v1156, %v1167
  %v1179 = vmul.f32 %v1157, %v1167
  %v1180 = vmul.f32 %v1158, %v1167
  %v1181 = vmul.f32 %v1159, %v1167
  %v1182 = vmul.f32 %v1160, %v1167
  %v1183 = vmul.f32 %v1161, %v1167
  %v1184 = vmul.f32 %v1162, %v1167
  %v1186 = vlaneseq
  %v1187 = vshrl.u32 %v1186, 7
  %v1188 = vsub.s32 0, %v1187
  %v1189 = vrot.slane %v985, %v1188
  %v1191 = vadd.f32 %v1169, %v1189
  %v1192 = vadd.f32 %v1170, %v1189
  %v1193 = vadd.f32 %v1171, %v1189
  %v1194 = vadd.f32 %v1172, %v1189
  %v1195 = vadd.f32 %v1173, %v1189
  %v1196 = vadd.f32 %v1174, %v1189
  %v1197 = vadd.f32 %v1175, %v1189
  %v1198 = vadd.f32 %v1176, %v1189
  %v1199 = vadd.f32 %v1177, %v1189
  %v1200 = vadd.f32 %v1178, %v1189
  %v1201 = vadd.f32 %v1179, %v1189
  %v1202 = vadd.f32 %v1180, %v1189
  %v1203 = vadd.f32 %v1181, %v1189
  %v1204 = vadd.f32 %v1182, %v1189
  %v1205 = vadd.f32 %v1183, %v1189
  %v1206 = vadd.f32 %v1184, %v1189
  %v1207 = vpack.c.bf16 %v1192, %v1191
  %v1208 = vpack.c.bf16 %v1194, %v1193
  %v1209 = vpack.c.bf16 %v1196, %v1195
  %v1210 = vpack.c.bf16 %v1198, %v1197
  %v1211 = vpack.c.bf16 %v1200, %v1199
  %v1212 = vpack.c.bf16 %v1202, %v1201
  %v1213 = vpack.c.bf16 %v1204, %v1203
  %v1214 = vpack.c.bf16 %v1206, %v1205
  %v1215 = vld [vmem:[%s14] sm:$0xff]
  %v1216 = vld [vmem:[%s14 + $0x8] sm:$0xf]
  %v1217 = vld [vmem:[%s14 + $0xc] sm:$0xff]
  %v1218 = vld [vmem:[%s14 + $0x14] sm:$0xf]
  %v1219 = vld [vmem:[%s14 + $0x18] sm:$0xff]
  %v1220 = vld [vmem:[%s14 + $0x20] sm:$0xf]
  %v1221 = vld [vmem:[%s14 + $0x24] sm:$0xff]
  %v1222 = vld [vmem:[%s14 + $0x2c] sm:$0xf]
  %v1223 = vld [vmem:[%s14 + $0x30] sm:$0xff]
  %v1224 = vld [vmem:[%s14 + $0x38] sm:$0xf]
  %v1225 = vld [vmem:[%s14 + $0x3c] sm:$0xff]
  %v1226 = vld [vmem:[%s14 + $0x44] sm:$0xf]
  %v1227 = vld [vmem:[%s14 + $0x48] sm:$0xff]
  %v1228 = vld [vmem:[%s14 + $0x50] sm:$0xf]
  %v1229 = vld [vmem:[%s14 + $0x54] sm:$0xff]
  %v1230 = vld [vmem:[%s14 + $0x5c] sm:$0xf]
  %v1231 = vld [vmem:[%s14 + $0x60] sm:$0xff]
  %v1232 = vld [vmem:[%s14 + $0x68] sm:$0xf]
  %v1233 = vld [vmem:[%s14 + $0x6c] sm:$0xff]
  %v1234 = vld [vmem:[%s14 + $0x74] sm:$0xf]
  %v1235 = vld [vmem:[%s14 + $0x78] sm:$0xff]
  %v1236 = vld [vmem:[%s14 + $0x80] sm:$0xf]
  %v1237 = vld [vmem:[%s14 + $0x84] sm:$0xff]
  %v1238 = vld [vmem:[%s14 + $0x8c] sm:$0xf]
  %v1239 = vld [vmem:[%s14 + $0x90] sm:$0xff]
  %v1240 = vld [vmem:[%s14 + $0x98] sm:$0xf]
  %v1241 = vld [vmem:[%s14 + $0x9c] sm:$0xff]
  %v1242 = vld [vmem:[%s14 + $0xa4] sm:$0xf]
  %v1243 = vld [vmem:[%s14 + $0xa8] sm:$0xff]
  %v1244 = vld [vmem:[%s14 + $0xb0] sm:$0xf]
  %v1245 = vld [vmem:[%s14 + $0xb4] sm:$0xff]
  %v1246 = vld [vmem:[%s14 + $0xbc] sm:$0xf]
  %v1247 = vld [vmem:[%s15] sm:$0x7]
  %v1249 = vlaneseq
  %v1250 = vshrl.u32 %v1249, 7
  %v1251 = vsub.s32 0, %v1250
  %v1252 = vrot.slane %v1247, %v1251
  %v1253 = vlaneseq
  %v1254 = vshrl.u32 %v1253, 7
  %v1255 = vsub.s32 1, %v1254
  %v1256 = vrot.slane %v1247, %v1255
  %v1257 = vlaneseq
  %v1258 = vshrl.u32 %v1257, 7
  %v1259 = vsub.s32 2, %v1258
  %v1260 = vrot.slane %v1247, %v1259
  %v1296 = vunpack.c.l.b16 %v1215
  %v1297 = vunpack.c.h.b16 %v1215
  %v1298 = vunpack.c.l.b16 %v1216
  %v1299 = vunpack.c.l.b16 %v1217
  %v1300 = vunpack.c.h.b16 %v1217
  %v1301 = vunpack.c.l.b16 %v1218
  %v1302 = vunpack.c.l.b16 %v1219
  %v1303 = vunpack.c.h.b16 %v1219
  %v1304 = vunpack.c.l.b16 %v1220
  %v1305 = vunpack.c.l.b16 %v1221
  %v1306 = vunpack.c.h.b16 %v1221
  %v1307 = vunpack.c.l.b16 %v1222
  %v1308 = vunpack.c.l.b16 %v1223
  %v1309 = vunpack.c.h.b16 %v1223
  %v1310 = vunpack.c.l.b16 %v1224
  %v1311 = vunpack.c.l.b16 %v1225
  %v1312 = vunpack.c.h.b16 %v1225
  %v1313 = vunpack.c.l.b16 %v1226
  %v1314 = vunpack.c.l.b16 %v1227
  %v1315 = vunpack.c.h.b16 %v1227
  %v1316 = vunpack.c.l.b16 %v1228
  %v1317 = vunpack.c.l.b16 %v1229
  %v1318 = vunpack.c.h.b16 %v1229
  %v1319 = vunpack.c.l.b16 %v1230
  %v1320 = vunpack.c.l.b16 %v1231
  %v1321 = vunpack.c.h.b16 %v1231
  %v1322 = vunpack.c.l.b16 %v1232
  %v1323 = vunpack.c.l.b16 %v1233
  %v1324 = vunpack.c.h.b16 %v1233
  %v1325 = vunpack.c.l.b16 %v1234
  %v1326 = vunpack.c.l.b16 %v1235
  %v1327 = vunpack.c.h.b16 %v1235
  %v1328 = vunpack.c.l.b16 %v1236
  %v1329 = vunpack.c.l.b16 %v1237
  %v1330 = vunpack.c.h.b16 %v1237
  %v1331 = vunpack.c.l.b16 %v1238
  %v1332 = vunpack.c.l.b16 %v1239
  %v1333 = vunpack.c.h.b16 %v1239
  %v1334 = vunpack.c.l.b16 %v1240
  %v1335 = vunpack.c.l.b16 %v1241
  %v1336 = vunpack.c.h.b16 %v1241
  %v1337 = vunpack.c.l.b16 %v1242
  %v1338 = vunpack.c.l.b16 %v1243
  %v1339 = vunpack.c.h.b16 %v1243
  %v1340 = vunpack.c.l.b16 %v1244
  %v1341 = vunpack.c.l.b16 %v1245
  %v1342 = vunpack.c.h.b16 %v1245
  %v1343 = vunpack.c.l.b16 %v1246
  %v1344 = vpack.c.b16 %v1299, %v1296
  %v1345 = vpack.c.b16 %v1300, %v1297
  %v1346 = vpack.c.b16 %v1301, %v1298
  %v1347 = vpack.c.b16 %v1305, %v1302
  %v1348 = vpack.c.b16 %v1306, %v1303
  %v1349 = vpack.c.b16 %v1307, %v1304
  %v1350 = vpack.c.b16 %v1311, %v1308
  %v1351 = vpack.c.b16 %v1312, %v1309
  %v1352 = vpack.c.b16 %v1313, %v1310
  %v1353 = vpack.c.b16 %v1317, %v1314
  %v1354 = vpack.c.b16 %v1318, %v1315
  %v1355 = vpack.c.b16 %v1319, %v1316
  %v1356 = vpack.c.b16 %v1323, %v1320
  %v1357 = vpack.c.b16 %v1324, %v1321
  %v1358 = vpack.c.b16 %v1325, %v1322
  %v1359 = vpack.c.b16 %v1329, %v1326
  %v1360 = vpack.c.b16 %v1330, %v1327
  %v1361 = vpack.c.b16 %v1331, %v1328
  %v1362 = vpack.c.b16 %v1335, %v1332
  %v1363 = vpack.c.b16 %v1336, %v1333
  %v1364 = vpack.c.b16 %v1337, %v1334
  %v1365 = vpack.c.b16 %v1341, %v1338
  %v1366 = vpack.c.b16 %v1342, %v1339
  %v1367 = vpack.c.b16 %v1343, %v1340
  %1392 = vmatprep.subr.bf16.mxu0 %v1345
  %1393 = vmatpush1.bf16.msra.mxu0 %v1344
  %1394 = vmatprep.subr.bf16.mxu0 %v1348
  %1395 = vmatpush1.bf16.msra.mxu0 %v1347
  %1396 = vmatprep.subr.bf16.mxu0 %v1351
  %1397 = vmatpush1.bf16.msra.mxu0 %v1350
  %1398 = vmatprep.subr.bf16.mxu0 %v1354
  %1399 = vmatpush1.bf16.msra.mxu0 %v1353
  %1400 = vmatprep.subr.bf16.mxu0 %v1357
  %1401 = vmatpush1.bf16.msra.mxu0 %v1356
  %1402 = vmatprep.subr.bf16.mxu0 %v1360
  %1403 = vmatpush1.bf16.msra.mxu0 %v1359
  %1404 = vmatprep.subr.bf16.mxu0 %v1363
  %1405 = vmatpush1.bf16.msra.mxu0 %v1362
  %1406 = vmatprep.subr.bf16.mxu0 %v1366
  %1407 = vmatpush1.bf16.msra.mxu0 %v1365
  %1408 = vmatprep.subr.bf16.mxu0 0
  %1409 = vmatpush1.bf16.msra.mxu0 0
  %1410 = vmatprep.subr.bf16.mxu0 0
  %1411 = vmatpush1.bf16.msra.mxu0 0
  %1412 = vmatprep.subr.bf16.mxu0 0
  %1413 = vmatpush1.bf16.msra.mxu0 0
  %1414 = vmatprep.subr.bf16.mxu0 0
  %1415 = vmatpush1.bf16.msra.mxu0 0
  %1416 = vmatprep.subr.bf16.mxu0 0
  %1417 = vmatpush1.bf16.msra.mxu0 0
  %1418 = vmatprep.subr.bf16.mxu0 0
  %1419 = vmatpush1.bf16.msra.mxu0 0
  %1420 = vmatprep.subr.bf16.mxu0 0
  %1421 = vmatpush1.bf16.msra.mxu0 0
  %1422 = vmatprep.subr.bf16.mxu0 0
  %1423 = vmatpush1.bf16.msra.mxu0 0
  %1424 = vmatprep.mubr.bf16.mxu0 0
  %1425 = vmatmul.mubr.bf16.gmra.mrb[0].mxu0 %v1207
  %v1426 = vpop.f32.mrb[0].mxu0
  %v1427 = vadd.f32 %v1252, %v1426
  %v1428 = vpop.f32.mrb[0].mxu0
  %v1429 = vadd.f32 %v1256, %v1428
  %v1430 = vpop.f32.mrb[0].mxu0
  %v1431 = vadd.f32 %v1252, %v1430
  %v1432 = vpop.f32.mrb[0].mxu0
  %v1433 = vadd.f32 %v1256, %v1432
  %1434 = vmatprep.mubr.bf16.mxu0 0
  %1435 = vmatmul.mubr.bf16.gmra.mrb[0].mxu0 %v1208
  %v1436 = vpop.f32.mrb[0].mxu0
  %v1437 = vadd.f32 %v1252, %v1436
  %v1438 = vpop.f32.mrb[0].mxu0
  %v1439 = vadd.f32 %v1256, %v1438
  %v1440 = vpop.f32.mrb[0].mxu0
  %v1441 = vadd.f32 %v1252, %v1440
  %v1442 = vpop.f32.mrb[0].mxu0
  %v1443 = vadd.f32 %v1256, %v1442
  %1444 = vmatprep.mubr.bf16.mxu0 0
  %1445 = vmatmul.mubr.bf16.gmra.mrb[0].mxu0 %v1209
  %v1446 = vpop.f32.mrb[0].mxu0
  %v1447 = vadd.f32 %v1252, %v1446
  %v1448 = vpop.f32.mrb[0].mxu0
  %v1449 = vadd.f32 %v1256, %v1448
  %v1450 = vpop.f32.mrb[0].mxu0
  %v1451 = vadd.f32 %v1252, %v1450
  %v1452 = vpop.f32.mrb[0].mxu0
  %v1453 = vadd.f32 %v1256, %v1452
  %1454 = vmatprep.mubr.bf16.mxu0 0
  %1455 = vmatmul.mubr.bf16.gmra.mrb[0].mxu0 %v1210
  %v1456 = vpop.f32.mrb[0].mxu0
  %v1457 = vadd.f32 %v1252, %v1456
  %v1458 = vpop.f32.mrb[0].mxu0
  %v1459 = vadd.f32 %v1256, %v1458
  %v1460 = vpop.f32.mrb[0].mxu0
  %v1461 = vadd.f32 %v1252, %v1460
  %v1462 = vpop.f32.mrb[0].mxu0
  %v1463 = vadd.f32 %v1256, %v1462
  %1464 = vmatprep.mubr.bf16.mxu0 0
  %1465 = vmatmul.mubr.bf16.gmra.mrb[0].mxu0 %v1211
  %v1466 = vpop.f32.mrb[0].mxu0
  %v1467 = vadd.f32 %v1252, %v1466
  %v1468 = vpop.f32.mrb[0].mxu0
  %v1469 = vadd.f32 %v1256, %v1468
  %v1470 = vpop.f32.mrb[0].mxu0
  %v1471 = vadd.f32 %v1252, %v1470
  %v1472 = vpop.f32.mrb[0].mxu0
  %v1473 = vadd.f32 %v1256, %v1472
  %1474 = vmatprep.mubr.bf16.mxu0 0
  %1475 = vmatmul.mubr.bf16.gmra.mrb[0].mxu0 %v1212
  %v1476 = vpop.f32.mrb[0].mxu0
  %v1477 = vadd.f32 %v1252, %v1476
  %v1478 = vpop.f32.mrb[0].mxu0
  %v1479 = vadd.f32 %v1256, %v1478
  %v1480 = vpop.f32.mrb[0].mxu0
  %v1481 = vadd.f32 %v1252, %v1480
  %v1482 = vpop.f32.mrb[0].mxu0
  %v1483 = vadd.f32 %v1256, %v1482
  %1484 = vmatprep.mubr.bf16.mxu0 0
  %1485 = vmatmul.mubr.bf16.gmra.mrb[0].mxu0 %v1213
  %v1486 = vpop.f32.mrb[0].mxu0
  %v1487 = vadd.f32 %v1252, %v1486
  %v1488 = vpop.f32.mrb[0].mxu0
  %v1489 = vadd.f32 %v1256, %v1488
  %v1490 = vpop.f32.mrb[0].mxu0
  %v1491 = vadd.f32 %v1252, %v1490
  %v1492 = vpop.f32.mrb[0].mxu0
  %v1493 = vadd.f32 %v1256, %v1492
  %1494 = vmatprep.mubr.bf16.mxu0 0
  %1495 = vmatmul.mubr.bf16.gmra.mrb[0].mxu0 %v1214
  %v1496 = vpop.f32.mrb[0].mxu0
  %v1497 = vadd.f32 %v1252, %v1496
  %v1498 = vpop.f32.mrb[0].mxu0
  %v1499 = vadd.f32 %v1256, %v1498
  %v1500 = vpop.f32.mrb[0].mxu0
  %v1501 = vadd.f32 %v1252, %v1500
  %v1502 = vpop.f32.mrb[0].mxu0
  %v1503 = vadd.f32 %v1256, %v1502
  %1504 = vdwg.mxu0
  %1505 = vmatprep.subr.bf16.mxu0 0
  %1506 = vmatpush1.bf16.msra.mxu0 %v1346
  %1507 = vmatprep.subr.bf16.mxu0 0
  %1508 = vmatpush1.bf16.msra.mxu0 %v1349
  %1509 = vmatprep.subr.bf16.mxu0 0
  %1510 = vmatpush1.bf16.msra.mxu0 %v1352
  %1511 = vmatprep.subr.bf16.mxu0 0
  %1512 = vmatpush1.bf16.msra.mxu0 %v1355
  %1513 = vmatprep.subr.bf16.mxu0 0
  %1514 = vmatpush1.bf16.msra.mxu0 %v1358
  %1515 = vmatprep.subr.bf16.mxu0 0
  %1516 = vmatpush1.bf16.msra.mxu0 %v1361
  %1517 = vmatprep.subr.bf16.mxu0 0
  %1518 = vmatpush1.bf16.msra.mxu0 %v1364
  %1519 = vmatprep.subr.bf16.mxu0 0
  %1520 = vmatpush1.bf16.msra.mxu0 %v1367
  %1521 = vmatprep.subr.bf16.mxu0 0
  %1522 = vmatpush1.bf16.msra.mxu0 0
  %1523 = vmatprep.subr.bf16.mxu0 0
  %1524 = vmatpush1.bf16.msra.mxu0 0
  %1525 = vmatprep.subr.bf16.mxu0 0
  %1526 = vmatpush1.bf16.msra.mxu0 0
  %1527 = vmatprep.subr.bf16.mxu0 0
  %1528 = vmatpush1.bf16.msra.mxu0 0
  %1529 = vmatprep.subr.bf16.mxu0 0
  %1530 = vmatpush1.bf16.msra.mxu0 0
  %1531 = vmatprep.subr.bf16.mxu0 0
  %1532 = vmatpush1.bf16.msra.mxu0 0
  %1533 = vmatprep.subr.bf16.mxu0 0
  %1534 = vmatpush1.bf16.msra.mxu0 0
  %1535 = vmatprep.subr.bf16.mxu0 0
  %1536 = vmatpush1.bf16.msra.mxu0 0
  %1537 = vmatprep.mubr.bf16.mxu0 0
  %1538 = vmatmul.mubr.bf16.gmra.mrb[0].mxu0 %v1207
  %v1539 = vpop.f32.mrb[0].mxu0
  %v1540 = vadd.f32 %v1260, %v1539
  %v1541 = vpop.f32.mrb[0].mxu0
  %v1542 = vpop.f32.mrb[0].mxu0
  %v1543 = vadd.f32 %v1260, %v1542
  %v1544 = vpop.f32.mrb[0].mxu0
  %1545 = vmatprep.mubr.bf16.mxu0 0
  %1546 = vmatmul.mubr.bf16.gmra.mrb[0].mxu0 %v1208
  %v1547 = vpop.f32.mrb[0].mxu0
  %v1548 = vadd.f32 %v1260, %v1547
  %v1549 = vpop.f32.mrb[0].mxu0
  %v1550 = vpop.f32.mrb[0].mxu0
  %v1551 = vadd.f32 %v1260, %v1550
  %v1552 = vpop.f32.mrb[0].mxu0
  %1553 = vmatprep.mubr.bf16.mxu0 0
  %1554 = vmatmul.mubr.bf16.gmra.mrb[0].mxu0 %v1209
  %v1555 = vpop.f32.mrb[0].mxu0
  %v1556 = vadd.f32 %v1260, %v1555
  %v1557 = vpop.f32.mrb[0].mxu0
  %v1558 = vpop.f32.mrb[0].mxu0
  %v1559 = vadd.f32 %v1260, %v1558
  %v1560 = vpop.f32.mrb[0].mxu0
  %1561 = vmatprep.mubr.bf16.mxu0 0
  %1562 = vmatmul.mubr.bf16.gmra.mrb[0].mxu0 %v1210
  %v1563 = vpop.f32.mrb[0].mxu0
  %v1564 = vadd.f32 %v1260, %v1563
  %v1565 = vpop.f32.mrb[0].mxu0
  %v1566 = vpop.f32.mrb[0].mxu0
  %v1567 = vadd.f32 %v1260, %v1566
  %v1568 = vpop.f32.mrb[0].mxu0
  %1569 = vmatprep.mubr.bf16.mxu0 0
  %1570 = vmatmul.mubr.bf16.gmra.mrb[0].mxu0 %v1211
  %v1571 = vpop.f32.mrb[0].mxu0
  %v1572 = vadd.f32 %v1260, %v1571
  %v1573 = vpop.f32.mrb[0].mxu0
  %v1574 = vpop.f32.mrb[0].mxu0
  %v1575 = vadd.f32 %v1260, %v1574
  %v1576 = vpop.f32.mrb[0].mxu0
  %1577 = vmatprep.mubr.bf16.mxu0 0
  %1578 = vmatmul.mubr.bf16.gmra.mrb[0].mxu0 %v1212
  %v1579 = vpop.f32.mrb[0].mxu0
  %v1580 = vadd.f32 %v1260, %v1579
  %v1581 = vpop.f32.mrb[0].mxu0
  %v1582 = vpop.f32.mrb[0].mxu0
  %v1583 = vadd.f32 %v1260, %v1582
  %v1584 = vpop.f32.mrb[0].mxu0
  %1585 = vmatprep.mubr.bf16.mxu0 0
  %1586 = vmatmul.mubr.bf16.gmra.mrb[0].mxu0 %v1213
  %v1587 = vpop.f32.mrb[0].mxu0
  %v1588 = vadd.f32 %v1260, %v1587
  %v1589 = vpop.f32.mrb[0].mxu0
  %v1590 = vpop.f32.mrb[0].mxu0
  %v1591 = vadd.f32 %v1260, %v1590
  %v1592 = vpop.f32.mrb[0].mxu0
  %1593 = vmatprep.mubr.bf16.mxu0 0
  %1594 = vmatmul.mubr.bf16.gmra.mrb[0].mxu0 %v1214
  %v1595 = vpop.f32.mrb[0].mxu0
  %v1596 = vadd.f32 %v1260, %v1595
  %v1597 = vpop.f32.mrb[0].mxu0
  %v1598 = vpop.f32.mrb[0].mxu0
  %v1599 = vadd.f32 %v1260, %v1598
  %v1600 = vpop.f32.mrb[0].mxu0
  %1601 = vdwg.mxu0
  %v1602 = vmul.f32 %v1427, 0.17677669
  %v1603 = vmul.f32 %v1431, 0.17677669
  %v1604 = vmul.f32 %v1437, 0.17677669
  %v1605 = vmul.f32 %v1441, 0.17677669
  %v1606 = vmul.f32 %v1447, 0.17677669
  %v1607 = vmul.f32 %v1451, 0.17677669
  %v1608 = vmul.f32 %v1457, 0.17677669
  %v1609 = vmul.f32 %v1461, 0.17677669
  %v1610 = vmul.f32 %v1467, 0.17677669
  %v1611 = vmul.f32 %v1471, 0.17677669
  %v1612 = vmul.f32 %v1477, 0.17677669
  %v1613 = vmul.f32 %v1481, 0.17677669
  %v1614 = vmul.f32 %v1487, 0.17677669
  %v1615 = vmul.f32 %v1491, 0.17677669
  %v1616 = vmul.f32 %v1497, 0.17677669
  %v1617 = vmul.f32 %v1501, 0.17677669
  %1618 = vxpose.xlu0.b32.start [1/16] %v1429, 128
  %1619 = vxpose.xlu0.b32.cont [2/16] %v1433, 128
  %1620 = vxpose.xlu0.b32.cont [3/16] %v1439, 128
  %1621 = vxpose.xlu0.b32.cont [4/16] %v1443, 128
  %1622 = vxpose.xlu0.b32.cont [5/16] %v1449, 128
  %1623 = vxpose.xlu0.b32.cont [6/16] %v1453, 128
  %1624 = vxpose.xlu0.b32.cont [7/16] %v1459, 128
  %1625 = vxpose.xlu0.b32.cont [8/16] %v1463, 128
  %1626 = vxpose.xlu0.b32.cont [9/16] %v1469, 128
  %1627 = vxpose.xlu0.b32.cont [10/16] %v1473, 128
  %1628 = vxpose.xlu0.b32.cont [11/16] %v1479, 128
  %1629 = vxpose.xlu0.b32.cont [12/16] %v1483, 128
  %1630 = vxpose.xlu0.b32.cont [13/16] %v1489, 128
  %1631 = vxpose.xlu0.b32.cont [14/16] %v1493, 128
  %1632 = vxpose.xlu0.b32.cont [15/16] %v1499, 128
  %1633 = vxpose.xlu0.b32.end [16/16] %v1503, 128
  %v1634 = vpop.trf.xlu0
  %v1635 = vpop.trf.xlu0
  %v1636 = vpop.trf.xlu0
  %v1637 = vpop.trf.xlu0
  %v1638 = vpop.trf.xlu0
  %v1639 = vpop.trf.xlu0
  %v1640 = vpop.trf.xlu0
  %v1641 = vpop.trf.xlu0
  %v1642 = vpop.trf.xlu0
  %v1643 = vpop.trf.xlu0
  %v1644 = vpop.trf.xlu0
  %v1645 = vpop.trf.xlu0
  %v1646 = vpop.trf.xlu0
  %v1647 = vpop.trf.xlu0
  %v1648 = vpop.trf.xlu0
  %v1649 = vpop.trf.xlu0
  %v1650 = vpack.c.bf16 %v1635, %v1634
  %v1651 = vpack.c.bf16 %v1637, %v1636
  %v1652 = vpack.c.bf16 %v1639, %v1638
  %v1653 = vpack.c.bf16 %v1641, %v1640
  %v1654 = vpack.c.bf16 %v1643, %v1642
  %v1655 = vpack.c.bf16 %v1645, %v1644
  %v1656 = vpack.c.bf16 %v1647, %v1646
  %v1657 = vpack.c.bf16 %v1649, %v1648
  %v1658 = vld [vmem:[%s1] sm:$0xff]
  %v1659 = vld [vmem:[%s1 + $0x8] sm:$0xff]
  %v1660 = vld [vmem:[%s1 + $0x10] sm:$0xff]
  %v1661 = vld [vmem:[%s1 + $0x18] sm:$0xff]
  %v1662 = vld [vmem:[%s1 + $0x20] sm:$0xff]
  %v1663 = vld [vmem:[%s1 + $0x28] sm:$0xff]
  %v1664 = vld [vmem:[%s1 + $0x30] sm:$0xff]
  %v1665 = vld [vmem:[%s1 + $0x38] sm:$0xff]
  %v1666 = vld [vmem:[%s1 + $0x40] sm:$0xff]
  %v1667 = vld [vmem:[%s1 + $0x48] sm:$0xff]
  %v1668 = vld [vmem:[%s1 + $0x50] sm:$0xff]
  %v1669 = vld [vmem:[%s1 + $0x58] sm:$0xff]
  %v1670 = vld [vmem:[%s1 + $0x60] sm:$0xff]
  %v1671 = vld [vmem:[%s1 + $0x68] sm:$0xff]
  %v1672 = vld [vmem:[%s1 + $0x70] sm:$0xff]
  %v1673 = vld [vmem:[%s1 + $0x78] sm:$0xff]
  %v1674 = vld [vmem:[%s5] sm:$0x1]
  %v1675 = vlaneseq
  %v1676 = vshrl.u32 %v1675, 7
  %v1677 = vsub.s32 0, %v1676
  %v1678 = vrot.slane %v1674, %v1677
  %v1679 = vmul.f32 %v1602, %v1678
  %v1680 = vmul.f32 %v1603, %v1678
  %v1681 = vmul.f32 %v1604, %v1678
  %v1682 = vmul.f32 %v1605, %v1678
  %v1683 = vmul.f32 %v1606, %v1678
  %v1684 = vmul.f32 %v1607, %v1678
  %v1685 = vmul.f32 %v1608, %v1678
  %v1686 = vmul.f32 %v1609, %v1678
  %v1687 = vmul.f32 %v1610, %v1678
  %v1688 = vmul.f32 %v1611, %v1678
  %v1689 = vmul.f32 %v1612, %v1678
  %v1690 = vmul.f32 %v1613, %v1678
  %v1691 = vmul.f32 %v1614, %v1678
  %v1692 = vmul.f32 %v1615, %v1678
  %v1693 = vmul.f32 %v1616, %v1678
  %v1694 = vmul.f32 %v1617, %v1678
  %v1695 = vpack.c.bf16 %v1680, %v1679
  %v1696 = vpack.c.bf16 %v1682, %v1681
  %v1697 = vpack.c.bf16 %v1684, %v1683
  %v1698 = vpack.c.bf16 %v1686, %v1685
  %v1699 = vpack.c.bf16 %v1688, %v1687
  %v1700 = vpack.c.bf16 %v1690, %v1689
  %v1701 = vpack.c.bf16 %v1692, %v1691
  %v1702 = vpack.c.bf16 %v1694, %v1693
  %1703 = vmatprep.subr.bf16.mxu0 0
  %1704 = vmatpush1.bf16.msra.mxu0 %v1650
  %1705 = vmatprep.subr.bf16.mxu0 0
  %1706 = vmatpush1.bf16.msra.mxu0 %v1651
  %1707 = vmatprep.subr.bf16.mxu0 0
  %1708 = vmatpush1.bf16.msra.mxu0 %v1652
  %1709 = vmatprep.subr.bf16.mxu0 0
  %1710 = vmatpush1.bf16.msra.mxu0 %v1653
  %1711 = vmatprep.subr.bf16.mxu0 0
  %1712 = vmatpush1.bf16.msra.mxu0 %v1654
  %1713 = vmatprep.subr.bf16.mxu0 0
  %1714 = vmatpush1.bf16.msra.mxu0 %v1655
  %1715 = vmatprep.subr.bf16.mxu0 0
  %1716 = vmatpush1.bf16.msra.mxu0 %v1656
  %1717 = vmatprep.subr.bf16.mxu0 0
  %1718 = vmatpush1.bf16.msra.mxu0 %v1657
  %1719 = vmatprep.subr.bf16.mxu0 0
  %1720 = vmatpush1.bf16.msra.mxu0 0
  %1721 = vmatprep.subr.bf16.mxu0 0
  %1722 = vmatpush1.bf16.msra.mxu0 0
  %1723 = vmatprep.subr.bf16.mxu0 0
  %1724 = vmatpush1.bf16.msra.mxu0 0
  %1725 = vmatprep.subr.bf16.mxu0 0
  %1726 = vmatpush1.bf16.msra.mxu0 0
  %1727 = vmatprep.subr.bf16.mxu0 0
  %1728 = vmatpush1.bf16.msra.mxu0 0
  %1729 = vmatprep.subr.bf16.mxu0 0
  %1730 = vmatpush1.bf16.msra.mxu0 0
  %1731 = vmatprep.subr.bf16.mxu0 0
  %1732 = vmatpush1.bf16.msra.mxu0 0
  %1733 = vmatprep.subr.bf16.mxu0 0
  %1734 = vmatpush1.bf16.msra.mxu0 0
  %1735 = vmatprep.mubr.bf16.mxu0 0
  %1736 = vmatmul.mubr.bf16.gmra.mrb[0].mxu0 %v1695
  %v1737 = vpop.f32.mrb[0].mxu0
  %v1738 = vadd.f32 %v1658, %v1737
  %v1739 = vpop.f32.mrb[0].mxu0
  %v1740 = vpop.f32.mrb[0].mxu0
  %v1741 = vadd.f32 %v1659, %v1740
  %v1742 = vpop.f32.mrb[0].mxu0
  %1743 = vmatprep.mubr.bf16.mxu0 0
  %1744 = vmatmul.mubr.bf16.gmra.mrb[0].mxu0 %v1696
  %v1745 = vpop.f32.mrb[0].mxu0
  %v1746 = vadd.f32 %v1660, %v1745
  %v1747 = vpop.f32.mrb[0].mxu0
  %v1748 = vpop.f32.mrb[0].mxu0
  %v1749 = vadd.f32 %v1661, %v1748
  %v1750 = vpop.f32.mrb[0].mxu0
  %1751 = vmatprep.mubr.bf16.mxu0 0
  %1752 = vmatmul.mubr.bf16.gmra.mrb[0].mxu0 %v1697
  %v1753 = vpop.f32.mrb[0].mxu0
  %v1754 = vadd.f32 %v1662, %v1753
  %v1755 = vpop.f32.mrb[0].mxu0
  %v1756 = vpop.f32.mrb[0].mxu0
  %v1757 = vadd.f32 %v1663, %v1756
  %v1758 = vpop.f32.mrb[0].mxu0
  %1759 = vmatprep.mubr.bf16.mxu0 0
  %1760 = vmatmul.mubr.bf16.gmra.mrb[0].mxu0 %v1698
  %v1761 = vpop.f32.mrb[0].mxu0
  %v1762 = vadd.f32 %v1664, %v1761
  %v1763 = vpop.f32.mrb[0].mxu0
  %v1764 = vpop.f32.mrb[0].mxu0
  %v1765 = vadd.f32 %v1665, %v1764
  %v1766 = vpop.f32.mrb[0].mxu0
  %1767 = vmatprep.mubr.bf16.mxu0 0
  %1768 = vmatmul.mubr.bf16.gmra.mrb[0].mxu0 %v1699
  %v1769 = vpop.f32.mrb[0].mxu0
  %v1770 = vadd.f32 %v1666, %v1769
  %v1771 = vpop.f32.mrb[0].mxu0
  %v1772 = vpop.f32.mrb[0].mxu0
  %v1773 = vadd.f32 %v1667, %v1772
  %v1774 = vpop.f32.mrb[0].mxu0
  %1775 = vmatprep.mubr.bf16.mxu0 0
  %1776 = vmatmul.mubr.bf16.gmra.mrb[0].mxu0 %v1700
  %v1777 = vpop.f32.mrb[0].mxu0
  %v1778 = vadd.f32 %v1668, %v1777
  %v1779 = vpop.f32.mrb[0].mxu0
  %v1780 = vpop.f32.mrb[0].mxu0
  %v1781 = vadd.f32 %v1669, %v1780
  %v1782 = vpop.f32.mrb[0].mxu0
  %1783 = vmatprep.mubr.bf16.mxu0 0
  %1784 = vmatmul.mubr.bf16.gmra.mrb[0].mxu0 %v1701
  %v1785 = vpop.f32.mrb[0].mxu0
  %v1786 = vadd.f32 %v1670, %v1785
  %v1787 = vpop.f32.mrb[0].mxu0
  %v1788 = vpop.f32.mrb[0].mxu0
  %v1789 = vadd.f32 %v1671, %v1788
  %v1790 = vpop.f32.mrb[0].mxu0
  %1791 = vmatprep.mubr.bf16.mxu0 0
  %1792 = vmatmul.mubr.bf16.gmra.mrb[0].mxu0 %v1702
  %v1793 = vpop.f32.mrb[0].mxu0
  %v1794 = vadd.f32 %v1672, %v1793
  %v1795 = vpop.f32.mrb[0].mxu0
  %v1796 = vpop.f32.mrb[0].mxu0
  %v1797 = vadd.f32 %v1673, %v1796
  %v1798 = vpop.f32.mrb[0].mxu0
  %1799 = vdwg.mxu0
  %1800 = vmax.xlane.f32.xlu0 %v1738
  %v1801 = vpop.xlane.xlu0 %1800
  %1802 = vmax.xlane.f32.xlu0 %v1741
  %v1803 = vpop.xlane.xlu0 %1802
  %1804 = vmax.xlane.f32.xlu0 %v1746
  %v1805 = vpop.xlane.xlu0 %1804
  %1806 = vmax.xlane.f32.xlu0 %v1749
  %v1807 = vpop.xlane.xlu0 %1806
  %1808 = vmax.xlane.f32.xlu0 %v1754
  %v1809 = vpop.xlane.xlu0 %1808
  %1810 = vmax.xlane.f32.xlu0 %v1757
  %v1811 = vpop.xlane.xlu0 %1810
  %1812 = vmax.xlane.f32.xlu0 %v1762
  %v1813 = vpop.xlane.xlu0 %1812
  %1814 = vmax.xlane.f32.xlu0 %v1765
  %v1815 = vpop.xlane.xlu0 %1814
  %1816 = vmax.xlane.f32.xlu0 %v1770
  %v1817 = vpop.xlane.xlu0 %1816
  %1818 = vmax.xlane.f32.xlu0 %v1773
  %v1819 = vpop.xlane.xlu0 %1818
  %1820 = vmax.xlane.f32.xlu0 %v1778
  %v1821 = vpop.xlane.xlu0 %1820
  %1822 = vmax.xlane.f32.xlu0 %v1781
  %v1823 = vpop.xlane.xlu0 %1822
  %1824 = vmax.xlane.f32.xlu0 %v1786
  %v1825 = vpop.xlane.xlu0 %1824
  %1826 = vmax.xlane.f32.xlu0 %v1789
  %v1827 = vpop.xlane.xlu0 %1826
  %1828 = vmax.xlane.f32.xlu0 %v1794
  %v1829 = vpop.xlane.xlu0 %1828
  %1830 = vmax.xlane.f32.xlu0 %v1797
  %v1831 = vpop.xlane.xlu0 %1830
  %v1832 = vsub.f32 %v1738, %v1801
  %v1833 = vsub.f32 %v1741, %v1803
  %v1834 = vsub.f32 %v1746, %v1805
  %v1835 = vsub.f32 %v1749, %v1807
  %v1836 = vsub.f32 %v1754, %v1809
  %v1837 = vsub.f32 %v1757, %v1811
  %v1838 = vsub.f32 %v1762, %v1813
  %v1839 = vsub.f32 %v1765, %v1815
  %v1840 = vsub.f32 %v1770, %v1817
  %v1841 = vsub.f32 %v1773, %v1819
  %v1842 = vsub.f32 %v1778, %v1821
  %v1843 = vsub.f32 %v1781, %v1823
  %v1844 = vsub.f32 %v1786, %v1825
  %v1845 = vsub.f32 %v1789, %v1827
  %v1846 = vsub.f32 %v1794, %v1829
  %v1847 = vsub.f32 %v1797, %v1831
  %v1848 = vmul.f32 %v1832, 1.442695
  %v1849 = vpow.pop %v1848
  %v1850 = vmul.f32 %v1833, 1.442695
  %v1851 = vpow.pop %v1850
  %v1852 = vmul.f32 %v1834, 1.442695
  %v1853 = vpow.pop %v1852
  %v1854 = vmul.f32 %v1835, 1.442695
  %v1855 = vpow.pop %v1854
  %v1856 = vmul.f32 %v1836, 1.442695
  %v1857 = vpow.pop %v1856
  %v1858 = vmul.f32 %v1837, 1.442695
  %v1859 = vpow.pop %v1858
  %v1860 = vmul.f32 %v1838, 1.442695
  %v1861 = vpow.pop %v1860
  %v1862 = vmul.f32 %v1839, 1.442695
  %v1863 = vpow.pop %v1862
  %v1864 = vmul.f32 %v1840, 1.442695
  %v1865 = vpow.pop %v1864
  %v1866 = vmul.f32 %v1841, 1.442695
  %v1867 = vpow.pop %v1866
  %v1868 = vmul.f32 %v1842, 1.442695
  %v1869 = vpow.pop %v1868
  %v1870 = vmul.f32 %v1843, 1.442695
  %v1871 = vpow.pop %v1870
  %v1872 = vmul.f32 %v1844, 1.442695
  %v1873 = vpow.pop %v1872
  %v1874 = vmul.f32 %v1845, 1.442695
  %v1875 = vpow.pop %v1874
  %v1876 = vmul.f32 %v1846, 1.442695
  %v1877 = vpow.pop %v1876
  %v1878 = vmul.f32 %v1847, 1.442695
  %v1879 = vpow.pop %v1878
  %1880 = vadd.xlane.f32.xlu0 %v1849
  %v1881 = vpop.xlane.xlu0 %1880
  %1882 = vadd.xlane.f32.xlu0 %v1851
  %v1883 = vpop.xlane.xlu0 %1882
  %1884 = vadd.xlane.f32.xlu0 %v1853
  %v1885 = vpop.xlane.xlu0 %1884
  %1886 = vadd.xlane.f32.xlu0 %v1855
  %v1887 = vpop.xlane.xlu0 %1886
  %1888 = vadd.xlane.f32.xlu0 %v1857
  %v1889 = vpop.xlane.xlu0 %1888
  %1890 = vadd.xlane.f32.xlu0 %v1859
  %v1891 = vpop.xlane.xlu0 %1890
  %1892 = vadd.xlane.f32.xlu0 %v1861
  %v1893 = vpop.xlane.xlu0 %1892
  %1894 = vadd.xlane.f32.xlu0 %v1863
  %v1895 = vpop.xlane.xlu0 %1894
  %1896 = vadd.xlane.f32.xlu0 %v1865
  %v1897 = vpop.xlane.xlu0 %1896
  %1898 = vadd.xlane.f32.xlu0 %v1867
  %v1899 = vpop.xlane.xlu0 %1898
  %1900 = vadd.xlane.f32.xlu0 %v1869
  %v1901 = vpop.xlane.xlu0 %1900
  %1902 = vadd.xlane.f32.xlu0 %v1871
  %v1903 = vpop.xlane.xlu0 %1902
  %1904 = vadd.xlane.f32.xlu0 %v1873
  %v1905 = vpop.xlane.xlu0 %1904
  %1906 = vadd.xlane.f32.xlu0 %v1875
  %v1907 = vpop.xlane.xlu0 %1906
  %1908 = vadd.xlane.f32.xlu0 %v1877
  %v1909 = vpop.xlane.xlu0 %1908
  %1910 = vadd.xlane.f32.xlu0 %v1879
  %v1911 = vpop.xlane.xlu0 %1910
  %v1912 = vrcp.pop %v1881
  %v1913 = vrcp.pop %v1883
  %v1914 = vrcp.pop %v1885
  %v1915 = vrcp.pop %v1887
  %v1916 = vrcp.pop %v1889
  %v1917 = vrcp.pop %v1891
  %v1918 = vrcp.pop %v1893
  %v1919 = vrcp.pop %v1895
  %v1920 = vrcp.pop %v1897
  %v1921 = vrcp.pop %v1899
  %v1922 = vrcp.pop %v1901
  %v1923 = vrcp.pop %v1903
  %v1924 = vrcp.pop %v1905
  %v1925 = vrcp.pop %v1907
  %v1926 = vrcp.pop %v1909
  %v1927 = vrcp.pop %v1911
  %v1928 = vmul.f32 %v1849, %v1912
  %v1929 = vmul.f32 %v1851, %v1913
  %v1930 = vmul.f32 %v1853, %v1914
  %v1931 = vmul.f32 %v1855, %v1915
  %v1932 = vmul.f32 %v1857, %v1916
  %v1933 = vmul.f32 %v1859, %v1917
  %v1934 = vmul.f32 %v1861, %v1918
  %v1935 = vmul.f32 %v1863, %v1919
  %v1936 = vmul.f32 %v1865, %v1920
  %v1937 = vmul.f32 %v1867, %v1921
  %v1938 = vmul.f32 %v1869, %v1922
  %v1939 = vmul.f32 %v1871, %v1923
  %v1940 = vmul.f32 %v1873, %v1924
  %v1941 = vmul.f32 %v1875, %v1925
  %v1942 = vmul.f32 %v1877, %v1926
  %v1943 = vmul.f32 %v1879, %v1927
  %v1944 = vmul.f32 %v1540, %v1678
  %v1945 = vmul.f32 %v1543, %v1678
  %v1946 = vmul.f32 %v1548, %v1678
  %v1947 = vmul.f32 %v1551, %v1678
  %v1948 = vmul.f32 %v1556, %v1678
  %v1949 = vmul.f32 %v1559, %v1678
  %v1950 = vmul.f32 %v1564, %v1678
  %v1951 = vmul.f32 %v1567, %v1678
  %v1952 = vmul.f32 %v1572, %v1678
  %v1953 = vmul.f32 %v1575, %v1678
  %v1954 = vmul.f32 %v1580, %v1678
  %v1955 = vmul.f32 %v1583, %v1678
  %v1956 = vmul.f32 %v1588, %v1678
  %v1957 = vmul.f32 %v1591, %v1678
  %v1958 = vmul.f32 %v1596, %v1678
  %v1959 = vmul.f32 %v1599, %v1678
  %v1960 = vpack.c.bf16 %v1945, %v1944
  %v1961 = vpack.c.bf16 %v1947, %v1946
  %v1962 = vpack.c.bf16 %v1949, %v1948
  %v1963 = vpack.c.bf16 %v1951, %v1950
  %v1964 = vpack.c.bf16 %v1953, %v1952
  %v1965 = vpack.c.bf16 %v1955, %v1954
  %v1966 = vpack.c.bf16 %v1957, %v1956
  %v1967 = vpack.c.bf16 %v1959, %v1958
  %v1968 = vpack.c.bf16 %v1929, %v1928
  %v1969 = vpack.c.bf16 %v1931, %v1930
  %v1970 = vpack.c.bf16 %v1933, %v1932
  %v1971 = vpack.c.bf16 %v1935, %v1934
  %v1972 = vpack.c.bf16 %v1937, %v1936
  %v1973 = vpack.c.bf16 %v1939, %v1938
  %v1974 = vpack.c.bf16 %v1941, %v1940
  %v1975 = vpack.c.bf16 %v1943, %v1942
  %v1976 = vld [vmem:[%s5 + $0x1] sm:$0x1]
  %v1977 = vlaneseq
  %v1978 = vshrl.u32 %v1977, 7
  %v1979 = vsub.s32 0, %v1978
  %v1980 = vrot.slane %v1976, %v1979
  %v1981 = vmul.f32 %v1602, %v1980
  %v1982 = vmul.f32 %v1603, %v1980
  %v1983 = vmul.f32 %v1604, %v1980
  %v1984 = vmul.f32 %v1605, %v1980
  %v1985 = vmul.f32 %v1606, %v1980
  %v1986 = vmul.f32 %v1607, %v1980
  %v1987 = vmul.f32 %v1608, %v1980
  %v1988 = vmul.f32 %v1609, %v1980
  %v1989 = vmul.f32 %v1610, %v1980
  %v1990 = vmul.f32 %v1611, %v1980
  %v1991 = vmul.f32 %v1612, %v1980
  %v1992 = vmul.f32 %v1613, %v1980
  %v1993 = vmul.f32 %v1614, %v1980
  %v1994 = vmul.f32 %v1615, %v1980
  %v1995 = vmul.f32 %v1616, %v1980
  %v1996 = vmul.f32 %v1617, %v1980
  %v1997 = vpack.c.bf16 %v1982, %v1981
  %v1998 = vpack.c.bf16 %v1984, %v1983
  %v1999 = vpack.c.bf16 %v1986, %v1985
  %v2000 = vpack.c.bf16 %v1988, %v1987
  %v2001 = vpack.c.bf16 %v1990, %v1989
  %v2002 = vpack.c.bf16 %v1992, %v1991
  %v2003 = vpack.c.bf16 %v1994, %v1993
  %v2004 = vpack.c.bf16 %v1996, %v1995
  %2005 = vmatprep.subr.bf16.mxu0 0
  %2006 = vmatpush1.bf16.msra.mxu0 %v1650
  %2007 = vmatprep.subr.bf16.mxu0 0
  %2008 = vmatpush1.bf16.msra.mxu0 %v1651
  %2009 = vmatprep.subr.bf16.mxu0 0
  %2010 = vmatpush1.bf16.msra.mxu0 %v1652
  %2011 = vmatprep.subr.bf16.mxu0 0
  %2012 = vmatpush1.bf16.msra.mxu0 %v1653
  %2013 = vmatprep.subr.bf16.mxu0 0
  %2014 = vmatpush1.bf16.msra.mxu0 %v1654
  %2015 = vmatprep.subr.bf16.mxu0 0
  %2016 = vmatpush1.bf16.msra.mxu0 %v1655
  %2017 = vmatprep.subr.bf16.mxu0 0
  %2018 = vmatpush1.bf16.msra.mxu0 %v1656
  %2019 = vmatprep.subr.bf16.mxu0 0
  %2020 = vmatpush1.bf16.msra.mxu0 %v1657
  %2021 = vmatprep.subr.bf16.mxu0 0
  %2022 = vmatpush1.bf16.msra.mxu0 0
  %2023 = vmatprep.subr.bf16.mxu0 0
  %2024 = vmatpush1.bf16.msra.mxu0 0
  %2025 = vmatprep.subr.bf16.mxu0 0
  %2026 = vmatpush1.bf16.msra.mxu0 0
  %2027 = vmatprep.subr.bf16.mxu0 0
  %2028 = vmatpush1.bf16.msra.mxu0 0
  %2029 = vmatprep.subr.bf16.mxu0 0
  %2030 = vmatpush1.bf16.msra.mxu0 0
  %2031 = vmatprep.subr.bf16.mxu0 0
  %2032 = vmatpush1.bf16.msra.mxu0 0
  %2033 = vmatprep.subr.bf16.mxu0 0
  %2034 = vmatpush1.bf16.msra.mxu0 0
  %2035 = vmatprep.subr.bf16.mxu0 0
  %2036 = vmatpush1.bf16.msra.mxu0 0
  %2037 = vmatprep.mubr.bf16.mxu0 0
  %2038 = vmatmul.mubr.bf16.gmra.mrb[0].mxu0 %v1997
  %v2039 = vpop.f32.mrb[0].mxu0
  %v2040 = vadd.f32 %v1658, %v2039
  %v2041 = vpop.f32.mrb[0].mxu0
  %v2042 = vpop.f32.mrb[0].mxu0
  %v2043 = vadd.f32 %v1659, %v2042
  %v2044 = vpop.f32.mrb[0].mxu0
  %2045 = vmatprep.mubr.bf16.mxu0 0
  %2046 = vmatmul.mubr.bf16.gmra.mrb[0].mxu0 %v1998
  %v2047 = vpop.f32.mrb[0].mxu0
  %v2048 = vadd.f32 %v1660, %v2047
  %v2049 = vpop.f32.mrb[0].mxu0
  %v2050 = vpop.f32.mrb[0].mxu0
  %v2051 = vadd.f32 %v1661, %v2050
  %v2052 = vpop.f32.mrb[0].mxu0
  %2053 = vmatprep.mubr.bf16.mxu0 0
  %2054 = vmatmul.mubr.bf16.gmra.mrb[0].mxu0 %v1999
  %v2055 = vpop.f32.mrb[0].mxu0
  %v2056 = vadd.f32 %v1662, %v2055
  %v2057 = vpop.f32.mrb[0].mxu0
  %v2058 = vpop.f32.mrb[0].mxu0
  %v2059 = vadd.f32 %v1663, %v2058
  %v2060 = vpop.f32.mrb[0].mxu0
  %2061 = vmatprep.mubr.bf16.mxu0 0
  %2062 = vmatmul.mubr.bf16.gmra.mrb[0].mxu0 %v2000
  %v2063 = vpop.f32.mrb[0].mxu0
  %v2064 = vadd.f32 %v1664, %v2063
  %v2065 = vpop.f32.mrb[0].mxu0
  %v2066 = vpop.f32.mrb[0].mxu0
  %v2067 = vadd.f32 %v1665, %v2066
  %v2068 = vpop.f32.mrb[0].mxu0
  %2069 = vmatprep.mubr.bf16.mxu0 0
  %2070 = vmatmul.mubr.bf16.gmra.mrb[0].mxu0 %v2001
  %v2071 = vpop.f32.mrb[0].mxu0
  %v2072 = vadd.f32 %v1666, %v2071
  %v2073 = vpop.f32.mrb[0].mxu0
  %v2074 = vpop.f32.mrb[0].mxu0
  %v2075 = vadd.f32 %v1667, %v2074
  %v2076 = vpop.f32.mrb[0].mxu0
  %2077 = vmatprep.mubr.bf16.mxu0 0
  %2078 = vmatmul.mubr.bf16.gmra.mrb[0].mxu0 %v2002
  %v2079 = vpop.f32.mrb[0].mxu0
  %v2080 = vadd.f32 %v1668, %v2079
  %v2081 = vpop.f32.mrb[0].mxu0
  %v2082 = vpop.f32.mrb[0].mxu0
  %v2083 = vadd.f32 %v1669, %v2082
  %v2084 = vpop.f32.mrb[0].mxu0
  %2085 = vmatprep.mubr.bf16.mxu0 0
  %2086 = vmatmul.mubr.bf16.gmra.mrb[0].mxu0 %v2003
  %v2087 = vpop.f32.mrb[0].mxu0
  %v2088 = vadd.f32 %v1670, %v2087
  %v2089 = vpop.f32.mrb[0].mxu0
  %v2090 = vpop.f32.mrb[0].mxu0
  %v2091 = vadd.f32 %v1671, %v2090
  %v2092 = vpop.f32.mrb[0].mxu0
  %2093 = vmatprep.mubr.bf16.mxu0 0
  %2094 = vmatmul.mubr.bf16.gmra.mrb[0].mxu0 %v2004
  %v2095 = vpop.f32.mrb[0].mxu0
  %v2096 = vadd.f32 %v1672, %v2095
  %v2097 = vpop.f32.mrb[0].mxu0
  %v2098 = vpop.f32.mrb[0].mxu0
  %v2099 = vadd.f32 %v1673, %v2098
  %v2100 = vpop.f32.mrb[0].mxu0
  %2101 = vdwg.mxu0
  %2102 = vmax.xlane.f32.xlu0 %v2040
  %v2103 = vpop.xlane.xlu0 %2102
  %2104 = vmax.xlane.f32.xlu0 %v2043
  %v2105 = vpop.xlane.xlu0 %2104
  %2106 = vmax.xlane.f32.xlu0 %v2048
  %v2107 = vpop.xlane.xlu0 %2106
  %2108 = vmax.xlane.f32.xlu0 %v2051
  %v2109 = vpop.xlane.xlu0 %2108
  %2110 = vmax.xlane.f32.xlu0 %v2056
  %v2111 = vpop.xlane.xlu0 %2110
  %2112 = vmax.xlane.f32.xlu0 %v2059
  %v2113 = vpop.xlane.xlu0 %2112
  %2114 = vmax.xlane.f32.xlu0 %v2064
  %v2115 = vpop.xlane.xlu0 %2114
  %2116 = vmax.xlane.f32.xlu0 %v2067
  %v2117 = vpop.xlane.xlu0 %2116
  %2118 = vmax.xlane.f32.xlu0 %v2072
  %v2119 = vpop.xlane.xlu0 %2118
  %2120 = vmax.xlane.f32.xlu0 %v2075
  %v2121 = vpop.xlane.xlu0 %2120
  %2122 = vmax.xlane.f32.xlu0 %v2080
  %v2123 = vpop.xlane.xlu0 %2122
  %2124 = vmax.xlane.f32.xlu0 %v2083
  %v2125 = vpop.xlane.xlu0 %2124
  %2126 = vmax.xlane.f32.xlu0 %v2088
  %v2127 = vpop.xlane.xlu0 %2126
  %2128 = vmax.xlane.f32.xlu0 %v2091
  %v2129 = vpop.xlane.xlu0 %2128
  %2130 = vmax.xlane.f32.xlu0 %v2096
  %v2131 = vpop.xlane.xlu0 %2130
  %2132 = vmax.xlane.f32.xlu0 %v2099
  %v2133 = vpop.xlane.xlu0 %2132
  %v2134 = vsub.f32 %v2040, %v2103
  %v2135 = vsub.f32 %v2043, %v2105
  %v2136 = vsub.f32 %v2048, %v2107
  %v2137 = vsub.f32 %v2051, %v2109
  %v2138 = vsub.f32 %v2056, %v2111
  %v2139 = vsub.f32 %v2059, %v2113
  %v2140 = vsub.f32 %v2064, %v2115
  %v2141 = vsub.f32 %v2067, %v2117
  %v2142 = vsub.f32 %v2072, %v2119
  %v2143 = vsub.f32 %v2075, %v2121
  %v2144 = vsub.f32 %v2080, %v2123
  %v2145 = vsub.f32 %v2083, %v2125
  %v2146 = vsub.f32 %v2088, %v2127
  %v2147 = vsub.f32 %v2091, %v2129
  %v2148 = vsub.f32 %v2096, %v2131
  %v2149 = vsub.f32 %v2099, %v2133
  %v2150 = vmul.f32 %v2134, 1.442695
  %v2151 = vpow.pop %v2150
  %v2152 = vmul.f32 %v2135, 1.442695
  %v2153 = vpow.pop %v2152
  %v2154 = vmul.f32 %v2136, 1.442695
  %v2155 = vpow.pop %v2154
  %v2156 = vmul.f32 %v2137, 1.442695
  %v2157 = vpow.pop %v2156
  %v2158 = vmul.f32 %v2138, 1.442695
  %v2159 = vpow.pop %v2158
  %v2160 = vmul.f32 %v2139, 1.442695
  %v2161 = vpow.pop %v2160
  %v2162 = vmul.f32 %v2140, 1.442695
  %v2163 = vpow.pop %v2162
  %v2164 = vmul.f32 %v2141, 1.442695
  %v2165 = vpow.pop %v2164
  %v2166 = vmul.f32 %v2142, 1.442695
  %v2167 = vpow.pop %v2166
  %v2168 = vmul.f32 %v2143, 1.442695
  %v2169 = vpow.pop %v2168
  %v2170 = vmul.f32 %v2144, 1.442695
  %v2171 = vpow.pop %v2170
  %v2172 = vmul.f32 %v2145, 1.442695
  %v2173 = vpow.pop %v2172
  %v2174 = vmul.f32 %v2146, 1.442695
  %v2175 = vpow.pop %v2174
  %v2176 = vmul.f32 %v2147, 1.442695
  %v2177 = vpow.pop %v2176
  %v2178 = vmul.f32 %v2148, 1.442695
  %v2179 = vpow.pop %v2178
  %v2180 = vmul.f32 %v2149, 1.442695
  %v2181 = vpow.pop %v2180
  %2182 = vadd.xlane.f32.xlu0 %v2151
  %v2183 = vpop.xlane.xlu0 %2182
  %2184 = vadd.xlane.f32.xlu0 %v2153
  %v2185 = vpop.xlane.xlu0 %2184
  %2186 = vadd.xlane.f32.xlu0 %v2155
  %v2187 = vpop.xlane.xlu0 %2186
  %2188 = vadd.xlane.f32.xlu0 %v2157
  %v2189 = vpop.xlane.xlu0 %2188
  %2190 = vadd.xlane.f32.xlu0 %v2159
  %v2191 = vpop.xlane.xlu0 %2190
  %2192 = vadd.xlane.f32.xlu0 %v2161
  %v2193 = vpop.xlane.xlu0 %2192
  %2194 = vadd.xlane.f32.xlu0 %v2163
  %v2195 = vpop.xlane.xlu0 %2194
  %2196 = vadd.xlane.f32.xlu0 %v2165
  %v2197 = vpop.xlane.xlu0 %2196
  %2198 = vadd.xlane.f32.xlu0 %v2167
  %v2199 = vpop.xlane.xlu0 %2198
  %2200 = vadd.xlane.f32.xlu0 %v2169
  %v2201 = vpop.xlane.xlu0 %2200
  %2202 = vadd.xlane.f32.xlu0 %v2171
  %v2203 = vpop.xlane.xlu0 %2202
  %2204 = vadd.xlane.f32.xlu0 %v2173
  %v2205 = vpop.xlane.xlu0 %2204
  %2206 = vadd.xlane.f32.xlu0 %v2175
  %v2207 = vpop.xlane.xlu0 %2206
  %2208 = vadd.xlane.f32.xlu0 %v2177
  %v2209 = vpop.xlane.xlu0 %2208
  %2210 = vadd.xlane.f32.xlu0 %v2179
  %v2211 = vpop.xlane.xlu0 %2210
  %2212 = vadd.xlane.f32.xlu0 %v2181
  %v2213 = vpop.xlane.xlu0 %2212
  %v2214 = vrcp.pop %v2183
  %v2215 = vrcp.pop %v2185
  %v2216 = vrcp.pop %v2187
  %v2217 = vrcp.pop %v2189
  %v2218 = vrcp.pop %v2191
  %v2219 = vrcp.pop %v2193
  %v2220 = vrcp.pop %v2195
  %v2221 = vrcp.pop %v2197
  %v2222 = vrcp.pop %v2199
  %v2223 = vrcp.pop %v2201
  %v2224 = vrcp.pop %v2203
  %v2225 = vrcp.pop %v2205
  %v2226 = vrcp.pop %v2207
  %v2227 = vrcp.pop %v2209
  %v2228 = vrcp.pop %v2211
  %v2229 = vrcp.pop %v2213
  %v2230 = vmul.f32 %v2151, %v2214
  %v2231 = vmul.f32 %v2153, %v2215
  %v2232 = vmul.f32 %v2155, %v2216
  %v2233 = vmul.f32 %v2157, %v2217
  %v2234 = vmul.f32 %v2159, %v2218
  %v2235 = vmul.f32 %v2161, %v2219
  %v2236 = vmul.f32 %v2163, %v2220
  %v2237 = vmul.f32 %v2165, %v2221
  %v2238 = vmul.f32 %v2167, %v2222
  %v2239 = vmul.f32 %v2169, %v2223
  %v2240 = vmul.f32 %v2171, %v2224
  %v2241 = vmul.f32 %v2173, %v2225
  %v2242 = vmul.f32 %v2175, %v2226
  %v2243 = vmul.f32 %v2177, %v2227
  %v2244 = vmul.f32 %v2179, %v2228
  %v2245 = vmul.f32 %v2181, %v2229
  %v2246 = vmul.f32 %v1540, %v1980
  %v2247 = vmul.f32 %v1543, %v1980
  %v2248 = vmul.f32 %v1548, %v1980
  %v2249 = vmul.f32 %v1551, %v1980
  %v2250 = vmul.f32 %v1556, %v1980
  %v2251 = vmul.f32 %v1559, %v1980
  %v2252 = vmul.f32 %v1564, %v1980
  %v2253 = vmul.f32 %v1567, %v1980
  %v2254 = vmul.f32 %v1572, %v1980
  %v2255 = vmul.f32 %v1575, %v1980
  %v2256 = vmul.f32 %v1580, %v1980
  %v2257 = vmul.f32 %v1583, %v1980
  %v2258 = vmul.f32 %v1588, %v1980
  %v2259 = vmul.f32 %v1591, %v1980
  %v2260 = vmul.f32 %v1596, %v1980
  %v2261 = vmul.f32 %v1599, %v1980
  %v2262 = vpack.c.bf16 %v2247, %v2246
  %v2263 = vpack.c.bf16 %v2249, %v2248
  %v2264 = vpack.c.bf16 %v2251, %v2250
  %v2265 = vpack.c.bf16 %v2253, %v2252
  %v2266 = vpack.c.bf16 %v2255, %v2254
  %v2267 = vpack.c.bf16 %v2257, %v2256
  %v2268 = vpack.c.bf16 %v2259, %v2258
  %v2269 = vpack.c.bf16 %v2261, %v2260
  %v2270 = vpack.c.bf16 %v2231, %v2230
  %v2271 = vpack.c.bf16 %v2233, %v2232
  %v2272 = vpack.c.bf16 %v2235, %v2234
  %v2273 = vpack.c.bf16 %v2237, %v2236
  %v2274 = vpack.c.bf16 %v2239, %v2238
  %v2275 = vpack.c.bf16 %v2241, %v2240
  %v2276 = vpack.c.bf16 %v2243, %v2242
  %v2277 = vpack.c.bf16 %v2245, %v2244
  %2278 = vmatprep.subr.bf16.mxu0 0
  %2279 = vmatpush1.bf16.msra.mxu0 %v2262
  %2280 = vmatprep.subr.bf16.mxu0 0
  %2281 = vmatpush1.bf16.msra.mxu0 %v2263
  %2282 = vmatprep.subr.bf16.mxu0 0
  %2283 = vmatpush1.bf16.msra.mxu0 %v2264
  %2284 = vmatprep.subr.bf16.mxu0 0
  %2285 = vmatpush1.bf16.msra.mxu0 %v2265
  %2286 = vmatprep.subr.bf16.mxu0 0
  %2287 = vmatpush1.bf16.msra.mxu0 %v2266
  %2288 = vmatprep.subr.bf16.mxu0 0
  %2289 = vmatpush1.bf16.msra.mxu0 %v2267
  %2290 = vmatprep.subr.bf16.mxu0 0
  %2291 = vmatpush1.bf16.msra.mxu0 %v2268
  %2292 = vmatprep.subr.bf16.mxu0 0
  %2293 = vmatpush1.bf16.msra.mxu0 %v2269
  %2294 = vmatprep.subr.bf16.mxu0 0
  %2295 = vmatpush1.bf16.msra.mxu0 0
  %2296 = vmatprep.subr.bf16.mxu0 0
  %2297 = vmatpush1.bf16.msra.mxu0 0
  %2298 = vmatprep.subr.bf16.mxu0 0
  %2299 = vmatpush1.bf16.msra.mxu0 0
  %2300 = vmatprep.subr.bf16.mxu0 0
  %2301 = vmatpush1.bf16.msra.mxu0 0
  %2302 = vmatprep.subr.bf16.mxu0 0
  %2303 = vmatpush1.bf16.msra.mxu0 0
  %2304 = vmatprep.subr.bf16.mxu0 0
  %2305 = vmatpush1.bf16.msra.mxu0 0
  %2306 = vmatprep.subr.bf16.mxu0 0
  %2307 = vmatpush1.bf16.msra.mxu0 0
  %2308 = vmatprep.subr.bf16.mxu0 0
  %2309 = vmatpush1.bf16.msra.mxu0 0
  %2310 = vmatprep.mubr.bf16.mxu0 0
  %2311 = vmatmul.mubr.bf16.gmra.mrb[0].mxu0 %v2270
  %v2312 = vpop.f32.mrb[0].mxu0
  %v2313 = vadd.f32 0.0, %v2312
  %v2314 = vpop.f32.mrb[0].mxu0
  %v2315 = vpop.f32.mrb[0].mxu0
  %v2316 = vadd.f32 0.0, %v2315
  %v2317 = vpop.f32.mrb[0].mxu0
  %2318 = vmatprep.mubr.bf16.mxu0 0
  %2319 = vmatmul.mubr.bf16.gmra.mrb[0].mxu0 %v2271
  %v2320 = vpop.f32.mrb[0].mxu0
  %v2321 = vadd.f32 0.0, %v2320
  %v2322 = vpop.f32.mrb[0].mxu0
  %v2323 = vpop.f32.mrb[0].mxu0
  %v2324 = vadd.f32 0.0, %v2323
  %v2325 = vpop.f32.mrb[0].mxu0
  %2326 = vmatprep.mubr.bf16.mxu0 0
  %2327 = vmatmul.mubr.bf16.gmra.mrb[0].mxu0 %v2272
  %v2328 = vpop.f32.mrb[0].mxu0
  %v2329 = vadd.f32 0.0, %v2328
  %v2330 = vpop.f32.mrb[0].mxu0
  %v2331 = vpop.f32.mrb[0].mxu0
  %v2332 = vadd.f32 0.0, %v2331
  %v2333 = vpop.f32.mrb[0].mxu0
  %2334 = vmatprep.mubr.bf16.mxu0 0
  %2335 = vmatmul.mubr.bf16.gmra.mrb[0].mxu0 %v2273
  %v2336 = vpop.f32.mrb[0].mxu0
  %v2337 = vadd.f32 0.0, %v2336
  %v2338 = vpop.f32.mrb[0].mxu0
  %v2339 = vpop.f32.mrb[0].mxu0
  %v2340 = vadd.f32 0.0, %v2339
  %v2341 = vpop.f32.mrb[0].mxu0
  %2342 = vmatprep.mubr.bf16.mxu0 0
  %2343 = vmatmul.mubr.bf16.gmra.mrb[0].mxu0 %v2274
  %v2344 = vpop.f32.mrb[0].mxu0
  %v2345 = vadd.f32 0.0, %v2344
  %v2346 = vpop.f32.mrb[0].mxu0
  %v2347 = vpop.f32.mrb[0].mxu0
  %v2348 = vadd.f32 0.0, %v2347
  %v2349 = vpop.f32.mrb[0].mxu0
  %2350 = vmatprep.mubr.bf16.mxu0 0
  %2351 = vmatmul.mubr.bf16.gmra.mrb[0].mxu0 %v2275
  %v2352 = vpop.f32.mrb[0].mxu0
  %v2353 = vadd.f32 0.0, %v2352
  %v2354 = vpop.f32.mrb[0].mxu0
  %v2355 = vpop.f32.mrb[0].mxu0
  %v2356 = vadd.f32 0.0, %v2355
  %v2357 = vpop.f32.mrb[0].mxu0
  %2358 = vmatprep.mubr.bf16.mxu0 0
  %2359 = vmatmul.mubr.bf16.gmra.mrb[0].mxu0 %v2276
  %v2360 = vpop.f32.mrb[0].mxu0
  %v2361 = vadd.f32 0.0, %v2360
  %v2362 = vpop.f32.mrb[0].mxu0
  %v2363 = vpop.f32.mrb[0].mxu0
  %v2364 = vadd.f32 0.0, %v2363
  %v2365 = vpop.f32.mrb[0].mxu0
  %2366 = vmatprep.mubr.bf16.mxu0 0
  %2367 = vmatmul.mubr.bf16.gmra.mrb[0].mxu0 %v2277
  %v2368 = vpop.f32.mrb[0].mxu0
  %v2369 = vadd.f32 0.0, %v2368
  %v2370 = vpop.f32.mrb[0].mxu0
  %v2371 = vpop.f32.mrb[0].mxu0
  %v2372 = vadd.f32 0.0, %v2371
  %v2373 = vpop.f32.mrb[0].mxu0
  %2374 = vdwg.mxu0
  %2375 = vmatprep.subr.bf16.mxu0 0
  %2376 = vmatpush1.bf16.msra.mxu0 %v1960
  %2377 = vmatprep.subr.bf16.mxu0 0
  %2378 = vmatpush1.bf16.msra.mxu0 %v1961
  %2379 = vmatprep.subr.bf16.mxu0 0
  %2380 = vmatpush1.bf16.msra.mxu0 %v1962
  %2381 = vmatprep.subr.bf16.mxu0 0
  %2382 = vmatpush1.bf16.msra.mxu0 %v1963
  %2383 = vmatprep.subr.bf16.mxu0 0
  %2384 = vmatpush1.bf16.msra.mxu0 %v1964
  %2385 = vmatprep.subr.bf16.mxu0 0
  %2386 = vmatpush1.bf16.msra.mxu0 %v1965
  %2387 = vmatprep.subr.bf16.mxu0 0
  %2388 = vmatpush1.bf16.msra.mxu0 %v1966
  %2389 = vmatprep.subr.bf16.mxu0 0
  %2390 = vmatpush1.bf16.msra.mxu0 %v1967
  %2391 = vmatprep.subr.bf16.mxu0 0
  %2392 = vmatpush1.bf16.msra.mxu0 0
  %2393 = vmatprep.subr.bf16.mxu0 0
  %2394 = vmatpush1.bf16.msra.mxu0 0
  %2395 = vmatprep.subr.bf16.mxu0 0
  %2396 = vmatpush1.bf16.msra.mxu0 0
  %2397 = vmatprep.subr.bf16.mxu0 0
  %2398 = vmatpush1.bf16.msra.mxu0 0
  %2399 = vmatprep.subr.bf16.mxu0 0
  %2400 = vmatpush1.bf16.msra.mxu0 0
  %2401 = vmatprep.subr.bf16.mxu0 0
  %2402 = vmatpush1.bf16.msra.mxu0 0
  %2403 = vmatprep.subr.bf16.mxu0 0
  %2404 = vmatpush1.bf16.msra.mxu0 0
  %2405 = vmatprep.subr.bf16.mxu0 0
  %2406 = vmatpush1.bf16.msra.mxu0 0
  %2407 = vmatprep.mubr.bf16.mxu0 0
  %2408 = vmatmul.mubr.bf16.gmra.mrb[0].mxu0 %v1968
  %v2409 = vpop.f32.mrb[0].mxu0
  %v2410 = vadd.f32 %v2313, %v2409
  %v2411 = vpop.f32.mrb[0].mxu0
  %v2412 = vpop.f32.mrb[0].mxu0
  %v2413 = vadd.f32 %v2316, %v2412
  %v2414 = vpop.f32.mrb[0].mxu0
  %2415 = vmatprep.mubr.bf16.mxu0 0
  %2416 = vmatmul.mubr.bf16.gmra.mrb[0].mxu0 %v1969
  %v2417 = vpop.f32.mrb[0].mxu0
  %v2418 = vadd.f32 %v2321, %v2417
  %v2419 = vpop.f32.mrb[0].mxu0
  %v2420 = vpop.f32.mrb[0].mxu0
  %v2421 = vadd.f32 %v2324, %v2420
  %v2422 = vpop.f32.mrb[0].mxu0
  %2423 = vmatprep.mubr.bf16.mxu0 0
  %2424 = vmatmul.mubr.bf16.gmra.mrb[0].mxu0 %v1970
  %v2425 = vpop.f32.mrb[0].mxu0
  %v2426 = vadd.f32 %v2329, %v2425
  %v2427 = vpop.f32.mrb[0].mxu0
  %v2428 = vpop.f32.mrb[0].mxu0
  %v2429 = vadd.f32 %v2332, %v2428
  %v2430 = vpop.f32.mrb[0].mxu0
  %2431 = vmatprep.mubr.bf16.mxu0 0
  %2432 = vmatmul.mubr.bf16.gmra.mrb[0].mxu0 %v1971
  %v2433 = vpop.f32.mrb[0].mxu0
  %v2434 = vadd.f32 %v2337, %v2433
  %v2435 = vpop.f32.mrb[0].mxu0
  %v2436 = vpop.f32.mrb[0].mxu0
  %v2437 = vadd.f32 %v2340, %v2436
  %v2438 = vpop.f32.mrb[0].mxu0
  %2439 = vmatprep.mubr.bf16.mxu0 0
  %2440 = vmatmul.mubr.bf16.gmra.mrb[0].mxu0 %v1972
  %v2441 = vpop.f32.mrb[0].mxu0
  %v2442 = vadd.f32 %v2345, %v2441
  %v2443 = vpop.f32.mrb[0].mxu0
  %v2444 = vpop.f32.mrb[0].mxu0
  %v2445 = vadd.f32 %v2348, %v2444
  %v2446 = vpop.f32.mrb[0].mxu0
  %2447 = vmatprep.mubr.bf16.mxu0 0
  %2448 = vmatmul.mubr.bf16.gmra.mrb[0].mxu0 %v1973
  %v2449 = vpop.f32.mrb[0].mxu0
  %v2450 = vadd.f32 %v2353, %v2449
  %v2451 = vpop.f32.mrb[0].mxu0
  %v2452 = vpop.f32.mrb[0].mxu0
  %v2453 = vadd.f32 %v2356, %v2452
  %v2454 = vpop.f32.mrb[0].mxu0
  %2455 = vmatprep.mubr.bf16.mxu0 0
  %2456 = vmatmul.mubr.bf16.gmra.mrb[0].mxu0 %v1974
  %v2457 = vpop.f32.mrb[0].mxu0
  %v2458 = vadd.f32 %v2361, %v2457
  %v2459 = vpop.f32.mrb[0].mxu0
  %v2460 = vpop.f32.mrb[0].mxu0
  %v2461 = vadd.f32 %v2364, %v2460
  %v2462 = vpop.f32.mrb[0].mxu0
  %2463 = vmatprep.mubr.bf16.mxu0 0
  %2464 = vmatmul.mubr.bf16.gmra.mrb[0].mxu0 %v1975
  %v2465 = vpop.f32.mrb[0].mxu0
  %v2466 = vadd.f32 %v2369, %v2465
  %v2467 = vpop.f32.mrb[0].mxu0
  %v2468 = vpop.f32.mrb[0].mxu0
  %v2469 = vadd.f32 %v2372, %v2468
  %v2470 = vpop.f32.mrb[0].mxu0
  %2471 = vdwg.mxu0
  %v2472 = vld [vmem:[%s5 + $0x2] sm:$0x1]
  %v2473 = vlaneseq
  %v2474 = vshrl.u32 %v2473, 7
  %v2475 = vsub.s32 0, %v2474
  %v2476 = vrot.slane %v2472, %v2475
  %v2477 = vmul.f32 %v1602, %v2476
  %v2478 = vmul.f32 %v1603, %v2476
  %v2479 = vmul.f32 %v1604, %v2476
  %v2480 = vmul.f32 %v1605, %v2476
  %v2481 = vmul.f32 %v1606, %v2476
  %v2482 = vmul.f32 %v1607, %v2476
  %v2483 = vmul.f32 %v1608, %v2476
  %v2484 = vmul.f32 %v1609, %v2476
  %v2485 = vmul.f32 %v1610, %v2476
  %v2486 = vmul.f32 %v1611, %v2476
  %v2487 = vmul.f32 %v1612, %v2476
  %v2488 = vmul.f32 %v1613, %v2476
  %v2489 = vmul.f32 %v1614, %v2476
  %v2490 = vmul.f32 %v1615, %v2476
  %v2491 = vmul.f32 %v1616, %v2476
  %v2492 = vmul.f32 %v1617, %v2476
  %v2493 = vpack.c.bf16 %v2478, %v2477
  %v2494 = vpack.c.bf16 %v2480, %v2479
  %v2495 = vpack.c.bf16 %v2482, %v2481
  %v2496 = vpack.c.bf16 %v2484, %v2483
  %v2497 = vpack.c.bf16 %v2486, %v2485
  %v2498 = vpack.c.bf16 %v2488, %v2487
  %v2499 = vpack.c.bf16 %v2490, %v2489
  %v2500 = vpack.c.bf16 %v2492, %v2491
  %2501 = vmatprep.subr.bf16.mxu0 0
  %2502 = vmatpush1.bf16.msra.mxu0 %v1650
  %2503 = vmatprep.subr.bf16.mxu0 0
  %2504 = vmatpush1.bf16.msra.mxu0 %v1651
  %2505 = vmatprep.subr.bf16.mxu0 0
  %2506 = vmatpush1.bf16.msra.mxu0 %v1652
  %2507 = vmatprep.subr.bf16.mxu0 0
  %2508 = vmatpush1.bf16.msra.mxu0 %v1653
  %2509 = vmatprep.subr.bf16.mxu0 0
  %2510 = vmatpush1.bf16.msra.mxu0 %v1654
  %2511 = vmatprep.subr.bf16.mxu0 0
  %2512 = vmatpush1.bf16.msra.mxu0 %v1655
  %2513 = vmatprep.subr.bf16.mxu0 0
  %2514 = vmatpush1.bf16.msra.mxu0 %v1656
  %2515 = vmatprep.subr.bf16.mxu0 0
  %2516 = vmatpush1.bf16.msra.mxu0 %v1657
  %2517 = vmatprep.subr.bf16.mxu0 0
  %2518 = vmatpush1.bf16.msra.mxu0 0
  %2519 = vmatprep.subr.bf16.mxu0 0
  %2520 = vmatpush1.bf16.msra.mxu0 0
  %2521 = vmatprep.subr.bf16.mxu0 0
  %2522 = vmatpush1.bf16.msra.mxu0 0
  %2523 = vmatprep.subr.bf16.mxu0 0
  %2524 = vmatpush1.bf16.msra.mxu0 0
  %2525 = vmatprep.subr.bf16.mxu0 0
  %2526 = vmatpush1.bf16.msra.mxu0 0
  %2527 = vmatprep.subr.bf16.mxu0 0
  %2528 = vmatpush1.bf16.msra.mxu0 0
  %2529 = vmatprep.subr.bf16.mxu0 0
  %2530 = vmatpush1.bf16.msra.mxu0 0
  %2531 = vmatprep.subr.bf16.mxu0 0
  %2532 = vmatpush1.bf16.msra.mxu0 0
  %2533 = vmatprep.mubr.bf16.mxu0 0
  %2534 = vmatmul.mubr.bf16.gmra.mrb[0].mxu0 %v2493
  %v2535 = vpop.f32.mrb[0].mxu0
  %v2536 = vadd.f32 %v1658, %v2535
  %v2537 = vpop.f32.mrb[0].mxu0
  %v2538 = vpop.f32.mrb[0].mxu0
  %v2539 = vadd.f32 %v1659, %v2538
  %v2540 = vpop.f32.mrb[0].mxu0
  %2541 = vmatprep.mubr.bf16.mxu0 0
  %2542 = vmatmul.mubr.bf16.gmra.mrb[0].mxu0 %v2494
  %v2543 = vpop.f32.mrb[0].mxu0
  %v2544 = vadd.f32 %v1660, %v2543
  %v2545 = vpop.f32.mrb[0].mxu0
  %v2546 = vpop.f32.mrb[0].mxu0
  %v2547 = vadd.f32 %v1661, %v2546
  %v2548 = vpop.f32.mrb[0].mxu0
  %2549 = vmatprep.mubr.bf16.mxu0 0
  %2550 = vmatmul.mubr.bf16.gmra.mrb[0].mxu0 %v2495
  %v2551 = vpop.f32.mrb[0].mxu0
  %v2552 = vadd.f32 %v1662, %v2551
  %v2553 = vpop.f32.mrb[0].mxu0
  %v2554 = vpop.f32.mrb[0].mxu0
  %v2555 = vadd.f32 %v1663, %v2554
  %v2556 = vpop.f32.mrb[0].mxu0
  %2557 = vmatprep.mubr.bf16.mxu0 0
  %2558 = vmatmul.mubr.bf16.gmra.mrb[0].mxu0 %v2496
  %v2559 = vpop.f32.mrb[0].mxu0
  %v2560 = vadd.f32 %v1664, %v2559
  %v2561 = vpop.f32.mrb[0].mxu0
  %v2562 = vpop.f32.mrb[0].mxu0
  %v2563 = vadd.f32 %v1665, %v2562
  %v2564 = vpop.f32.mrb[0].mxu0
  %2565 = vmatprep.mubr.bf16.mxu0 0
  %2566 = vmatmul.mubr.bf16.gmra.mrb[0].mxu0 %v2497
  %v2567 = vpop.f32.mrb[0].mxu0
  %v2568 = vadd.f32 %v1666, %v2567
  %v2569 = vpop.f32.mrb[0].mxu0
  %v2570 = vpop.f32.mrb[0].mxu0
  %v2571 = vadd.f32 %v1667, %v2570
  %v2572 = vpop.f32.mrb[0].mxu0
  %2573 = vmatprep.mubr.bf16.mxu0 0
  %2574 = vmatmul.mubr.bf16.gmra.mrb[0].mxu0 %v2498
  %v2575 = vpop.f32.mrb[0].mxu0
  %v2576 = vadd.f32 %v1668, %v2575
  %v2577 = vpop.f32.mrb[0].mxu0
  %v2578 = vpop.f32.mrb[0].mxu0
  %v2579 = vadd.f32 %v1669, %v2578
  %v2580 = vpop.f32.mrb[0].mxu0
  %2581 = vmatprep.mubr.bf16.mxu0 0
  %2582 = vmatmul.mubr.bf16.gmra.mrb[0].mxu0 %v2499
  %v2583 = vpop.f32.mrb[0].mxu0
  %v2584 = vadd.f32 %v1670, %v2583
  %v2585 = vpop.f32.mrb[0].mxu0
  %v2586 = vpop.f32.mrb[0].mxu0
  %v2587 = vadd.f32 %v1671, %v2586
  %v2588 = vpop.f32.mrb[0].mxu0
  %2589 = vmatprep.mubr.bf16.mxu0 0
  %2590 = vmatmul.mubr.bf16.gmra.mrb[0].mxu0 %v2500
  %v2591 = vpop.f32.mrb[0].mxu0
  %v2592 = vadd.f32 %v1672, %v2591
  %v2593 = vpop.f32.mrb[0].mxu0
  %v2594 = vpop.f32.mrb[0].mxu0
  %v2595 = vadd.f32 %v1673, %v2594
  %v2596 = vpop.f32.mrb[0].mxu0
  %2597 = vdwg.mxu0
  %2598 = vmax.xlane.f32.xlu0 %v2536
  %v2599 = vpop.xlane.xlu0 %2598
  %2600 = vmax.xlane.f32.xlu0 %v2539
  %v2601 = vpop.xlane.xlu0 %2600
  %2602 = vmax.xlane.f32.xlu0 %v2544
  %v2603 = vpop.xlane.xlu0 %2602
  %2604 = vmax.xlane.f32.xlu0 %v2547
  %v2605 = vpop.xlane.xlu0 %2604
  %2606 = vmax.xlane.f32.xlu0 %v2552
  %v2607 = vpop.xlane.xlu0 %2606
  %2608 = vmax.xlane.f32.xlu0 %v2555
  %v2609 = vpop.xlane.xlu0 %2608
  %2610 = vmax.xlane.f32.xlu0 %v2560
  %v2611 = vpop.xlane.xlu0 %2610
  %2612 = vmax.xlane.f32.xlu0 %v2563
  %v2613 = vpop.xlane.xlu0 %2612
  %2614 = vmax.xlane.f32.xlu0 %v2568
  %v2615 = vpop.xlane.xlu0 %2614
  %2616 = vmax.xlane.f32.xlu0 %v2571
  %v2617 = vpop.xlane.xlu0 %2616
  %2618 = vmax.xlane.f32.xlu0 %v2576
  %v2619 = vpop.xlane.xlu0 %2618
  %2620 = vmax.xlane.f32.xlu0 %v2579
  %v2621 = vpop.xlane.xlu0 %2620
  %2622 = vmax.xlane.f32.xlu0 %v2584
  %v2623 = vpop.xlane.xlu0 %2622
  %2624 = vmax.xlane.f32.xlu0 %v2587
  %v2625 = vpop.xlane.xlu0 %2624
  %2626 = vmax.xlane.f32.xlu0 %v2592
  %v2627 = vpop.xlane.xlu0 %2626
  %2628 = vmax.xlane.f32.xlu0 %v2595
  %v2629 = vpop.xlane.xlu0 %2628
  %v2630 = vsub.f32 %v2536, %v2599
  %v2631 = vsub.f32 %v2539, %v2601
  %v2632 = vsub.f32 %v2544, %v2603
  %v2633 = vsub.f32 %v2547, %v2605
  %v2634 = vsub.f32 %v2552, %v2607
  %v2635 = vsub.f32 %v2555, %v2609
  %v2636 = vsub.f32 %v2560, %v2611
  %v2637 = vsub.f32 %v2563, %v2613
  %v2638 = vsub.f32 %v2568, %v2615
  %v2639 = vsub.f32 %v2571, %v2617
  %v2640 = vsub.f32 %v2576, %v2619
  %v2641 = vsub.f32 %v2579, %v2621
  %v2642 = vsub.f32 %v2584, %v2623
  %v2643 = vsub.f32 %v2587, %v2625
  %v2644 = vsub.f32 %v2592, %v2627
  %v2645 = vsub.f32 %v2595, %v2629
  %v2646 = vmul.f32 %v2630, 1.442695
  %v2647 = vpow.pop %v2646
  %v2648 = vmul.f32 %v2631, 1.442695
  %v2649 = vpow.pop %v2648
  %v2650 = vmul.f32 %v2632, 1.442695
  %v2651 = vpow.pop %v2650
  %v2652 = vmul.f32 %v2633, 1.442695
  %v2653 = vpow.pop %v2652
  %v2654 = vmul.f32 %v2634, 1.442695
  %v2655 = vpow.pop %v2654
  %v2656 = vmul.f32 %v2635, 1.442695
  %v2657 = vpow.pop %v2656
  %v2658 = vmul.f32 %v2636, 1.442695
  %v2659 = vpow.pop %v2658
  %v2660 = vmul.f32 %v2637, 1.442695
  %v2661 = vpow.pop %v2660
  %v2662 = vmul.f32 %v2638, 1.442695
  %v2663 = vpow.pop %v2662
  %v2664 = vmul.f32 %v2639, 1.442695
  %v2665 = vpow.pop %v2664
  %v2666 = vmul.f32 %v2640, 1.442695
  %v2667 = vpow.pop %v2666
  %v2668 = vmul.f32 %v2641, 1.442695
  %v2669 = vpow.pop %v2668
  %v2670 = vmul.f32 %v2642, 1.442695
  %v2671 = vpow.pop %v2670
  %v2672 = vmul.f32 %v2643, 1.442695
  %v2673 = vpow.pop %v2672
  %v2674 = vmul.f32 %v2644, 1.442695
  %v2675 = vpow.pop %v2674
  %v2676 = vmul.f32 %v2645, 1.442695
  %v2677 = vpow.pop %v2676
  %2678 = vadd.xlane.f32.xlu0 %v2647
  %v2679 = vpop.xlane.xlu0 %2678
  %2680 = vadd.xlane.f32.xlu0 %v2649
  %v2681 = vpop.xlane.xlu0 %2680
  %2682 = vadd.xlane.f32.xlu0 %v2651
  %v2683 = vpop.xlane.xlu0 %2682
  %2684 = vadd.xlane.f32.xlu0 %v2653
  %v2685 = vpop.xlane.xlu0 %2684
  %2686 = vadd.xlane.f32.xlu0 %v2655
  %v2687 = vpop.xlane.xlu0 %2686
  %2688 = vadd.xlane.f32.xlu0 %v2657
  %v2689 = vpop.xlane.xlu0 %2688
  %2690 = vadd.xlane.f32.xlu0 %v2659
  %v2691 = vpop.xlane.xlu0 %2690
  %2692 = vadd.xlane.f32.xlu0 %v2661
  %v2693 = vpop.xlane.xlu0 %2692
  %2694 = vadd.xlane.f32.xlu0 %v2663
  %v2695 = vpop.xlane.xlu0 %2694
  %2696 = vadd.xlane.f32.xlu0 %v2665
  %v2697 = vpop.xlane.xlu0 %2696
  %2698 = vadd.xlane.f32.xlu0 %v2667
  %v2699 = vpop.xlane.xlu0 %2698
  %2700 = vadd.xlane.f32.xlu0 %v2669
  %v2701 = vpop.xlane.xlu0 %2700
  %2702 = vadd.xlane.f32.xlu0 %v2671
  %v2703 = vpop.xlane.xlu0 %2702
  %2704 = vadd.xlane.f32.xlu0 %v2673
  %v2705 = vpop.xlane.xlu0 %2704
  %2706 = vadd.xlane.f32.xlu0 %v2675
  %v2707 = vpop.xlane.xlu0 %2706
  %2708 = vadd.xlane.f32.xlu0 %v2677
  %v2709 = vpop.xlane.xlu0 %2708
  %v2710 = vrcp.pop %v2679
  %v2711 = vrcp.pop %v2681
  %v2712 = vrcp.pop %v2683
  %v2713 = vrcp.pop %v2685
  %v2714 = vrcp.pop %v2687
  %v2715 = vrcp.pop %v2689
  %v2716 = vrcp.pop %v2691
  %v2717 = vrcp.pop %v2693
  %v2718 = vrcp.pop %v2695
  %v2719 = vrcp.pop %v2697
  %v2720 = vrcp.pop %v2699
  %v2721 = vrcp.pop %v2701
  %v2722 = vrcp.pop %v2703
  %v2723 = vrcp.pop %v2705
  %v2724 = vrcp.pop %v2707
  %v2725 = vrcp.pop %v2709
  %v2726 = vmul.f32 %v2647, %v2710
  %v2727 = vmul.f32 %v2649, %v2711
  %v2728 = vmul.f32 %v2651, %v2712
  %v2729 = vmul.f32 %v2653, %v2713
  %v2730 = vmul.f32 %v2655, %v2714
  %v2731 = vmul.f32 %v2657, %v2715
  %v2732 = vmul.f32 %v2659, %v2716
  %v2733 = vmul.f32 %v2661, %v2717
  %v2734 = vmul.f32 %v2663, %v2718
  %v2735 = vmul.f32 %v2665, %v2719
  %v2736 = vmul.f32 %v2667, %v2720
  %v2737 = vmul.f32 %v2669, %v2721
  %v2738 = vmul.f32 %v2671, %v2722
  %v2739 = vmul.f32 %v2673, %v2723
  %v2740 = vmul.f32 %v2675, %v2724
  %v2741 = vmul.f32 %v2677, %v2725
  %v2742 = vmul.f32 %v1540, %v2476
  %v2743 = vmul.f32 %v1543, %v2476
  %v2744 = vmul.f32 %v1548, %v2476
  %v2745 = vmul.f32 %v1551, %v2476
  %v2746 = vmul.f32 %v1556, %v2476
  %v2747 = vmul.f32 %v1559, %v2476
  %v2748 = vmul.f32 %v1564, %v2476
  %v2749 = vmul.f32 %v1567, %v2476
  %v2750 = vmul.f32 %v1572, %v2476
  %v2751 = vmul.f32 %v1575, %v2476
  %v2752 = vmul.f32 %v1580, %v2476
  %v2753 = vmul.f32 %v1583, %v2476
  %v2754 = vmul.f32 %v1588, %v2476
  %v2755 = vmul.f32 %v1591, %v2476
  %v2756 = vmul.f32 %v1596, %v2476
  %v2757 = vmul.f32 %v1599, %v2476
  %v2758 = vpack.c.bf16 %v2743, %v2742
  %v2759 = vpack.c.bf16 %v2745, %v2744
  %v2760 = vpack.c.bf16 %v2747, %v2746
  %v2761 = vpack.c.bf16 %v2749, %v2748
  %v2762 = vpack.c.bf16 %v2751, %v2750
  %v2763 = vpack.c.bf16 %v2753, %v2752
  %v2764 = vpack.c.bf16 %v2755, %v2754
  %v2765 = vpack.c.bf16 %v2757, %v2756
  %v2766 = vpack.c.bf16 %v2727, %v2726
  %v2767 = vpack.c.bf16 %v2729, %v2728
  %v2768 = vpack.c.bf16 %v2731, %v2730
  %v2769 = vpack.c.bf16 %v2733, %v2732
  %v2770 = vpack.c.bf16 %v2735, %v2734
  %v2771 = vpack.c.bf16 %v2737, %v2736
  %v2772 = vpack.c.bf16 %v2739, %v2738
  %v2773 = vpack.c.bf16 %v2741, %v2740
  %2774 = vmatprep.subr.bf16.mxu0 0
  %2775 = vmatpush1.bf16.msra.mxu0 %v2758
  %2776 = vmatprep.subr.bf16.mxu0 0
  %2777 = vmatpush1.bf16.msra.mxu0 %v2759
  %2778 = vmatprep.subr.bf16.mxu0 0
  %2779 = vmatpush1.bf16.msra.mxu0 %v2760
  %2780 = vmatprep.subr.bf16.mxu0 0
  %2781 = vmatpush1.bf16.msra.mxu0 %v2761
  %2782 = vmatprep.subr.bf16.mxu0 0
  %2783 = vmatpush1.bf16.msra.mxu0 %v2762
  %2784 = vmatprep.subr.bf16.mxu0 0
  %2785 = vmatpush1.bf16.msra.mxu0 %v2763
  %2786 = vmatprep.subr.bf16.mxu0 0
  %2787 = vmatpush1.bf16.msra.mxu0 %v2764
  %2788 = vmatprep.subr.bf16.mxu0 0
  %2789 = vmatpush1.bf16.msra.mxu0 %v2765
  %2790 = vmatprep.subr.bf16.mxu0 0
  %2791 = vmatpush1.bf16.msra.mxu0 0
  %2792 = vmatprep.subr.bf16.mxu0 0
  %2793 = vmatpush1.bf16.msra.mxu0 0
  %2794 = vmatprep.subr.bf16.mxu0 0
  %2795 = vmatpush1.bf16.msra.mxu0 0
  %2796 = vmatprep.subr.bf16.mxu0 0
  %2797 = vmatpush1.bf16.msra.mxu0 0
  %2798 = vmatprep.subr.bf16.mxu0 0
  %2799 = vmatpush1.bf16.msra.mxu0 0
  %2800 = vmatprep.subr.bf16.mxu0 0
  %2801 = vmatpush1.bf16.msra.mxu0 0
  %2802 = vmatprep.subr.bf16.mxu0 0
  %2803 = vmatpush1.bf16.msra.mxu0 0
  %2804 = vmatprep.subr.bf16.mxu0 0
  %2805 = vmatpush1.bf16.msra.mxu0 0
  %2806 = vmatprep.mubr.bf16.mxu0 0
  %2807 = vmatmul.mubr.bf16.gmra.mrb[0].mxu0 %v2766
  %v2808 = vpop.f32.mrb[0].mxu0
  %v2809 = vadd.f32 0.0, %v2808
  %v2810 = vpop.f32.mrb[0].mxu0
  %v2811 = vpop.f32.mrb[0].mxu0
  %v2812 = vadd.f32 0.0, %v2811
  %v2813 = vpop.f32.mrb[0].mxu0
  %2814 = vmatprep.mubr.bf16.mxu0 0
  %2815 = vmatmul.mubr.bf16.gmra.mrb[0].mxu0 %v2767
  %v2816 = vpop.f32.mrb[0].mxu0
  %v2817 = vadd.f32 0.0, %v2816
  %v2818 = vpop.f32.mrb[0].mxu0
  %v2819 = vpop.f32.mrb[0].mxu0
  %v2820 = vadd.f32 0.0, %v2819
  %v2821 = vpop.f32.mrb[0].mxu0
  %2822 = vmatprep.mubr.bf16.mxu0 0
  %2823 = vmatmul.mubr.bf16.gmra.mrb[0].mxu0 %v2768
  %v2824 = vpop.f32.mrb[0].mxu0
  %v2825 = vadd.f32 0.0, %v2824
  %v2826 = vpop.f32.mrb[0].mxu0
  %v2827 = vpop.f32.mrb[0].mxu0
  %v2828 = vadd.f32 0.0, %v2827
  %v2829 = vpop.f32.mrb[0].mxu0
  %2830 = vmatprep.mubr.bf16.mxu0 0
  %2831 = vmatmul.mubr.bf16.gmra.mrb[0].mxu0 %v2769
  %v2832 = vpop.f32.mrb[0].mxu0
  %v2833 = vadd.f32 0.0, %v2832
  %v2834 = vpop.f32.mrb[0].mxu0
  %v2835 = vpop.f32.mrb[0].mxu0
  %v2836 = vadd.f32 0.0, %v2835
  %v2837 = vpop.f32.mrb[0].mxu0
  %2838 = vmatprep.mubr.bf16.mxu0 0
  %2839 = vmatmul.mubr.bf16.gmra.mrb[0].mxu0 %v2770
  %v2840 = vpop.f32.mrb[0].mxu0
  %v2841 = vadd.f32 0.0, %v2840
  %v2842 = vpop.f32.mrb[0].mxu0
  %v2843 = vpop.f32.mrb[0].mxu0
  %v2844 = vadd.f32 0.0, %v2843
  %v2845 = vpop.f32.mrb[0].mxu0
  %2846 = vmatprep.mubr.bf16.mxu0 0
  %2847 = vmatmul.mubr.bf16.gmra.mrb[0].mxu0 %v2771
  %v2848 = vpop.f32.mrb[0].mxu0
  %v2849 = vadd.f32 0.0, %v2848
  %v2850 = vpop.f32.mrb[0].mxu0
  %v2851 = vpop.f32.mrb[0].mxu0
  %v2852 = vadd.f32 0.0, %v2851
  %v2853 = vpop.f32.mrb[0].mxu0
  %2854 = vmatprep.mubr.bf16.mxu0 0
  %2855 = vmatmul.mubr.bf16.gmra.mrb[0].mxu0 %v2772
  %v2856 = vpop.f32.mrb[0].mxu0
  %v2857 = vadd.f32 0.0, %v2856
  %v2858 = vpop.f32.mrb[0].mxu0
  %v2859 = vpop.f32.mrb[0].mxu0
  %v2860 = vadd.f32 0.0, %v2859
  %v2861 = vpop.f32.mrb[0].mxu0
  %2862 = vmatprep.mubr.bf16.mxu0 0
  %2863 = vmatmul.mubr.bf16.gmra.mrb[0].mxu0 %v2773
  %v2864 = vpop.f32.mrb[0].mxu0
  %v2865 = vadd.f32 0.0, %v2864
  %v2866 = vpop.f32.mrb[0].mxu0
  %v2867 = vpop.f32.mrb[0].mxu0
  %v2868 = vadd.f32 0.0, %v2867
  %v2869 = vpop.f32.mrb[0].mxu0
  %2870 = vdwg.mxu0
  %v2871 = vadd.f32 %v2410, %v2809
  %v2872 = vadd.f32 %v2413, %v2812
  %v2873 = vadd.f32 %v2418, %v2817
  %v2874 = vadd.f32 %v2421, %v2820
  %v2875 = vadd.f32 %v2426, %v2825
  %v2876 = vadd.f32 %v2429, %v2828
  %v2877 = vadd.f32 %v2434, %v2833
  %v2878 = vadd.f32 %v2437, %v2836
  %v2879 = vadd.f32 %v2442, %v2841
  %v2880 = vadd.f32 %v2445, %v2844
  %v2881 = vadd.f32 %v2450, %v2849
  %v2882 = vadd.f32 %v2453, %v2852
  %v2883 = vadd.f32 %v2458, %v2857
  %v2884 = vadd.f32 %v2461, %v2860
  %v2885 = vadd.f32 %v2466, %v2865
  %v2886 = vadd.f32 %v2469, %v2868
  %v2887 = vld [vmem:[%s5 + $0x3] sm:$0x1]
  %v2888 = vlaneseq
  %v2889 = vshrl.u32 %v2888, 7
  %v2890 = vsub.s32 0, %v2889
  %v2891 = vrot.slane %v2887, %v2890
  %v2892 = vmul.f32 %v1602, %v2891
  %v2893 = vmul.f32 %v1603, %v2891
  %v2894 = vmul.f32 %v1604, %v2891
  %v2895 = vmul.f32 %v1605, %v2891
  %v2896 = vmul.f32 %v1606, %v2891
  %v2897 = vmul.f32 %v1607, %v2891
  %v2898 = vmul.f32 %v1608, %v2891
  %v2899 = vmul.f32 %v1609, %v2891
  %v2900 = vmul.f32 %v1610, %v2891
  %v2901 = vmul.f32 %v1611, %v2891
  %v2902 = vmul.f32 %v1612, %v2891
  %v2903 = vmul.f32 %v1613, %v2891
  %v2904 = vmul.f32 %v1614, %v2891
  %v2905 = vmul.f32 %v1615, %v2891
  %v2906 = vmul.f32 %v1616, %v2891
  %v2907 = vmul.f32 %v1617, %v2891
  %v2908 = vpack.c.bf16 %v2893, %v2892
  %v2909 = vpack.c.bf16 %v2895, %v2894
  %v2910 = vpack.c.bf16 %v2897, %v2896
  %v2911 = vpack.c.bf16 %v2899, %v2898
  %v2912 = vpack.c.bf16 %v2901, %v2900
  %v2913 = vpack.c.bf16 %v2903, %v2902
  %v2914 = vpack.c.bf16 %v2905, %v2904
  %v2915 = vpack.c.bf16 %v2907, %v2906
  %2916 = vmatprep.subr.bf16.mxu0 0
  %2917 = vmatpush1.bf16.msra.mxu0 %v1650
  %2918 = vmatprep.subr.bf16.mxu0 0
  %2919 = vmatpush1.bf16.msra.mxu0 %v1651
  %2920 = vmatprep.subr.bf16.mxu0 0
  %2921 = vmatpush1.bf16.msra.mxu0 %v1652
  %2922 = vmatprep.subr.bf16.mxu0 0
  %2923 = vmatpush1.bf16.msra.mxu0 %v1653
  %2924 = vmatprep.subr.bf16.mxu0 0
  %2925 = vmatpush1.bf16.msra.mxu0 %v1654
  %2926 = vmatprep.subr.bf16.mxu0 0
  %2927 = vmatpush1.bf16.msra.mxu0 %v1655
  %2928 = vmatprep.subr.bf16.mxu0 0
  %2929 = vmatpush1.bf16.msra.mxu0 %v1656
  %2930 = vmatprep.subr.bf16.mxu0 0
  %2931 = vmatpush1.bf16.msra.mxu0 %v1657
  %2932 = vmatprep.subr.bf16.mxu0 0
  %2933 = vmatpush1.bf16.msra.mxu0 0
  %2934 = vmatprep.subr.bf16.mxu0 0
  %2935 = vmatpush1.bf16.msra.mxu0 0
  %2936 = vmatprep.subr.bf16.mxu0 0
  %2937 = vmatpush1.bf16.msra.mxu0 0
  %2938 = vmatprep.subr.bf16.mxu0 0
  %2939 = vmatpush1.bf16.msra.mxu0 0
  %2940 = vmatprep.subr.bf16.mxu0 0
  %2941 = vmatpush1.bf16.msra.mxu0 0
  %2942 = vmatprep.subr.bf16.mxu0 0
  %2943 = vmatpush1.bf16.msra.mxu0 0
  %2944 = vmatprep.subr.bf16.mxu0 0
  %2945 = vmatpush1.bf16.msra.mxu0 0
  %2946 = vmatprep.subr.bf16.mxu0 0
  %2947 = vmatpush1.bf16.msra.mxu0 0
  %2948 = vmatprep.mubr.bf16.mxu0 0
  %2949 = vmatmul.mubr.bf16.gmra.mrb[0].mxu0 %v2908
  %v2950 = vpop.f32.mrb[0].mxu0
  %v2951 = vadd.f32 %v1658, %v2950
  %v2952 = vpop.f32.mrb[0].mxu0
  %v2953 = vpop.f32.mrb[0].mxu0
  %v2954 = vadd.f32 %v1659, %v2953
  %v2955 = vpop.f32.mrb[0].mxu0
  %2956 = vmatprep.mubr.bf16.mxu0 0
  %2957 = vmatmul.mubr.bf16.gmra.mrb[0].mxu0 %v2909
  %v2958 = vpop.f32.mrb[0].mxu0
  %v2959 = vadd.f32 %v1660, %v2958
  %v2960 = vpop.f32.mrb[0].mxu0
  %v2961 = vpop.f32.mrb[0].mxu0
  %v2962 = vadd.f32 %v1661, %v2961
  %v2963 = vpop.f32.mrb[0].mxu0
  %2964 = vmatprep.mubr.bf16.mxu0 0
  %2965 = vmatmul.mubr.bf16.gmra.mrb[0].mxu0 %v2910
  %v2966 = vpop.f32.mrb[0].mxu0
  %v2967 = vadd.f32 %v1662, %v2966
  %v2968 = vpop.f32.mrb[0].mxu0
  %v2969 = vpop.f32.mrb[0].mxu0
  %v2970 = vadd.f32 %v1663, %v2969
  %v2971 = vpop.f32.mrb[0].mxu0
  %2972 = vmatprep.mubr.bf16.mxu0 0
  %2973 = vmatmul.mubr.bf16.gmra.mrb[0].mxu0 %v2911
  %v2974 = vpop.f32.mrb[0].mxu0
  %v2975 = vadd.f32 %v1664, %v2974
  %v2976 = vpop.f32.mrb[0].mxu0
  %v2977 = vpop.f32.mrb[0].mxu0
  %v2978 = vadd.f32 %v1665, %v2977
  %v2979 = vpop.f32.mrb[0].mxu0
  %2980 = vmatprep.mubr.bf16.mxu0 0
  %2981 = vmatmul.mubr.bf16.gmra.mrb[0].mxu0 %v2912
  %v2982 = vpop.f32.mrb[0].mxu0
  %v2983 = vadd.f32 %v1666, %v2982
  %v2984 = vpop.f32.mrb[0].mxu0
  %v2985 = vpop.f32.mrb[0].mxu0
  %v2986 = vadd.f32 %v1667, %v2985
  %v2987 = vpop.f32.mrb[0].mxu0
  %2988 = vmatprep.mubr.bf16.mxu0 0
  %2989 = vmatmul.mubr.bf16.gmra.mrb[0].mxu0 %v2913
  %v2990 = vpop.f32.mrb[0].mxu0
  %v2991 = vadd.f32 %v1668, %v2990
  %v2992 = vpop.f32.mrb[0].mxu0
  %v2993 = vpop.f32.mrb[0].mxu0
  %v2994 = vadd.f32 %v1669, %v2993
  %v2995 = vpop.f32.mrb[0].mxu0
  %2996 = vmatprep.mubr.bf16.mxu0 0
  %2997 = vmatmul.mubr.bf16.gmra.mrb[0].mxu0 %v2914
  %v2998 = vpop.f32.mrb[0].mxu0
  %v2999 = vadd.f32 %v1670, %v2998
  %v3000 = vpop.f32.mrb[0].mxu0
  %v3001 = vpop.f32.mrb[0].mxu0
  %v3002 = vadd.f32 %v1671, %v3001
  %v3003 = vpop.f32.mrb[0].mxu0
  %3004 = vmatprep.mubr.bf16.mxu0 0
  %3005 = vmatmul.mubr.bf16.gmra.mrb[0].mxu0 %v2915
  %v3006 = vpop.f32.mrb[0].mxu0
  %v3007 = vadd.f32 %v1672, %v3006
  %v3008 = vpop.f32.mrb[0].mxu0
  %v3009 = vpop.f32.mrb[0].mxu0
  %v3010 = vadd.f32 %v1673, %v3009
  %v3011 = vpop.f32.mrb[0].mxu0
  %3012 = vdwg.mxu0
  %3013 = vmax.xlane.f32.xlu0 %v2951
  %v3014 = vpop.xlane.xlu0 %3013
  %3015 = vmax.xlane.f32.xlu0 %v2954
  %v3016 = vpop.xlane.xlu0 %3015
  %3017 = vmax.xlane.f32.xlu0 %v2959
  %v3018 = vpop.xlane.xlu0 %3017
  %3019 = vmax.xlane.f32.xlu0 %v2962
  %v3020 = vpop.xlane.xlu0 %3019
  %3021 = vmax.xlane.f32.xlu0 %v2967
  %v3022 = vpop.xlane.xlu0 %3021
  %3023 = vmax.xlane.f32.xlu0 %v2970
  %v3024 = vpop.xlane.xlu0 %3023
  %3025 = vmax.xlane.f32.xlu0 %v2975
  %v3026 = vpop.xlane.xlu0 %3025
  %3027 = vmax.xlane.f32.xlu0 %v2978
  %v3028 = vpop.xlane.xlu0 %3027
  %3029 = vmax.xlane.f32.xlu0 %v2983
  %v3030 = vpop.xlane.xlu0 %3029
  %3031 = vmax.xlane.f32.xlu0 %v2986
  %v3032 = vpop.xlane.xlu0 %3031
  %3033 = vmax.xlane.f32.xlu0 %v2991
  %v3034 = vpop.xlane.xlu0 %3033
  %3035 = vmax.xlane.f32.xlu0 %v2994
  %v3036 = vpop.xlane.xlu0 %3035
  %3037 = vmax.xlane.f32.xlu0 %v2999
  %v3038 = vpop.xlane.xlu0 %3037
  %3039 = vmax.xlane.f32.xlu0 %v3002
  %v3040 = vpop.xlane.xlu0 %3039
  %3041 = vmax.xlane.f32.xlu0 %v3007
  %v3042 = vpop.xlane.xlu0 %3041
  %3043 = vmax.xlane.f32.xlu0 %v3010
  %v3044 = vpop.xlane.xlu0 %3043
  %v3045 = vsub.f32 %v2951, %v3014
  %v3046 = vsub.f32 %v2954, %v3016
  %v3047 = vsub.f32 %v2959, %v3018
  %v3048 = vsub.f32 %v2962, %v3020
  %v3049 = vsub.f32 %v2967, %v3022
  %v3050 = vsub.f32 %v2970, %v3024
  %v3051 = vsub.f32 %v2975, %v3026
  %v3052 = vsub.f32 %v2978, %v3028
  %v3053 = vsub.f32 %v2983, %v3030
  %v3054 = vsub.f32 %v2986, %v3032
  %v3055 = vsub.f32 %v2991, %v3034
  %v3056 = vsub.f32 %v2994, %v3036
  %v3057 = vsub.f32 %v2999, %v3038
  %v3058 = vsub.f32 %v3002, %v3040
  %v3059 = vsub.f32 %v3007, %v3042
  %v3060 = vsub.f32 %v3010, %v3044
  %v3061 = vmul.f32 %v3045, 1.442695
  %v3062 = vpow.pop %v3061
  %v3063 = vmul.f32 %v3046, 1.442695
  %v3064 = vpow.pop %v3063
  %v3065 = vmul.f32 %v3047, 1.442695
  %v3066 = vpow.pop %v3065
  %v3067 = vmul.f32 %v3048, 1.442695
  %v3068 = vpow.pop %v3067
  %v3069 = vmul.f32 %v3049, 1.442695
  %v3070 = vpow.pop %v3069
  %v3071 = vmul.f32 %v3050, 1.442695
  %v3072 = vpow.pop %v3071
  %v3073 = vmul.f32 %v3051, 1.442695
  %v3074 = vpow.pop %v3073
  %v3075 = vmul.f32 %v3052, 1.442695
  %v3076 = vpow.pop %v3075
  %v3077 = vmul.f32 %v3053, 1.442695
  %v3078 = vpow.pop %v3077
  %v3079 = vmul.f32 %v3054, 1.442695
  %v3080 = vpow.pop %v3079
  %v3081 = vmul.f32 %v3055, 1.442695
  %v3082 = vpow.pop %v3081
  %v3083 = vmul.f32 %v3056, 1.442695
  %v3084 = vpow.pop %v3083
  %v3085 = vmul.f32 %v3057, 1.442695
  %v3086 = vpow.pop %v3085
  %v3087 = vmul.f32 %v3058, 1.442695
  %v3088 = vpow.pop %v3087
  %v3089 = vmul.f32 %v3059, 1.442695
  %v3090 = vpow.pop %v3089
  %v3091 = vmul.f32 %v3060, 1.442695
  %v3092 = vpow.pop %v3091
  %3093 = vadd.xlane.f32.xlu0 %v3062
  %v3094 = vpop.xlane.xlu0 %3093
  %3095 = vadd.xlane.f32.xlu0 %v3064
  %v3096 = vpop.xlane.xlu0 %3095
  %3097 = vadd.xlane.f32.xlu0 %v3066
  %v3098 = vpop.xlane.xlu0 %3097
  %3099 = vadd.xlane.f32.xlu0 %v3068
  %v3100 = vpop.xlane.xlu0 %3099
  %3101 = vadd.xlane.f32.xlu0 %v3070
  %v3102 = vpop.xlane.xlu0 %3101
  %3103 = vadd.xlane.f32.xlu0 %v3072
  %v3104 = vpop.xlane.xlu0 %3103
  %3105 = vadd.xlane.f32.xlu0 %v3074
  %v3106 = vpop.xlane.xlu0 %3105
  %3107 = vadd.xlane.f32.xlu0 %v3076
  %v3108 = vpop.xlane.xlu0 %3107
  %3109 = vadd.xlane.f32.xlu0 %v3078
  %v3110 = vpop.xlane.xlu0 %3109
  %3111 = vadd.xlane.f32.xlu0 %v3080
  %v3112 = vpop.xlane.xlu0 %3111
  %3113 = vadd.xlane.f32.xlu0 %v3082
  %v3114 = vpop.xlane.xlu0 %3113
  %3115 = vadd.xlane.f32.xlu0 %v3084
  %v3116 = vpop.xlane.xlu0 %3115
  %3117 = vadd.xlane.f32.xlu0 %v3086
  %v3118 = vpop.xlane.xlu0 %3117
  %3119 = vadd.xlane.f32.xlu0 %v3088
  %v3120 = vpop.xlane.xlu0 %3119
  %3121 = vadd.xlane.f32.xlu0 %v3090
  %v3122 = vpop.xlane.xlu0 %3121
  %3123 = vadd.xlane.f32.xlu0 %v3092
  %v3124 = vpop.xlane.xlu0 %3123
  %v3125 = vrcp.pop %v3094
  %v3126 = vrcp.pop %v3096
  %v3127 = vrcp.pop %v3098
  %v3128 = vrcp.pop %v3100
  %v3129 = vrcp.pop %v3102
  %v3130 = vrcp.pop %v3104
  %v3131 = vrcp.pop %v3106
  %v3132 = vrcp.pop %v3108
  %v3133 = vrcp.pop %v3110
  %v3134 = vrcp.pop %v3112
  %v3135 = vrcp.pop %v3114
  %v3136 = vrcp.pop %v3116
  %v3137 = vrcp.pop %v3118
  %v3138 = vrcp.pop %v3120
  %v3139 = vrcp.pop %v3122
  %v3140 = vrcp.pop %v3124
  %v3141 = vmul.f32 %v3062, %v3125
  %v3142 = vmul.f32 %v3064, %v3126
  %v3143 = vmul.f32 %v3066, %v3127
  %v3144 = vmul.f32 %v3068, %v3128
  %v3145 = vmul.f32 %v3070, %v3129
  %v3146 = vmul.f32 %v3072, %v3130
  %v3147 = vmul.f32 %v3074, %v3131
  %v3148 = vmul.f32 %v3076, %v3132
  %v3149 = vmul.f32 %v3078, %v3133
  %v3150 = vmul.f32 %v3080, %v3134
  %v3151 = vmul.f32 %v3082, %v3135
  %v3152 = vmul.f32 %v3084, %v3136
  %v3153 = vmul.f32 %v3086, %v3137
  %v3154 = vmul.f32 %v3088, %v3138
  %v3155 = vmul.f32 %v3090, %v3139
  %v3156 = vmul.f32 %v3092, %v3140
  %v3157 = vmul.f32 %v1540, %v2891
  %v3158 = vmul.f32 %v1543, %v2891
  %v3159 = vmul.f32 %v1548, %v2891
  %v3160 = vmul.f32 %v1551, %v2891
  %v3161 = vmul.f32 %v1556, %v2891
  %v3162 = vmul.f32 %v1559, %v2891
  %v3163 = vmul.f32 %v1564, %v2891
  %v3164 = vmul.f32 %v1567, %v2891
  %v3165 = vmul.f32 %v1572, %v2891
  %v3166 = vmul.f32 %v1575, %v2891
  %v3167 = vmul.f32 %v1580, %v2891
  %v3168 = vmul.f32 %v1583, %v2891
  %v3169 = vmul.f32 %v1588, %v2891
  %v3170 = vmul.f32 %v1591, %v2891
  %v3171 = vmul.f32 %v1596, %v2891
  %v3172 = vmul.f32 %v1599, %v2891
  %v3173 = vpack.c.bf16 %v3158, %v3157
  %v3174 = vpack.c.bf16 %v3160, %v3159
  %v3175 = vpack.c.bf16 %v3162, %v3161
  %v3176 = vpack.c.bf16 %v3164, %v3163
  %v3177 = vpack.c.bf16 %v3166, %v3165
  %v3178 = vpack.c.bf16 %v3168, %v3167
  %v3179 = vpack.c.bf16 %v3170, %v3169
  %v3180 = vpack.c.bf16 %v3172, %v3171
  %v3181 = vpack.c.bf16 %v3142, %v3141
  %v3182 = vpack.c.bf16 %v3144, %v3143
  %v3183 = vpack.c.bf16 %v3146, %v3145
  %v3184 = vpack.c.bf16 %v3148, %v3147
  %v3185 = vpack.c.bf16 %v3150, %v3149
  %v3186 = vpack.c.bf16 %v3152, %v3151
  %v3187 = vpack.c.bf16 %v3154, %v3153
  %v3188 = vpack.c.bf16 %v3156, %v3155
  %3189 = vmatprep.subr.bf16.mxu0 0
  %3190 = vmatpush1.bf16.msra.mxu0 %v3173
  %3191 = vmatprep.subr.bf16.mxu0 0
  %3192 = vmatpush1.bf16.msra.mxu0 %v3174
  %3193 = vmatprep.subr.bf16.mxu0 0
  %3194 = vmatpush1.bf16.msra.mxu0 %v3175
  %3195 = vmatprep.subr.bf16.mxu0 0
  %3196 = vmatpush1.bf16.msra.mxu0 %v3176
  %3197 = vmatprep.subr.bf16.mxu0 0
  %3198 = vmatpush1.bf16.msra.mxu0 %v3177
  %3199 = vmatprep.subr.bf16.mxu0 0
  %3200 = vmatpush1.bf16.msra.mxu0 %v3178
  %3201 = vmatprep.subr.bf16.mxu0 0
  %3202 = vmatpush1.bf16.msra.mxu0 %v3179
  %3203 = vmatprep.subr.bf16.mxu0 0
  %3204 = vmatpush1.bf16.msra.mxu0 %v3180
  %3205 = vmatprep.subr.bf16.mxu0 0
  %3206 = vmatpush1.bf16.msra.mxu0 0
  %3207 = vmatprep.subr.bf16.mxu0 0
  %3208 = vmatpush1.bf16.msra.mxu0 0
  %3209 = vmatprep.subr.bf16.mxu0 0
  %3210 = vmatpush1.bf16.msra.mxu0 0
  %3211 = vmatprep.subr.bf16.mxu0 0
  %3212 = vmatpush1.bf16.msra.mxu0 0
  %3213 = vmatprep.subr.bf16.mxu0 0
  %3214 = vmatpush1.bf16.msra.mxu0 0
  %3215 = vmatprep.subr.bf16.mxu0 0
  %3216 = vmatpush1.bf16.msra.mxu0 0
  %3217 = vmatprep.subr.bf16.mxu0 0
  %3218 = vmatpush1.bf16.msra.mxu0 0
  %3219 = vmatprep.subr.bf16.mxu0 0
  %3220 = vmatpush1.bf16.msra.mxu0 0
  %3221 = vmatprep.mubr.bf16.mxu0 0
  %3222 = vmatmul.mubr.bf16.gmra.mrb[0].mxu0 %v3181
  %v3223 = vpop.f32.mrb[0].mxu0
  %v3224 = vadd.f32 0.0, %v3223
  %v3225 = vpop.f32.mrb[0].mxu0
  %v3226 = vpop.f32.mrb[0].mxu0
  %v3227 = vadd.f32 0.0, %v3226
  %v3228 = vpop.f32.mrb[0].mxu0
  %3229 = vmatprep.mubr.bf16.mxu0 0
  %3230 = vmatmul.mubr.bf16.gmra.mrb[0].mxu0 %v3182
  %v3231 = vpop.f32.mrb[0].mxu0
  %v3232 = vadd.f32 0.0, %v3231
  %v3233 = vpop.f32.mrb[0].mxu0
  %v3234 = vpop.f32.mrb[0].mxu0
  %v3235 = vadd.f32 0.0, %v3234
  %v3236 = vpop.f32.mrb[0].mxu0
  %3237 = vmatprep.mubr.bf16.mxu0 0
  %3238 = vmatmul.mubr.bf16.gmra.mrb[0].mxu0 %v3183
  %v3239 = vpop.f32.mrb[0].mxu0
  %v3240 = vadd.f32 0.0, %v3239
  %v3241 = vpop.f32.mrb[0].mxu0
  %v3242 = vpop.f32.mrb[0].mxu0
  %v3243 = vadd.f32 0.0, %v3242
  %v3244 = vpop.f32.mrb[0].mxu0
  %3245 = vmatprep.mubr.bf16.mxu0 0
  %3246 = vmatmul.mubr.bf16.gmra.mrb[0].mxu0 %v3184
  %v3247 = vpop.f32.mrb[0].mxu0
  %v3248 = vadd.f32 0.0, %v3247
  %v3249 = vpop.f32.mrb[0].mxu0
  %v3250 = vpop.f32.mrb[0].mxu0
  %v3251 = vadd.f32 0.0, %v3250
  %v3252 = vpop.f32.mrb[0].mxu0
  %3253 = vmatprep.mubr.bf16.mxu0 0
  %3254 = vmatmul.mubr.bf16.gmra.mrb[0].mxu0 %v3185
  %v3255 = vpop.f32.mrb[0].mxu0
  %v3256 = vadd.f32 0.0, %v3255
  %v3257 = vpop.f32.mrb[0].mxu0
  %v3258 = vpop.f32.mrb[0].mxu0
  %v3259 = vadd.f32 0.0, %v3258
  %v3260 = vpop.f32.mrb[0].mxu0
  %3261 = vmatprep.mubr.bf16.mxu0 0
  %3262 = vmatmul.mubr.bf16.gmra.mrb[0].mxu0 %v3186
  %v3263 = vpop.f32.mrb[0].mxu0
  %v3264 = vadd.f32 0.0, %v3263
  %v3265 = vpop.f32.mrb[0].mxu0
  %v3266 = vpop.f32.mrb[0].mxu0
  %v3267 = vadd.f32 0.0, %v3266
  %v3268 = vpop.f32.mrb[0].mxu0
  %3269 = vmatprep.mubr.bf16.mxu0 0
  %3270 = vmatmul.mubr.bf16.gmra.mrb[0].mxu0 %v3187
  %v3271 = vpop.f32.mrb[0].mxu0
  %v3272 = vadd.f32 0.0, %v3271
  %v3273 = vpop.f32.mrb[0].mxu0
  %v3274 = vpop.f32.mrb[0].mxu0
  %v3275 = vadd.f32 0.0, %v3274
  %v3276 = vpop.f32.mrb[0].mxu0
  %3277 = vmatprep.mubr.bf16.mxu0 0
  %3278 = vmatmul.mubr.bf16.gmra.mrb[0].mxu0 %v3188
  %v3279 = vpop.f32.mrb[0].mxu0
  %v3280 = vadd.f32 0.0, %v3279
  %v3281 = vpop.f32.mrb[0].mxu0
  %v3282 = vpop.f32.mrb[0].mxu0
  %v3283 = vadd.f32 0.0, %v3282
  %v3284 = vpop.f32.mrb[0].mxu0
  %3285 = vdwg.mxu0
  %v3286 = vadd.f32 %v2871, %v3224
  %v3287 = vadd.f32 %v2872, %v3227
  %v3288 = vadd.f32 %v2873, %v3232
  %v3289 = vadd.f32 %v2874, %v3235
  %v3290 = vadd.f32 %v2875, %v3240
  %v3291 = vadd.f32 %v2876, %v3243
  %v3292 = vadd.f32 %v2877, %v3248
  %v3293 = vadd.f32 %v2878, %v3251
  %v3294 = vadd.f32 %v2879, %v3256
  %v3295 = vadd.f32 %v2880, %v3259
  %v3296 = vadd.f32 %v2881, %v3264
  %v3297 = vadd.f32 %v2882, %v3267
  %v3298 = vadd.f32 %v2883, %v3272
  %v3299 = vadd.f32 %v2884, %v3275
  %v3300 = vadd.f32 %v2885, %v3280
  %v3301 = vadd.f32 %v2886, %v3283
  %v3302 = vpack.c.bf16 %v3287, %v3286
  %v3303 = vpack.c.bf16 %v3289, %v3288
  %v3304 = vpack.c.bf16 %v3291, %v3290
  %v3305 = vpack.c.bf16 %v3293, %v3292
  %v3306 = vpack.c.bf16 %v3295, %v3294
  %v3307 = vpack.c.bf16 %v3297, %v3296
  %v3308 = vpack.c.bf16 %v3299, %v3298
  %v3309 = vpack.c.bf16 %v3301, %v3300
  %v3310 = vld [vmem:[%s16] sm:$0xf]
  %v3311 = vld [vmem:[%s16 + $0x4] sm:$0xf]
  %v3312 = vld [vmem:[%s16 + $0x8] sm:$0xf]
  %v3313 = vld [vmem:[%s16 + $0xc] sm:$0xf]
  %v3314 = vld [vmem:[%s16 + $0x10] sm:$0xf]
  %v3315 = vld [vmem:[%s16 + $0x14] sm:$0xf]
  %v3316 = vld [vmem:[%s16 + $0x18] sm:$0xf]
  %v3317 = vld [vmem:[%s16 + $0x1c] sm:$0xf]
  %v3318 = vld [vmem:[%s16 + $0x20] sm:$0xf]
  %v3319 = vld [vmem:[%s16 + $0x24] sm:$0xf]
  %v3320 = vld [vmem:[%s16 + $0x28] sm:$0xf]
  %v3321 = vld [vmem:[%s16 + $0x2c] sm:$0xf]
  %v3322 = vld [vmem:[%s16 + $0x30] sm:$0xf]
  %v3323 = vld [vmem:[%s16 + $0x34] sm:$0xf]
  %v3324 = vld [vmem:[%s16 + $0x38] sm:$0xf]
  %v3325 = vld [vmem:[%s16 + $0x3c] sm:$0xf]
  %v3326 = vld [vmem:[%s17] sm:$0x1]
  %v3328 = vlaneseq
  %v3329 = vshrl.u32 %v3328, 7
  %v3330 = vsub.s32 0, %v3329
  %v3331 = vrot.slane %v3326, %v3330
  %v3349 = vunpack.c.l.b16 %v3310
  %v3350 = vunpack.c.l.b16 %v3311
  %v3351 = vunpack.c.l.b16 %v3312
  %v3352 = vunpack.c.l.b16 %v3313
  %v3353 = vunpack.c.l.b16 %v3314
  %v3354 = vunpack.c.l.b16 %v3315
  %v3355 = vunpack.c.l.b16 %v3316
  %v3356 = vunpack.c.l.b16 %v3317
  %v3357 = vunpack.c.l.b16 %v3318
  %v3358 = vunpack.c.l.b16 %v3319
  %v3359 = vunpack.c.l.b16 %v3320
  %v3360 = vunpack.c.l.b16 %v3321
  %v3361 = vunpack.c.l.b16 %v3322
  %v3362 = vunpack.c.l.b16 %v3323
  %v3363 = vunpack.c.l.b16 %v3324
  %v3364 = vunpack.c.l.b16 %v3325
  %v3365 = vpack.c.b16 %v3350, %v3349
  %v3366 = vpack.c.b16 %v3352, %v3351
  %v3367 = vpack.c.b16 %v3354, %v3353
  %v3368 = vpack.c.b16 %v3356, %v3355
  %v3369 = vpack.c.b16 %v3358, %v3357
  %v3370 = vpack.c.b16 %v3360, %v3359
  %v3371 = vpack.c.b16 %v3362, %v3361
  %v3372 = vpack.c.b16 %v3364, %v3363
  %3381 = vmatprep.subr.bf16.mxu0 0
  %3382 = vmatpush1.bf16.msra.mxu0 %v3365
  %3383 = vmatprep.subr.bf16.mxu0 0
  %3384 = vmatpush1.bf16.msra.mxu0 %v3366
  %3385 = vmatprep.subr.bf16.mxu0 0
  %3386 = vmatpush1.bf16.msra.mxu0 %v3367
  %3387 = vmatprep.subr.bf16.mxu0 0
  %3388 = vmatpush1.bf16.msra.mxu0 %v3368
  %3389 = vmatprep.subr.bf16.mxu0 0
  %3390 = vmatpush1.bf16.msra.mxu0 %v3369
  %3391 = vmatprep.subr.bf16.mxu0 0
  %3392 = vmatpush1.bf16.msra.mxu0 %v3370
  %3393 = vmatprep.subr.bf16.mxu0 0
  %3394 = vmatpush1.bf16.msra.mxu0 %v3371
  %3395 = vmatprep.subr.bf16.mxu0 0
  %3396 = vmatpush1.bf16.msra.mxu0 %v3372
  %3397 = vmatprep.subr.bf16.mxu0 0
  %3398 = vmatpush1.bf16.msra.mxu0 0
  %3399 = vmatprep.subr.bf16.mxu0 0
  %3400 = vmatpush1.bf16.msra.mxu0 0
  %3401 = vmatprep.subr.bf16.mxu0 0
  %3402 = vmatpush1.bf16.msra.mxu0 0
  %3403 = vmatprep.subr.bf16.mxu0 0
  %3404 = vmatpush1.bf16.msra.mxu0 0
  %3405 = vmatprep.subr.bf16.mxu0 0
  %3406 = vmatpush1.bf16.msra.mxu0 0
  %3407 = vmatprep.subr.bf16.mxu0 0
  %3408 = vmatpush1.bf16.msra.mxu0 0
  %3409 = vmatprep.subr.bf16.mxu0 0
  %3410 = vmatpush1.bf16.msra.mxu0 0
  %3411 = vmatprep.subr.bf16.mxu0 0
  %3412 = vmatpush1.bf16.msra.mxu0 0
  %3413 = vmatprep.mubr.bf16.mxu0 0
  %3414 = vmatmul.mubr.bf16.gmra.mrb[0].mxu0 %v3302
  %v3415 = vpop.f32.mrb[0].mxu0
  %v3416 = vadd.f32 %v3331, %v3415
  %v3417 = vpop.f32.mrb[0].mxu0
  %v3418 = vpop.f32.mrb[0].mxu0
  %v3419 = vadd.f32 %v3331, %v3418
  %v3420 = vpop.f32.mrb[0].mxu0
  %3421 = vmatprep.mubr.bf16.mxu0 0
  %3422 = vmatmul.mubr.bf16.gmra.mrb[0].mxu0 %v3303
  %v3423 = vpop.f32.mrb[0].mxu0
  %v3424 = vadd.f32 %v3331, %v3423
  %v3425 = vpop.f32.mrb[0].mxu0
  %v3426 = vpop.f32.mrb[0].mxu0
  %v3427 = vadd.f32 %v3331, %v3426
  %v3428 = vpop.f32.mrb[0].mxu0
  %3429 = vmatprep.mubr.bf16.mxu0 0
  %3430 = vmatmul.mubr.bf16.gmra.mrb[0].mxu0 %v3304
  %v3431 = vpop.f32.mrb[0].mxu0
  %v3432 = vadd.f32 %v3331, %v3431
  %v3433 = vpop.f32.mrb[0].mxu0
  %v3434 = vpop.f32.mrb[0].mxu0
  %v3435 = vadd.f32 %v3331, %v3434
  %v3436 = vpop.f32.mrb[0].mxu0
  %3437 = vmatprep.mubr.bf16.mxu0 0
  %3438 = vmatmul.mubr.bf16.gmra.mrb[0].mxu0 %v3305
  %v3439 = vpop.f32.mrb[0].mxu0
  %v3440 = vadd.f32 %v3331, %v3439
  %v3441 = vpop.f32.mrb[0].mxu0
  %v3442 = vpop.f32.mrb[0].mxu0
  %v3443 = vadd.f32 %v3331, %v3442
  %v3444 = vpop.f32.mrb[0].mxu0
  %3445 = vmatprep.mubr.bf16.mxu0 0
  %3446 = vmatmul.mubr.bf16.gmra.mrb[0].mxu0 %v3306
  %v3447 = vpop.f32.mrb[0].mxu0
  %v3448 = vadd.f32 %v3331, %v3447
  %v3449 = vpop.f32.mrb[0].mxu0
  %v3450 = vpop.f32.mrb[0].mxu0
  %v3451 = vadd.f32 %v3331, %v3450
  %v3452 = vpop.f32.mrb[0].mxu0
  %3453 = vmatprep.mubr.bf16.mxu0 0
  %3454 = vmatmul.mubr.bf16.gmra.mrb[0].mxu0 %v3307
  %v3455 = vpop.f32.mrb[0].mxu0
  %v3456 = vadd.f32 %v3331, %v3455
  %v3457 = vpop.f32.mrb[0].mxu0
  %v3458 = vpop.f32.mrb[0].mxu0
  %v3459 = vadd.f32 %v3331, %v3458
  %v3460 = vpop.f32.mrb[0].mxu0
  %3461 = vmatprep.mubr.bf16.mxu0 0
  %3462 = vmatmul.mubr.bf16.gmra.mrb[0].mxu0 %v3308
  %v3463 = vpop.f32.mrb[0].mxu0
  %v3464 = vadd.f32 %v3331, %v3463
  %v3465 = vpop.f32.mrb[0].mxu0
  %v3466 = vpop.f32.mrb[0].mxu0
  %v3467 = vadd.f32 %v3331, %v3466
  %v3468 = vpop.f32.mrb[0].mxu0
  %3469 = vmatprep.mubr.bf16.mxu0 0
  %3470 = vmatmul.mubr.bf16.gmra.mrb[0].mxu0 %v3309
  %v3471 = vpop.f32.mrb[0].mxu0
  %v3472 = vadd.f32 %v3331, %v3471
  %v3473 = vpop.f32.mrb[0].mxu0
  %v3474 = vpop.f32.mrb[0].mxu0
  %v3475 = vadd.f32 %v3331, %v3474
  %v3476 = vpop.f32.mrb[0].mxu0
  %3477 = vdwg.mxu0
  %v3478 = vadd.f32 %v968, %v3416
  %v3479 = vadd.f32 %v969, %v3419
  %v3480 = vadd.f32 %v970, %v3424
  %v3481 = vadd.f32 %v971, %v3427
  %v3482 = vadd.f32 %v972, %v3432
  %v3483 = vadd.f32 %v973, %v3435
  %v3484 = vadd.f32 %v974, %v3440
  %v3485 = vadd.f32 %v975, %v3443
  %v3486 = vadd.f32 %v976, %v3448
  %v3487 = vadd.f32 %v977, %v3451
  %v3488 = vadd.f32 %v978, %v3456
  %v3489 = vadd.f32 %v979, %v3459
  %v3490 = vadd.f32 %v980, %v3464
  %v3491 = vadd.f32 %v981, %v3467
  %v3492 = vadd.f32 %v982, %v3472
  %v3493 = vadd.f32 %v983, %v3475
  %v3494 = vld [vmem:[%s18] sm:$0x1]
  %v3495 = vld [vmem:[%s19] sm:$0x1]
  %3496 = vadd.xlane.f32.xlu0 %v3478
  %v3497 = vpop.xlane.xlu0 %3496
  %3498 = vadd.xlane.f32.xlu0 %v3479
  %v3499 = vpop.xlane.xlu0 %3498
  %3500 = vadd.xlane.f32.xlu0 %v3480
  %v3501 = vpop.xlane.xlu0 %3500
  %3502 = vadd.xlane.f32.xlu0 %v3481
  %v3503 = vpop.xlane.xlu0 %3502
  %3504 = vadd.xlane.f32.xlu0 %v3482
  %v3505 = vpop.xlane.xlu0 %3504
  %3506 = vadd.xlane.f32.xlu0 %v3483
  %v3507 = vpop.xlane.xlu0 %3506
  %3508 = vadd.xlane.f32.xlu0 %v3484
  %v3509 = vpop.xlane.xlu0 %3508
  %3510 = vadd.xlane.f32.xlu0 %v3485
  %v3511 = vpop.xlane.xlu0 %3510
  %3512 = vadd.xlane.f32.xlu0 %v3486
  %v3513 = vpop.xlane.xlu0 %3512
  %3514 = vadd.xlane.f32.xlu0 %v3487
  %v3515 = vpop.xlane.xlu0 %3514
  %3516 = vadd.xlane.f32.xlu0 %v3488
  %v3517 = vpop.xlane.xlu0 %3516
  %3518 = vadd.xlane.f32.xlu0 %v3489
  %v3519 = vpop.xlane.xlu0 %3518
  %3520 = vadd.xlane.f32.xlu0 %v3490
  %v3521 = vpop.xlane.xlu0 %3520
  %3522 = vadd.xlane.f32.xlu0 %v3491
  %v3523 = vpop.xlane.xlu0 %3522
  %3524 = vadd.xlane.f32.xlu0 %v3492
  %v3525 = vpop.xlane.xlu0 %3524
  %3526 = vadd.xlane.f32.xlu0 %v3493
  %v3527 = vpop.xlane.xlu0 %3526
  %v3528 = vmul.f32 %v3497, %v1018
  %v3529 = vmul.f32 %v3499, %v1018
  %v3530 = vmul.f32 %v3501, %v1018
  %v3531 = vmul.f32 %v3503, %v1018
  %v3532 = vmul.f32 %v3505, %v1018
  %v3533 = vmul.f32 %v3507, %v1018
  %v3534 = vmul.f32 %v3509, %v1018
  %v3535 = vmul.f32 %v3511, %v1018
  %v3536 = vmul.f32 %v3513, %v1018
  %v3537 = vmul.f32 %v3515, %v1018
  %v3538 = vmul.f32 %v3517, %v1018
  %v3539 = vmul.f32 %v3519, %v1018
  %v3540 = vmul.f32 %v3521, %v1018
  %v3541 = vmul.f32 %v3523, %v1018
  %v3542 = vmul.f32 %v3525, %v1018
  %v3543 = vmul.f32 %v3527, %v1018
  %v3544 = vsub.f32 %v3478, %v3528
  %v3545 = vsub.f32 %v3479, %v3529
  %v3546 = vsub.f32 %v3480, %v3530
  %v3547 = vsub.f32 %v3481, %v3531
  %v3548 = vsub.f32 %v3482, %v3532
  %v3549 = vsub.f32 %v3483, %v3533
  %v3550 = vsub.f32 %v3484, %v3534
  %v3551 = vsub.f32 %v3485, %v3535
  %v3552 = vsub.f32 %v3486, %v3536
  %v3553 = vsub.f32 %v3487, %v3537
  %v3554 = vsub.f32 %v3488, %v3538
  %v3555 = vsub.f32 %v3489, %v3539
  %v3556 = vsub.f32 %v3490, %v3540
  %v3557 = vsub.f32 %v3491, %v3541
  %v3558 = vsub.f32 %v3492, %v3542
  %v3559 = vsub.f32 %v3493, %v3543
  %v3560 = vmul.f32 %v3544, %v3544
  %v3561 = vmul.f32 %v3545, %v3545
  %v3562 = vmul.f32 %v3546, %v3546
  %v3563 = vmul.f32 %v3547, %v3547
  %v3564 = vmul.f32 %v3548, %v3548
  %v3565 = vmul.f32 %v3549, %v3549
  %v3566 = vmul.f32 %v3550, %v3550
  %v3567 = vmul.f32 %v3551, %v3551
  %v3568 = vmul.f32 %v3552, %v3552
  %v3569 = vmul.f32 %v3553, %v3553
  %v3570 = vmul.f32 %v3554, %v3554
  %v3571 = vmul.f32 %v3555, %v3555
  %v3572 = vmul.f32 %v3556, %v3556
  %v3573 = vmul.f32 %v3557, %v3557
  %v3574 = vmul.f32 %v3558, %v3558
  %v3575 = vmul.f32 %v3559, %v3559
  %3576 = vadd.xlane.f32.xlu0 %v3560
  %v3577 = vpop.xlane.xlu0 %3576
  %3578 = vadd.xlane.f32.xlu0 %v3561
  %v3579 = vpop.xlane.xlu0 %3578
  %3580 = vadd.xlane.f32.xlu0 %v3562
  %v3581 = vpop.xlane.xlu0 %3580
  %3582 = vadd.xlane.f32.xlu0 %v3563
  %v3583 = vpop.xlane.xlu0 %3582
  %3584 = vadd.xlane.f32.xlu0 %v3564
  %v3585 = vpop.xlane.xlu0 %3584
  %3586 = vadd.xlane.f32.xlu0 %v3565
  %v3587 = vpop.xlane.xlu0 %3586
  %3588 = vadd.xlane.f32.xlu0 %v3566
  %v3589 = vpop.xlane.xlu0 %3588
  %3590 = vadd.xlane.f32.xlu0 %v3567
  %v3591 = vpop.xlane.xlu0 %3590
  %3592 = vadd.xlane.f32.xlu0 %v3568
  %v3593 = vpop.xlane.xlu0 %3592
  %3594 = vadd.xlane.f32.xlu0 %v3569
  %v3595 = vpop.xlane.xlu0 %3594
  %3596 = vadd.xlane.f32.xlu0 %v3570
  %v3597 = vpop.xlane.xlu0 %3596
  %3598 = vadd.xlane.f32.xlu0 %v3571
  %v3599 = vpop.xlane.xlu0 %3598
  %3600 = vadd.xlane.f32.xlu0 %v3572
  %v3601 = vpop.xlane.xlu0 %3600
  %3602 = vadd.xlane.f32.xlu0 %v3573
  %v3603 = vpop.xlane.xlu0 %3602
  %3604 = vadd.xlane.f32.xlu0 %v3574
  %v3605 = vpop.xlane.xlu0 %3604
  %3606 = vadd.xlane.f32.xlu0 %v3575
  %v3607 = vpop.xlane.xlu0 %3606
  %v3608 = vmul.f32 %v3577, %v1018
  %v3609 = vmul.f32 %v3579, %v1018
  %v3610 = vmul.f32 %v3581, %v1018
  %v3611 = vmul.f32 %v3583, %v1018
  %v3612 = vmul.f32 %v3585, %v1018
  %v3613 = vmul.f32 %v3587, %v1018
  %v3614 = vmul.f32 %v3589, %v1018
  %v3615 = vmul.f32 %v3591, %v1018
  %v3616 = vmul.f32 %v3593, %v1018
  %v3617 = vmul.f32 %v3595, %v1018
  %v3618 = vmul.f32 %v3597, %v1018
  %v3619 = vmul.f32 %v3599, %v1018
  %v3620 = vmul.f32 %v3601, %v1018
  %v3621 = vmul.f32 %v3603, %v1018
  %v3622 = vmul.f32 %v3605, %v1018
  %v3623 = vmul.f32 %v3607, %v1018
  %v3624 = vadd.f32 %v3608, 1e-05
  %v3625 = vadd.f32 %v3609, 1e-05
  %v3626 = vadd.f32 %v3610, 1e-05
  %v3627 = vadd.f32 %v3611, 1e-05
  %v3628 = vadd.f32 %v3612, 1e-05
  %v3629 = vadd.f32 %v3613, 1e-05
  %v3630 = vadd.f32 %v3614, 1e-05
  %v3631 = vadd.f32 %v3615, 1e-05
  %v3632 = vadd.f32 %v3616, 1e-05
  %v3633 = vadd.f32 %v3617, 1e-05
  %v3634 = vadd.f32 %v3618, 1e-05
  %v3635 = vadd.f32 %v3619, 1e-05
  %v3636 = vadd.f32 %v3620, 1e-05
  %v3637 = vadd.f32 %v3621, 1e-05
  %v3638 = vadd.f32 %v3622, 1e-05
  %v3639 = vadd.f32 %v3623, 1e-05
  %v3640 = vrsqrt.pop %v3624
  %v3641 = vrsqrt.pop %v3625
  %v3642 = vrsqrt.pop %v3626
  %v3643 = vrsqrt.pop %v3627
  %v3644 = vrsqrt.pop %v3628
  %v3645 = vrsqrt.pop %v3629
  %v3646 = vrsqrt.pop %v3630
  %v3647 = vrsqrt.pop %v3631
  %v3648 = vrsqrt.pop %v3632
  %v3649 = vrsqrt.pop %v3633
  %v3650 = vrsqrt.pop %v3634
  %v3651 = vrsqrt.pop %v3635
  %v3652 = vrsqrt.pop %v3636
  %v3653 = vrsqrt.pop %v3637
  %v3654 = vrsqrt.pop %v3638
  %v3655 = vrsqrt.pop %v3639
  %v3656 = vmul.f32 %v3544, %v3640
  %v3657 = vmul.f32 %v3545, %v3641
  %v3658 = vmul.f32 %v3546, %v3642
  %v3659 = vmul.f32 %v3547, %v3643
  %v3660 = vmul.f32 %v3548, %v3644
  %v3661 = vmul.f32 %v3549, %v3645
  %v3662 = vmul.f32 %v3550, %v3646
  %v3663 = vmul.f32 %v3551, %v3647
  %v3664 = vmul.f32 %v3552, %v3648
  %v3665 = vmul.f32 %v3553, %v3649
  %v3666 = vmul.f32 %v3554, %v3650
  %v3667 = vmul.f32 %v3555, %v3651
  %v3668 = vmul.f32 %v3556, %v3652
  %v3669 = vmul.f32 %v3557, %v3653
  %v3670 = vmul.f32 %v3558, %v3654
  %v3671 = vmul.f32 %v3559, %v3655
  %v3673 = vlaneseq
  %v3674 = vshrl.u32 %v3673, 7
  %v3675 = vsub.s32 0, %v3674
  %v3676 = vrot.slane %v3494, %v3675
  %v3678 = vmul.f32 %v3656, %v3676
  %v3679 = vmul.f32 %v3657, %v3676
  %v3680 = vmul.f32 %v3658, %v3676
  %v3681 = vmul.f32 %v3659, %v3676
  %v3682 = vmul.f32 %v3660, %v3676
  %v3683 = vmul.f32 %v3661, %v3676
  %v3684 = vmul.f32 %v3662, %v3676
  %v3685 = vmul.f32 %v3663, %v3676
  %v3686 = vmul.f32 %v3664, %v3676
  %v3687 = vmul.f32 %v3665, %v3676
  %v3688 = vmul.f32 %v3666, %v3676
  %v3689 = vmul.f32 %v3667, %v3676
  %v3690 = vmul.f32 %v3668, %v3676
  %v3691 = vmul.f32 %v3669, %v3676
  %v3692 = vmul.f32 %v3670, %v3676
  %v3693 = vmul.f32 %v3671, %v3676
  %v3695 = vlaneseq
  %v3696 = vshrl.u32 %v3695, 7
  %v3697 = vsub.s32 0, %v3696
  %v3698 = vrot.slane %v3495, %v3697
  %v3700 = vadd.f32 %v3678, %v3698
  %v3701 = vadd.f32 %v3679, %v3698
  %v3702 = vadd.f32 %v3680, %v3698
  %v3703 = vadd.f32 %v3681, %v3698
  %v3704 = vadd.f32 %v3682, %v3698
  %v3705 = vadd.f32 %v3683, %v3698
  %v3706 = vadd.f32 %v3684, %v3698
  %v3707 = vadd.f32 %v3685, %v3698
  %v3708 = vadd.f32 %v3686, %v3698
  %v3709 = vadd.f32 %v3687, %v3698
  %v3710 = vadd.f32 %v3688, %v3698
  %v3711 = vadd.f32 %v3689, %v3698
  %v3712 = vadd.f32 %v3690, %v3698
  %v3713 = vadd.f32 %v3691, %v3698
  %v3714 = vadd.f32 %v3692, %v3698
  %v3715 = vadd.f32 %v3693, %v3698
  %v3716 = vpack.c.bf16 %v3701, %v3700
  %v3717 = vpack.c.bf16 %v3703, %v3702
  %v3718 = vpack.c.bf16 %v3705, %v3704
  %v3719 = vpack.c.bf16 %v3707, %v3706
  %v3720 = vpack.c.bf16 %v3709, %v3708
  %v3721 = vpack.c.bf16 %v3711, %v3710
  %v3722 = vpack.c.bf16 %v3713, %v3712
  %v3723 = vpack.c.bf16 %v3715, %v3714
  %v3724 = vld [vmem:[%s20] sm:$0xf]
  %v3725 = vld [vmem:[%s20 + $0x10] sm:$0xf]
  %v3726 = vld [vmem:[%s20 + $0x20] sm:$0xf]
  %v3727 = vld [vmem:[%s20 + $0x30] sm:$0xf]
  %v3728 = vld [vmem:[%s20 + $0x40] sm:$0xf]
  %v3729 = vld [vmem:[%s20 + $0x50] sm:$0xf]
  %v3730 = vld [vmem:[%s20 + $0x60] sm:$0xf]
  %v3731 = vld [vmem:[%s20 + $0x70] sm:$0xf]
  %v3732 = vld [vmem:[%s20 + $0x80] sm:$0xf]
  %v3733 = vld [vmem:[%s20 + $0x90] sm:$0xf]
  %v3734 = vld [vmem:[%s20 + $0xa0] sm:$0xf]
  %v3735 = vld [vmem:[%s20 + $0xb0] sm:$0xf]
  %v3736 = vld [vmem:[%s20 + $0xc0] sm:$0xf]
  %v3737 = vld [vmem:[%s20 + $0xd0] sm:$0xf]
  %v3738 = vld [vmem:[%s20 + $0xe0] sm:$0xf]
  %v3739 = vld [vmem:[%s20 + $0xf0] sm:$0xf]
  %v3740 = vld [vmem:[%s21] sm:$0x1]
  %v3742 = vlaneseq
  %v3743 = vshrl.u32 %v3742, 7
  %v3744 = vsub.s32 0, %v3743
  %v3745 = vrot.slane %v3740, %v3744
  %v3763 = vunpack.c.l.b16 %v3724
  %v3764 = vunpack.c.l.b16 %v3725
  %v3765 = vunpack.c.l.b16 %v3726
  %v3766 = vunpack.c.l.b16 %v3727
  %v3767 = vunpack.c.l.b16 %v3728
  %v3768 = vunpack.c.l.b16 %v3729
  %v3769 = vunpack.c.l.b16 %v3730
  %v3770 = vunpack.c.l.b16 %v3731
  %v3771 = vunpack.c.l.b16 %v3732
  %v3772 = vunpack.c.l.b16 %v3733
  %v3773 = vunpack.c.l.b16 %v3734
  %v3774 = vunpack.c.l.b16 %v3735
  %v3775 = vunpack.c.l.b16 %v3736
  %v3776 = vunpack.c.l.b16 %v3737
  %v3777 = vunpack.c.l.b16 %v3738
  %v3778 = vunpack.c.l.b16 %v3739
  %v3779 = vpack.c.b16 %v3764, %v3763
  %v3780 = vpack.c.b16 %v3766, %v3765
  %v3781 = vpack.c.b16 %v3768, %v3767
  %v3782 = vpack.c.b16 %v3770, %v3769
  %v3783 = vpack.c.b16 %v3772, %v3771
  %v3784 = vpack.c.b16 %v3774, %v3773
  %v3785 = vpack.c.b16 %v3776, %v3775
  %v3786 = vpack.c.b16 %v3778, %v3777
  %3795 = vmatprep.subr.bf16.mxu0 0
  %3796 = vmatpush1.bf16.msra.mxu0 %v3779
  %3797 = vmatprep.subr.bf16.mxu0 0
  %3798 = vmatpush1.bf16.msra.mxu0 %v3780
  %3799 = vmatprep.subr.bf16.mxu0 0
  %3800 = vmatpush1.bf16.msra.mxu0 %v3781
  %3801 = vmatprep.subr.bf16.mxu0 0
  %3802 = vmatpush1.bf16.msra.mxu0 %v3782
  %3803 = vmatprep.subr.bf16.mxu0 0
  %3804 = vmatpush1.bf16.msra.mxu0 %v3783
  %3805 = vmatprep.subr.bf16.mxu0 0
  %3806 = vmatpush1.bf16.msra.mxu0 %v3784
  %3807 = vmatprep.subr.bf16.mxu0 0
  %3808 = vmatpush1.bf16.msra.mxu0 %v3785
  %3809 = vmatprep.subr.bf16.mxu0 0
  %3810 = vmatpush1.bf16.msra.mxu0 %v3786
  %3811 = vmatprep.subr.bf16.mxu0 0
  %3812 = vmatpush1.bf16.msra.mxu0 0
  %3813 = vmatprep.subr.bf16.mxu0 0
  %3814 = vmatpush1.bf16.msra.mxu0 0
  %3815 = vmatprep.subr.bf16.mxu0 0
  %3816 = vmatpush1.bf16.msra.mxu0 0
  %3817 = vmatprep.subr.bf16.mxu0 0
  %3818 = vmatpush1.bf16.msra.mxu0 0
  %3819 = vmatprep.subr.bf16.mxu0 0
  %3820 = vmatpush1.bf16.msra.mxu0 0
  %3821 = vmatprep.subr.bf16.mxu0 0
  %3822 = vmatpush1.bf16.msra.mxu0 0
  %3823 = vmatprep.subr.bf16.mxu0 0
  %3824 = vmatpush1.bf16.msra.mxu0 0
  %3825 = vmatprep.subr.bf16.mxu0 0
  %3826 = vmatpush1.bf16.msra.mxu0 0
  %3827 = vmatprep.mubr.bf16.mxu0 0
  %3828 = vmatmul.mubr.bf16.gmra.mrb[0].mxu0 %v3716
  %v3829 = vpop.f32.mrb[0].mxu0
  %v3830 = vadd.f32 %v3745, %v3829
  %v3831 = vpop.f32.mrb[0].mxu0
  %v3832 = vpop.f32.mrb[0].mxu0
  %v3833 = vadd.f32 %v3745, %v3832
  %v3834 = vpop.f32.mrb[0].mxu0
  %3835 = vmatprep.mubr.bf16.mxu0 0
  %3836 = vmatmul.mubr.bf16.gmra.mrb[0].mxu0 %v3717
  %v3837 = vpop.f32.mrb[0].mxu0
  %v3838 = vadd.f32 %v3745, %v3837
  %v3839 = vpop.f32.mrb[0].mxu0
  %v3840 = vpop.f32.mrb[0].mxu0
  %v3841 = vadd.f32 %v3745, %v3840
  %v3842 = vpop.f32.mrb[0].mxu0
  %3843 = vmatprep.mubr.bf16.mxu0 0
  %3844 = vmatmul.mubr.bf16.gmra.mrb[0].mxu0 %v3718
  %v3845 = vpop.f32.mrb[0].mxu0
  %v3846 = vadd.f32 %v3745, %v3845
  %v3847 = vpop.f32.mrb[0].mxu0
  %v3848 = vpop.f32.mrb[0].mxu0
  %v3849 = vadd.f32 %v3745, %v3848
  %v3850 = vpop.f32.mrb[0].mxu0
  %3851 = vmatprep.mubr.bf16.mxu0 0
  %3852 = vmatmul.mubr.bf16.gmra.mrb[0].mxu0 %v3719
  %v3853 = vpop.f32.mrb[0].mxu0
  %v3854 = vadd.f32 %v3745, %v3853
  %v3855 = vpop.f32.mrb[0].mxu0
  %v3856 = vpop.f32.mrb[0].mxu0
  %v3857 = vadd.f32 %v3745, %v3856
  %v3858 = vpop.f32.mrb[0].mxu0
  %3859 = vmatprep.mubr.bf16.mxu0 0
  %3860 = vmatmul.mubr.bf16.gmra.mrb[0].mxu0 %v3720
  %v3861 = vpop.f32.mrb[0].mxu0
  %v3862 = vadd.f32 %v3745, %v3861
  %v3863 = vpop.f32.mrb[0].mxu0
  %v3864 = vpop.f32.mrb[0].mxu0
  %v3865 = vadd.f32 %v3745, %v3864
  %v3866 = vpop.f32.mrb[0].mxu0
  %3867 = vmatprep.mubr.bf16.mxu0 0
  %3868 = vmatmul.mubr.bf16.gmra.mrb[0].mxu0 %v3721
  %v3869 = vpop.f32.mrb[0].mxu0
  %v3870 = vadd.f32 %v3745, %v3869
  %v3871 = vpop.f32.mrb[0].mxu0
  %v3872 = vpop.f32.mrb[0].mxu0
  %v3873 = vadd.f32 %v3745, %v3872
  %v3874 = vpop.f32.mrb[0].mxu0
  %3875 = vmatprep.mubr.bf16.mxu0 0
  %3876 = vmatmul.mubr.bf16.gmra.mrb[0].mxu0 %v3722
  %v3877 = vpop.f32.mrb[0].mxu0
  %v3878 = vadd.f32 %v3745, %v3877
  %v3879 = vpop.f32.mrb[0].mxu0
  %v3880 = vpop.f32.mrb[0].mxu0
  %v3881 = vadd.f32 %v3745, %v3880
  %v3882 = vpop.f32.mrb[0].mxu0
  %3883 = vmatprep.mubr.bf16.mxu0 0
  %3884 = vmatmul.mubr.bf16.gmra.mrb[0].mxu0 %v3723
  %v3885 = vpop.f32.mrb[0].mxu0
  %v3886 = vadd.f32 %v3745, %v3885
  %v3887 = vpop.f32.mrb[0].mxu0
  %v3888 = vpop.f32.mrb[0].mxu0
  %v3889 = vadd.f32 %v3745, %v3888
  %v3890 = vpop.f32.mrb[0].mxu0
  %3891 = vdwg.mxu0
  %v3892 = vmul.f32 %v3830, 1.702
  %v3893 = vmul.f32 %v3833, 1.702
  %v3894 = vmul.f32 %v3838, 1.702
  %v3895 = vmul.f32 %v3841, 1.702
  %v3896 = vmul.f32 %v3846, 1.702
  %v3897 = vmul.f32 %v3849, 1.702
  %v3898 = vmul.f32 %v3854, 1.702
  %v3899 = vmul.f32 %v3857, 1.702
  %v3900 = vmul.f32 %v3862, 1.702
  %v3901 = vmul.f32 %v3865, 1.702
  %v3902 = vmul.f32 %v3870, 1.702
  %v3903 = vmul.f32 %v3873, 1.702
  %v3904 = vmul.f32 %v3878, 1.702
  %v3905 = vmul.f32 %v3881, 1.702
  %v3906 = vmul.f32 %v3886, 1.702
  %v3907 = vmul.f32 %v3889, 1.702
  %v3908 = vxor.u32 %v3892, 2147483648
  %v3909 = vxor.u32 %v3893, 2147483648
  %v3910 = vxor.u32 %v3894, 2147483648
  %v3911 = vxor.u32 %v3895, 2147483648
  %v3912 = vxor.u32 %v3896, 2147483648
  %v3913 = vxor.u32 %v3897, 2147483648
  %v3914 = vxor.u32 %v3898, 2147483648
  %v3915 = vxor.u32 %v3899, 2147483648
  %v3916 = vxor.u32 %v3900, 2147483648
  %v3917 = vxor.u32 %v3901, 2147483648
  %v3918 = vxor.u32 %v3902, 2147483648
  %v3919 = vxor.u32 %v3903, 2147483648
  %v3920 = vxor.u32 %v3904, 2147483648
  %v3921 = vxor.u32 %v3905, 2147483648
  %v3922 = vxor.u32 %v3906, 2147483648
  %v3923 = vxor.u32 %v3907, 2147483648
  %v3924 = vmul.f32 %v3908, 1.442695
  %v3925 = vpow.pop %v3924
  %v3926 = vmul.f32 %v3909, 1.442695
  %v3927 = vpow.pop %v3926
  %v3928 = vmul.f32 %v3910, 1.442695
  %v3929 = vpow.pop %v3928
  %v3930 = vmul.f32 %v3911, 1.442695
  %v3931 = vpow.pop %v3930
  %v3932 = vmul.f32 %v3912, 1.442695
  %v3933 = vpow.pop %v3932
  %v3934 = vmul.f32 %v3913, 1.442695
  %v3935 = vpow.pop %v3934
  %v3936 = vmul.f32 %v3914, 1.442695
  %v3937 = vpow.pop %v3936
  %v3938 = vmul.f32 %v3915, 1.442695
  %v3939 = vpow.pop %v3938
  %v3940 = vmul.f32 %v3916, 1.442695
  %v3941 = vpow.pop %v3940
  %v3942 = vmul.f32 %v3917, 1.442695
  %v3943 = vpow.pop %v3942
  %v3944 = vmul.f32 %v3918, 1.442695
  %v3945 = vpow.pop %v3944
  %v3946 = vmul.f32 %v3919, 1.442695
  %v3947 = vpow.pop %v3946
  %v3948 = vmul.f32 %v3920, 1.442695
  %v3949 = vpow.pop %v3948
  %v3950 = vmul.f32 %v3921, 1.442695
  %v3951 = vpow.pop %v3950
  %v3952 = vmul.f32 %v3922, 1.442695
  %v3953 = vpow.pop %v3952
  %v3954 = vmul.f32 %v3923, 1.442695
  %v3955 = vpow.pop %v3954
  %v3956 = vadd.f32 %v3925, 1.0
  %v3957 = vadd.f32 %v3927, 1.0
  %v3958 = vadd.f32 %v3929, 1.0
  %v3959 = vadd.f32 %v3931, 1.0
  %v3960 = vadd.f32 %v3933, 1.0
  %v3961 = vadd.f32 %v3935, 1.0
  %v3962 = vadd.f32 %v3937, 1.0
  %v3963 = vadd.f32 %v3939, 1.0
  %v3964 = vadd.f32 %v3941, 1.0
  %v3965 = vadd.f32 %v3943, 1.0
  %v3966 = vadd.f32 %v3945, 1.0
  %v3967 = vadd.f32 %v3947, 1.0
  %v3968 = vadd.f32 %v3949, 1.0
  %v3969 = vadd.f32 %v3951, 1.0
  %v3970 = vadd.f32 %v3953, 1.0
  %v3971 = vadd.f32 %v3955, 1.0
  %v3972 = vrcp.pop %v3956
  %v3973 = vmul.f32 1.0, %v3972
  %v3974 = vrcp.pop %v3957
  %v3975 = vmul.f32 1.0, %v3974
  %v3976 = vrcp.pop %v3958
  %v3977 = vmul.f32 1.0, %v3976
  %v3978 = vrcp.pop %v3959
  %v3979 = vmul.f32 1.0, %v3978
  %v3980 = vrcp.pop %v3960
  %v3981 = vmul.f32 1.0, %v3980
  %v3982 = vrcp.pop %v3961
  %v3983 = vmul.f32 1.0, %v3982
  %v3984 = vrcp.pop %v3962
  %v3985 = vmul.f32 1.0, %v3984
  %v3986 = vrcp.pop %v3963
  %v3987 = vmul.f32 1.0, %v3986
  %v3988 = vrcp.pop %v3964
  %v3989 = vmul.f32 1.0, %v3988
  %v3990 = vrcp.pop %v3965
  %v3991 = vmul.f32 1.0, %v3990
  %v3992 = vrcp.pop %v3966
  %v3993 = vmul.f32 1.0, %v3992
  %v3994 = vrcp.pop %v3967
  %v3995 = vmul.f32 1.0, %v3994
  %v3996 = vrcp.pop %v3968
  %v3997 = vmul.f32 1.0, %v3996
  %v3998 = vrcp.pop %v3969
  %v3999 = vmul.f32 1.0, %v3998
  %v4000 = vrcp.pop %v3970
  %v4001 = vmul.f32 1.0, %v4000
  %v4002 = vrcp.pop %v3971
  %v4003 = vmul.f32 1.0, %v4002
  %v4004 = vmul.f32 %v3830, %v3973
  %v4005 = vmul.f32 %v3833, %v3975
  %v4006 = vmul.f32 %v3838, %v3977
  %v4007 = vmul.f32 %v3841, %v3979
  %v4008 = vmul.f32 %v3846, %v3981
  %v4009 = vmul.f32 %v3849, %v3983
  %v4010 = vmul.f32 %v3854, %v3985
  %v4011 = vmul.f32 %v3857, %v3987
  %v4012 = vmul.f32 %v3862, %v3989
  %v4013 = vmul.f32 %v3865, %v3991
  %v4014 = vmul.f32 %v3870, %v3993
  %v4015 = vmul.f32 %v3873, %v3995
  %v4016 = vmul.f32 %v3878, %v3997
  %v4017 = vmul.f32 %v3881, %v3999
  %v4018 = vmul.f32 %v3886, %v4001
  %v4019 = vmul.f32 %v3889, %v4003
  %v4020 = vpack.c.bf16 %v4005, %v4004
  %v4021 = vpack.c.bf16 %v4007, %v4006
  %v4022 = vpack.c.bf16 %v4009, %v4008
  %v4023 = vpack.c.bf16 %v4011, %v4010
  %v4024 = vpack.c.bf16 %v4013, %v4012
  %v4025 = vpack.c.bf16 %v4015, %v4014
  %v4026 = vpack.c.bf16 %v4017, %v4016
  %v4027 = vpack.c.bf16 %v4019, %v4018
  %v4028 = vld [vmem:[%s22] sm:$0xf]
  %v4029 = vld [vmem:[%s22 + $0x4] sm:$0xf]
  %v4030 = vld [vmem:[%s22 + $0x8] sm:$0xf]
  %v4031 = vld [vmem:[%s22 + $0xc] sm:$0xf]
  %v4032 = vld [vmem:[%s22 + $0x10] sm:$0xf]
  %v4033 = vld [vmem:[%s22 + $0x14] sm:$0xf]
  %v4034 = vld [vmem:[%s22 + $0x18] sm:$0xf]
  %v4035 = vld [vmem:[%s22 + $0x1c] sm:$0xf]
  %v4036 = vld [vmem:[%s22 + $0x20] sm:$0xf]
  %v4037 = vld [vmem:[%s22 + $0x24] sm:$0xf]
  %v4038 = vld [vmem:[%s22 + $0x28] sm:$0xf]
  %v4039 = vld [vmem:[%s22 + $0x2c] sm:$0xf]
  %v4040 = vld [vmem:[%s22 + $0x30] sm:$0xf]
  %v4041 = vld [vmem:[%s22 + $0x34] sm:$0xf]
  %v4042 = vld [vmem:[%s22 + $0x38] sm:$0xf]
  %v4043 = vld [vmem:[%s22 + $0x3c] sm:$0xf]
  %v4044 = vld [vmem:[%s20 + $0x4] sm:$0xf]
  %v4045 = vld [vmem:[%s20 + $0x14] sm:$0xf]
  %v4046 = vld [vmem:[%s20 + $0x24] sm:$0xf]
  %v4047 = vld [vmem:[%s20 + $0x34] sm:$0xf]
  %v4048 = vld [vmem:[%s20 + $0x44] sm:$0xf]
  %v4049 = vld [vmem:[%s20 + $0x54] sm:$0xf]
  %v4050 = vld [vmem:[%s20 + $0x64] sm:$0xf]
  %v4051 = vld [vmem:[%s20 + $0x74] sm:$0xf]
  %v4052 = vld [vmem:[%s20 + $0x84] sm:$0xf]
  %v4053 = vld [vmem:[%s20 + $0x94] sm:$0xf]
  %v4054 = vld [vmem:[%s20 + $0xa4] sm:$0xf]
  %v4055 = vld [vmem:[%s20 + $0xb4] sm:$0xf]
  %v4056 = vld [vmem:[%s20 + $0xc4] sm:$0xf]
  %v4057 = vld [vmem:[%s20 + $0xd4] sm:$0xf]
  %v4058 = vld [vmem:[%s20 + $0xe4] sm:$0xf]
  %v4059 = vld [vmem:[%s20 + $0xf4] sm:$0xf]
  %v4060 = vld [vmem:[%s21 + $0x1] sm:$0x1]
  %v4062 = vlaneseq
  %v4063 = vshrl.u32 %v4062, 7
  %v4064 = vsub.s32 0, %v4063
  %v4065 = vrot.slane %v4060, %v4064
  %v4083 = vunpack.c.l.b16 %v4044
  %v4084 = vunpack.c.l.b16 %v4045
  %v4085 = vunpack.c.l.b16 %v4046
  %v4086 = vunpack.c.l.b16 %v4047
  %v4087 = vunpack.c.l.b16 %v4048
  %v4088 = vunpack.c.l.b16 %v4049
  %v4089 = vunpack.c.l.b16 %v4050
  %v4090 = vunpack.c.l.b16 %v4051
  %v4091 = vunpack.c.l.b16 %v4052
  %v4092 = vunpack.c.l.b16 %v4053
  %v4093 = vunpack.c.l.b16 %v4054
  %v4094 = vunpack.c.l.b16 %v4055
  %v4095 = vunpack.c.l.b16 %v4056
  %v4096 = vunpack.c.l.b16 %v4057
  %v4097 = vunpack.c.l.b16 %v4058
  %v4098 = vunpack.c.l.b16 %v4059
  %v4099 = vpack.c.b16 %v4084, %v4083
  %v4100 = vpack.c.b16 %v4086, %v4085
  %v4101 = vpack.c.b16 %v4088, %v4087
  %v4102 = vpack.c.b16 %v4090, %v4089
  %v4103 = vpack.c.b16 %v4092, %v4091
  %v4104 = vpack.c.b16 %v4094, %v4093
  %v4105 = vpack.c.b16 %v4096, %v4095
  %v4106 = vpack.c.b16 %v4098, %v4097
  %4115 = vmatprep.subr.bf16.mxu0 0
  %4116 = vmatpush1.bf16.msra.mxu0 %v4099
  %4117 = vmatprep.subr.bf16.mxu0 0
  %4118 = vmatpush1.bf16.msra.mxu0 %v4100
  %4119 = vmatprep.subr.bf16.mxu0 0
  %4120 = vmatpush1.bf16.msra.mxu0 %v4101
  %4121 = vmatprep.subr.bf16.mxu0 0
  %4122 = vmatpush1.bf16.msra.mxu0 %v4102
  %4123 = vmatprep.subr.bf16.mxu0 0
  %4124 = vmatpush1.bf16.msra.mxu0 %v4103
  %4125 = vmatprep.subr.bf16.mxu0 0
  %4126 = vmatpush1.bf16.msra.mxu0 %v4104
  %4127 = vmatprep.subr.bf16.mxu0 0
  %4128 = vmatpush1.bf16.msra.mxu0 %v4105
  %4129 = vmatprep.subr.bf16.mxu0 0
  %4130 = vmatpush1.bf16.msra.mxu0 %v4106
  %4131 = vmatprep.subr.bf16.mxu0 0
  %4132 = vmatpush1.bf16.msra.mxu0 0
  %4133 = vmatprep.subr.bf16.mxu0 0
  %4134 = vmatpush1.bf16.msra.mxu0 0
  %4135 = vmatprep.subr.bf16.mxu0 0
  %4136 = vmatpush1.bf16.msra.mxu0 0
  %4137 = vmatprep.subr.bf16.mxu0 0
  %4138 = vmatpush1.bf16.msra.mxu0 0
  %4139 = vmatprep.subr.bf16.mxu0 0
  %4140 = vmatpush1.bf16.msra.mxu0 0
  %4141 = vmatprep.subr.bf16.mxu0 0
  %4142 = vmatpush1.bf16.msra.mxu0 0
  %4143 = vmatprep.subr.bf16.mxu0 0
  %4144 = vmatpush1.bf16.msra.mxu0 0
  %4145 = vmatprep.subr.bf16.mxu0 0
  %4146 = vmatpush1.bf16.msra.mxu0 0
  %4147 = vmatprep.mubr.bf16.mxu0 0
  %4148 = vmatmul.mubr.bf16.gmra.mrb[0].mxu0 %v3716
  %v4149 = vpop.f32.mrb[0].mxu0
  %v4150 = vadd.f32 %v4065, %v4149
  %v4151 = vpop.f32.mrb[0].mxu0
  %v4152 = vpop.f32.mrb[0].mxu0
  %v4153 = vadd.f32 %v4065, %v4152
  %v4154 = vpop.f32.mrb[0].mxu0
  %4155 = vmatprep.mubr.bf16.mxu0 0
  %4156 = vmatmul.mubr.bf16.gmra.mrb[0].mxu0 %v3717
  %v4157 = vpop.f32.mrb[0].mxu0
  %v4158 = vadd.f32 %v4065, %v4157
  %v4159 = vpop.f32.mrb[0].mxu0
  %v4160 = vpop.f32.mrb[0].mxu0
  %v4161 = vadd.f32 %v4065, %v4160
  %v4162 = vpop.f32.mrb[0].mxu0
  %4163 = vmatprep.mubr.bf16.mxu0 0
  %4164 = vmatmul.mubr.bf16.gmra.mrb[0].mxu0 %v3718
  %v4165 = vpop.f32.mrb[0].mxu0
  %v4166 = vadd.f32 %v4065, %v4165
  %v4167 = vpop.f32.mrb[0].mxu0
  %v4168 = vpop.f32.mrb[0].mxu0
  %v4169 = vadd.f32 %v4065, %v4168
  %v4170 = vpop.f32.mrb[0].mxu0
  %4171 = vmatprep.mubr.bf16.mxu0 0
  %4172 = vmatmul.mubr.bf16.gmra.mrb[0].mxu0 %v3719
  %v4173 = vpop.f32.mrb[0].mxu0
  %v4174 = vadd.f32 %v4065, %v4173
  %v4175 = vpop.f32.mrb[0].mxu0
  %v4176 = vpop.f32.mrb[0].mxu0
  %v4177 = vadd.f32 %v4065, %v4176
  %v4178 = vpop.f32.mrb[0].mxu0
  %4179 = vmatprep.mubr.bf16.mxu0 0
  %4180 = vmatmul.mubr.bf16.gmra.mrb[0].mxu0 %v3720
  %v4181 = vpop.f32.mrb[0].mxu0
  %v4182 = vadd.f32 %v4065, %v4181
  %v4183 = vpop.f32.mrb[0].mxu0
  %v4184 = vpop.f32.mrb[0].mxu0
  %v4185 = vadd.f32 %v4065, %v4184
  %v4186 = vpop.f32.mrb[0].mxu0
  %4187 = vmatprep.mubr.bf16.mxu0 0
  %4188 = vmatmul.mubr.bf16.gmra.mrb[0].mxu0 %v3721
  %v4189 = vpop.f32.mrb[0].mxu0
  %v4190 = vadd.f32 %v4065, %v4189
  %v4191 = vpop.f32.mrb[0].mxu0
  %v4192 = vpop.f32.mrb[0].mxu0
  %v4193 = vadd.f32 %v4065, %v4192
  %v4194 = vpop.f32.mrb[0].mxu0
  %4195 = vmatprep.mubr.bf16.mxu0 0
  %4196 = vmatmul.mubr.bf16.gmra.mrb[0].mxu0 %v3722
  %v4197 = vpop.f32.mrb[0].mxu0
  %v4198 = vadd.f32 %v4065, %v4197
  %v4199 = vpop.f32.mrb[0].mxu0
  %v4200 = vpop.f32.mrb[0].mxu0
  %v4201 = vadd.f32 %v4065, %v4200
  %v4202 = vpop.f32.mrb[0].mxu0
  %4203 = vmatprep.mubr.bf16.mxu0 0
  %4204 = vmatmul.mubr.bf16.gmra.mrb[0].mxu0 %v3723
  %v4205 = vpop.f32.mrb[0].mxu0
  %v4206 = vadd.f32 %v4065, %v4205
  %v4207 = vpop.f32.mrb[0].mxu0
  %v4208 = vpop.f32.mrb[0].mxu0
  %v4209 = vadd.f32 %v4065, %v4208
  %v4210 = vpop.f32.mrb[0].mxu0
  %4211 = vdwg.mxu0
  %v4212 = vmul.f32 %v4150, 1.702
  %v4213 = vmul.f32 %v4153, 1.702
  %v4214 = vmul.f32 %v4158, 1.702
  %v4215 = vmul.f32 %v4161, 1.702
  %v4216 = vmul.f32 %v4166, 1.702
  %v4217 = vmul.f32 %v4169, 1.702
  %v4218 = vmul.f32 %v4174, 1.702
  %v4219 = vmul.f32 %v4177, 1.702
  %v4220 = vmul.f32 %v4182, 1.702
  %v4221 = vmul.f32 %v4185, 1.702
  %v4222 = vmul.f32 %v4190, 1.702
  %v4223 = vmul.f32 %v4193, 1.702
  %v4224 = vmul.f32 %v4198, 1.702
  %v4225 = vmul.f32 %v4201, 1.702
  %v4226 = vmul.f32 %v4206, 1.702
  %v4227 = vmul.f32 %v4209, 1.702
  %v4228 = vxor.u32 %v4212, 2147483648
  %v4229 = vxor.u32 %v4213, 2147483648
  %v4230 = vxor.u32 %v4214, 2147483648
  %v4231 = vxor.u32 %v4215, 2147483648
  %v4232 = vxor.u32 %v4216, 2147483648
  %v4233 = vxor.u32 %v4217, 2147483648
  %v4234 = vxor.u32 %v4218, 2147483648
  %v4235 = vxor.u32 %v4219, 2147483648
  %v4236 = vxor.u32 %v4220, 2147483648
  %v4237 = vxor.u32 %v4221, 2147483648
  %v4238 = vxor.u32 %v4222, 2147483648
  %v4239 = vxor.u32 %v4223, 2147483648
  %v4240 = vxor.u32 %v4224, 2147483648
  %v4241 = vxor.u32 %v4225, 2147483648
  %v4242 = vxor.u32 %v4226, 2147483648
  %v4243 = vxor.u32 %v4227, 2147483648
  %v4244 = vmul.f32 %v4228, 1.442695
  %v4245 = vpow.pop %v4244
  %v4246 = vmul.f32 %v4229, 1.442695
  %v4247 = vpow.pop %v4246
  %v4248 = vmul.f32 %v4230, 1.442695
  %v4249 = vpow.pop %v4248
  %v4250 = vmul.f32 %v4231, 1.442695
  %v4251 = vpow.pop %v4250
  %v4252 = vmul.f32 %v4232, 1.442695
  %v4253 = vpow.pop %v4252
  %v4254 = vmul.f32 %v4233, 1.442695
  %v4255 = vpow.pop %v4254
  %v4256 = vmul.f32 %v4234, 1.442695
  %v4257 = vpow.pop %v4256
  %v4258 = vmul.f32 %v4235, 1.442695
  %v4259 = vpow.pop %v4258
  %v4260 = vmul.f32 %v4236, 1.442695
  %v4261 = vpow.pop %v4260
  %v4262 = vmul.f32 %v4237, 1.442695
  %v4263 = vpow.pop %v4262
  %v4264 = vmul.f32 %v4238, 1.442695
  %v4265 = vpow.pop %v4264
  %v4266 = vmul.f32 %v4239, 1.442695
  %v4267 = vpow.pop %v4266
  %v4268 = vmul.f32 %v4240, 1.442695
  %v4269 = vpow.pop %v4268
  %v4270 = vmul.f32 %v4241, 1.442695
  %v4271 = vpow.pop %v4270
  %v4272 = vmul.f32 %v4242, 1.442695
  %v4273 = vpow.pop %v4272
  %v4274 = vmul.f32 %v4243, 1.442695
  %v4275 = vpow.pop %v4274
  %v4276 = vadd.f32 %v4245, 1.0
  %v4277 = vadd.f32 %v4247, 1.0
  %v4278 = vadd.f32 %v4249, 1.0
  %v4279 = vadd.f32 %v4251, 1.0
  %v4280 = vadd.f32 %v4253, 1.0
  %v4281 = vadd.f32 %v4255, 1.0
  %v4282 = vadd.f32 %v4257, 1.0
  %v4283 = vadd.f32 %v4259, 1.0
  %v4284 = vadd.f32 %v4261, 1.0
  %v4285 = vadd.f32 %v4263, 1.0
  %v4286 = vadd.f32 %v4265, 1.0
  %v4287 = vadd.f32 %v4267, 1.0
  %v4288 = vadd.f32 %v4269, 1.0
  %v4289 = vadd.f32 %v4271, 1.0
  %v4290 = vadd.f32 %v4273, 1.0
  %v4291 = vadd.f32 %v4275, 1.0
  %v4292 = vrcp.pop %v4276
  %v4293 = vmul.f32 1.0, %v4292
  %v4294 = vrcp.pop %v4277
  %v4295 = vmul.f32 1.0, %v4294
  %v4296 = vrcp.pop %v4278
  %v4297 = vmul.f32 1.0, %v4296
  %v4298 = vrcp.pop %v4279
  %v4299 = vmul.f32 1.0, %v4298
  %v4300 = vrcp.pop %v4280
  %v4301 = vmul.f32 1.0, %v4300
  %v4302 = vrcp.pop %v4281
  %v4303 = vmul.f32 1.0, %v4302
  %v4304 = vrcp.pop %v4282
  %v4305 = vmul.f32 1.0, %v4304
  %v4306 = vrcp.pop %v4283
  %v4307 = vmul.f32 1.0, %v4306
  %v4308 = vrcp.pop %v4284
  %v4309 = vmul.f32 1.0, %v4308
  %v4310 = vrcp.pop %v4285
  %v4311 = vmul.f32 1.0, %v4310
  %v4312 = vrcp.pop %v4286
  %v4313 = vmul.f32 1.0, %v4312
  %v4314 = vrcp.pop %v4287
  %v4315 = vmul.f32 1.0, %v4314
  %v4316 = vrcp.pop %v4288
  %v4317 = vmul.f32 1.0, %v4316
  %v4318 = vrcp.pop %v4289
  %v4319 = vmul.f32 1.0, %v4318
  %v4320 = vrcp.pop %v4290
  %v4321 = vmul.f32 1.0, %v4320
  %v4322 = vrcp.pop %v4291
  %v4323 = vmul.f32 1.0, %v4322
  %v4324 = vmul.f32 %v4150, %v4293
  %v4325 = vmul.f32 %v4153, %v4295
  %v4326 = vmul.f32 %v4158, %v4297
  %v4327 = vmul.f32 %v4161, %v4299
  %v4328 = vmul.f32 %v4166, %v4301
  %v4329 = vmul.f32 %v4169, %v4303
  %v4330 = vmul.f32 %v4174, %v4305
  %v4331 = vmul.f32 %v4177, %v4307
  %v4332 = vmul.f32 %v4182, %v4309
  %v4333 = vmul.f32 %v4185, %v4311
  %v4334 = vmul.f32 %v4190, %v4313
  %v4335 = vmul.f32 %v4193, %v4315
  %v4336 = vmul.f32 %v4198, %v4317
  %v4337 = vmul.f32 %v4201, %v4319
  %v4338 = vmul.f32 %v4206, %v4321
  %v4339 = vmul.f32 %v4209, %v4323
  %v4340 = vpack.c.bf16 %v4325, %v4324
  %v4341 = vpack.c.bf16 %v4327, %v4326
  %v4342 = vpack.c.bf16 %v4329, %v4328
  %v4343 = vpack.c.bf16 %v4331, %v4330
  %v4344 = vpack.c.bf16 %v4333, %v4332
  %v4345 = vpack.c.bf16 %v4335, %v4334
  %v4346 = vpack.c.bf16 %v4337, %v4336
  %v4347 = vpack.c.bf16 %v4339, %v4338
  %v4348 = vld [vmem:[%s22 + $0x40] sm:$0xf]
  %v4349 = vld [vmem:[%s22 + $0x44] sm:$0xf]
  %v4350 = vld [vmem:[%s22 + $0x48] sm:$0xf]
  %v4351 = vld [vmem:[%s22 + $0x4c] sm:$0xf]
  %v4352 = vld [vmem:[%s22 + $0x50] sm:$0xf]
  %v4353 = vld [vmem:[%s22 + $0x54] sm:$0xf]
  %v4354 = vld [vmem:[%s22 + $0x58] sm:$0xf]
  %v4355 = vld [vmem:[%s22 + $0x5c] sm:$0xf]
  %v4356 = vld [vmem:[%s22 + $0x60] sm:$0xf]
  %v4357 = vld [vmem:[%s22 + $0x64] sm:$0xf]
  %v4358 = vld [vmem:[%s22 + $0x68] sm:$0xf]
  %v4359 = vld [vmem:[%s22 + $0x6c] sm:$0xf]
  %v4360 = vld [vmem:[%s22 + $0x70] sm:$0xf]
  %v4361 = vld [vmem:[%s22 + $0x74] sm:$0xf]
  %v4362 = vld [vmem:[%s22 + $0x78] sm:$0xf]
  %v4363 = vld [vmem:[%s22 + $0x7c] sm:$0xf]
  %v4380 = vunpack.c.l.b16 %v4348
  %v4381 = vunpack.c.l.b16 %v4349
  %v4382 = vunpack.c.l.b16 %v4350
  %v4383 = vunpack.c.l.b16 %v4351
  %v4384 = vunpack.c.l.b16 %v4352
  %v4385 = vunpack.c.l.b16 %v4353
  %v4386 = vunpack.c.l.b16 %v4354
  %v4387 = vunpack.c.l.b16 %v4355
  %v4388 = vunpack.c.l.b16 %v4356
  %v4389 = vunpack.c.l.b16 %v4357
  %v4390 = vunpack.c.l.b16 %v4358
  %v4391 = vunpack.c.l.b16 %v4359
  %v4392 = vunpack.c.l.b16 %v4360
  %v4393 = vunpack.c.l.b16 %v4361
  %v4394 = vunpack.c.l.b16 %v4362
  %v4395 = vunpack.c.l.b16 %v4363
  %v4396 = vpack.c.b16 %v4381, %v4380
  %v4397 = vpack.c.b16 %v4383, %v4382
  %v4398 = vpack.c.b16 %v4385, %v4384
  %v4399 = vpack.c.b16 %v4387, %v4386
  %v4400 = vpack.c.b16 %v4389, %v4388
  %v4401 = vpack.c.b16 %v4391, %v4390
  %v4402 = vpack.c.b16 %v4393, %v4392
  %v4403 = vpack.c.b16 %v4395, %v4394
  %4412 = vmatprep.subr.bf16.mxu0 0
  %4413 = vmatpush1.bf16.msra.mxu0 %v4396
  %4414 = vmatprep.subr.bf16.mxu0 0
  %4415 = vmatpush1.bf16.msra.mxu0 %v4397
  %4416 = vmatprep.subr.bf16.mxu0 0
  %4417 = vmatpush1.bf16.msra.mxu0 %v4398
  %4418 = vmatprep.subr.bf16.mxu0 0
  %4419 = vmatpush1.bf16.msra.mxu0 %v4399
  %4420 = vmatprep.subr.bf16.mxu0 0
  %4421 = vmatpush1.bf16.msra.mxu0 %v4400
  %4422 = vmatprep.subr.bf16.mxu0 0
  %4423 = vmatpush1.bf16.msra.mxu0 %v4401
  %4424 = vmatprep.subr.bf16.mxu0 0
  %4425 = vmatpush1.bf16.msra.mxu0 %v4402
  %4426 = vmatprep.subr.bf16.mxu0 0
  %4427 = vmatpush1.bf16.msra.mxu0 %v4403
  %4428 = vmatprep.subr.bf16.mxu0 0
  %4429 = vmatpush1.bf16.msra.mxu0 0
  %4430 = vmatprep.subr.bf16.mxu0 0
  %4431 = vmatpush1.bf16.msra.mxu0 0
  %4432 = vmatprep.subr.bf16.mxu0 0
  %4433 = vmatpush1.bf16.msra.mxu0 0
  %4434 = vmatprep.subr.bf16.mxu0 0
  %4435 = vmatpush1.bf16.msra.mxu0 0
  %4436 = vmatprep.subr.bf16.mxu0 0
  %4437 = vmatpush1.bf16.msra.mxu0 0
  %4438 = vmatprep.subr.bf16.mxu0 0
  %4439 = vmatpush1.bf16.msra.mxu0 0
  %4440 = vmatprep.subr.bf16.mxu0 0
  %4441 = vmatpush1.bf16.msra.mxu0 0
  %4442 = vmatprep.subr.bf16.mxu0 0
  %4443 = vmatpush1.bf16.msra.mxu0 0
  %4444 = vmatprep.mubr.bf16.mxu0 0
  %4445 = vmatmul.mubr.bf16.gmra.mrb[0].mxu0 %v4340
  %v4446 = vpop.f32.mrb[0].mxu0
  %v4447 = vadd.f32 0.0, %v4446
  %v4448 = vpop.f32.mrb[0].mxu0
  %v4449 = vpop.f32.mrb[0].mxu0
  %v4450 = vadd.f32 0.0, %v4449
  %v4451 = vpop.f32.mrb[0].mxu0
  %4452 = vmatprep.mubr.bf16.mxu0 0
  %4453 = vmatmul.mubr.bf16.gmra.mrb[0].mxu0 %v4341
  %v4454 = vpop.f32.mrb[0].mxu0
  %v4455 = vadd.f32 0.0, %v4454
  %v4456 = vpop.f32.mrb[0].mxu0
  %v4457 = vpop.f32.mrb[0].mxu0
  %v4458 = vadd.f32 0.0, %v4457
  %v4459 = vpop.f32.mrb[0].mxu0
  %4460 = vmatprep.mubr.bf16.mxu0 0
  %4461 = vmatmul.mubr.bf16.gmra.mrb[0].mxu0 %v4342
  %v4462 = vpop.f32.mrb[0].mxu0
  %v4463 = vadd.f32 0.0, %v4462
  %v4464 = vpop.f32.mrb[0].mxu0
  %v4465 = vpop.f32.mrb[0].mxu0
  %v4466 = vadd.f32 0.0, %v4465
  %v4467 = vpop.f32.mrb[0].mxu0
  %4468 = vmatprep.mubr.bf16.mxu0 0
  %4469 = vmatmul.mubr.bf16.gmra.mrb[0].mxu0 %v4343
  %v4470 = vpop.f32.mrb[0].mxu0
  %v4471 = vadd.f32 0.0, %v4470
  %v4472 = vpop.f32.mrb[0].mxu0
  %v4473 = vpop.f32.mrb[0].mxu0
  %v4474 = vadd.f32 0.0, %v4473
  %v4475 = vpop.f32.mrb[0].mxu0
  %4476 = vmatprep.mubr.bf16.mxu0 0
  %4477 = vmatmul.mubr.bf16.gmra.mrb[0].mxu0 %v4344
  %v4478 = vpop.f32.mrb[0].mxu0
  %v4479 = vadd.f32 0.0, %v4478
  %v4480 = vpop.f32.mrb[0].mxu0
  %v4481 = vpop.f32.mrb[0].mxu0
  %v4482 = vadd.f32 0.0, %v4481
  %v4483 = vpop.f32.mrb[0].mxu0
  %4484 = vmatprep.mubr.bf16.mxu0 0
  %4485 = vmatmul.mubr.bf16.gmra.mrb[0].mxu0 %v4345
  %v4486 = vpop.f32.mrb[0].mxu0
  %v4487 = vadd.f32 0.0, %v4486
  %v4488 = vpop.f32.mrb[0].mxu0
  %v4489 = vpop.f32.mrb[0].mxu0
  %v4490 = vadd.f32 0.0, %v4489
  %v4491 = vpop.f32.mrb[0].mxu0
  %4492 = vmatprep.mubr.bf16.mxu0 0
  %4493 = vmatmul.mubr.bf16.gmra.mrb[0].mxu0 %v4346
  %v4494 = vpop.f32.mrb[0].mxu0
  %v4495 = vadd.f32 0.0, %v4494
  %v4496 = vpop.f32.mrb[0].mxu0
  %v4497 = vpop.f32.mrb[0].mxu0
  %v4498 = vadd.f32 0.0, %v4497
  %v4499 = vpop.f32.mrb[0].mxu0
  %4500 = vmatprep.mubr.bf16.mxu0 0
  %4501 = vmatmul.mubr.bf16.gmra.mrb[0].mxu0 %v4347
  %v4502 = vpop.f32.mrb[0].mxu0
  %v4503 = vadd.f32 0.0, %v4502
  %v4504 = vpop.f32.mrb[0].mxu0
  %v4505 = vpop.f32.mrb[0].mxu0
  %v4506 = vadd.f32 0.0, %v4505
  %v4507 = vpop.f32.mrb[0].mxu0
  %4508 = vdwg.mxu0
  %v4525 = vunpack.c.l.b16 %v4028
  %v4526 = vunpack.c.l.b16 %v4029
  %v4527 = vunpack.c.l.b16 %v4030
  %v4528 = vunpack.c.l.b16 %v4031
  %v4529 = vunpack.c.l.b16 %v4032
  %v4530 = vunpack.c.l.b16 %v4033
  %v4531 = vunpack.c.l.b16 %v4034
  %v4532 = vunpack.c.l.b16 %v4035
  %v4533 = vunpack.c.l.b16 %v4036
  %v4534 = vunpack.c.l.b16 %v4037
  %v4535 = vunpack.c.l.b16 %v4038
  %v4536 = vunpack.c.l.b16 %v4039
  %v4537 = vunpack.c.l.b16 %v4040
  %v4538 = vunpack.c.l.b16 %v4041
  %v4539 = vunpack.c.l.b16 %v4042
  %v4540 = vunpack.c.l.b16 %v4043
  %v4541 = vpack.c.b16 %v4526, %v4525
  %v4542 = vpack.c.b16 %v4528, %v4527
  %v4543 = vpack.c.b16 %v4530, %v4529
  %v4544 = vpack.c.b16 %v4532, %v4531
  %v4545 = vpack.c.b16 %v4534, %v4533
  %v4546 = vpack.c.b16 %v4536, %v4535
  %v4547 = vpack.c.b16 %v4538, %v4537
  %v4548 = vpack.c.b16 %v4540, %v4539
  %4557 = vmatprep.subr.bf16.mxu0 0
  %4558 = vmatpush1.bf16.msra.mxu0 %v4541
  %4559 = vmatprep.subr.bf16.mxu0 0
  %4560 = vmatpush1.bf16.msra.mxu0 %v4542
  %4561 = vmatprep.subr.bf16.mxu0 0
  %4562 = vmatpush1.bf16.msra.mxu0 %v4543
  %4563 = vmatprep.subr.bf16.mxu0 0
  %4564 = vmatpush1.bf16.msra.mxu0 %v4544
  %4565 = vmatprep.subr.bf16.mxu0 0
  %4566 = vmatpush1.bf16.msra.mxu0 %v4545
  %4567 = vmatprep.subr.bf16.mxu0 0
  %4568 = vmatpush1.bf16.msra.mxu0 %v4546
  %4569 = vmatprep.subr.bf16.mxu0 0
  %4570 = vmatpush1.bf16.msra.mxu0 %v4547
  %4571 = vmatprep.subr.bf16.mxu0 0
  %4572 = vmatpush1.bf16.msra.mxu0 %v4548
  %4573 = vmatprep.subr.bf16.mxu0 0
  %4574 = vmatpush1.bf16.msra.mxu0 0
  %4575 = vmatprep.subr.bf16.mxu0 0
  %4576 = vmatpush1.bf16.msra.mxu0 0
  %4577 = vmatprep.subr.bf16.mxu0 0
  %4578 = vmatpush1.bf16.msra.mxu0 0
  %4579 = vmatprep.subr.bf16.mxu0 0
  %4580 = vmatpush1.bf16.msra.mxu0 0
  %4581 = vmatprep.subr.bf16.mxu0 0
  %4582 = vmatpush1.bf16.msra.mxu0 0
  %4583 = vmatprep.subr.bf16.mxu0 0
  %4584 = vmatpush1.bf16.msra.mxu0 0
  %4585 = vmatprep.subr.bf16.mxu0 0
  %4586 = vmatpush1.bf16.msra.mxu0 0
  %4587 = vmatprep.subr.bf16.mxu0 0
  %4588 = vmatpush1.bf16.msra.mxu0 0
  %4589 = vmatprep.mubr.bf16.mxu0 0
  %4590 = vmatmul.mubr.bf16.gmra.mrb[0].mxu0 %v4020
  %v4591 = vpop.f32.mrb[0].mxu0
  %v4592 = vadd.f32 %v4447, %v4591
  %v4593 = vpop.f32.mrb[0].mxu0
  %v4594 = vpop.f32.mrb[0].mxu0
  %v4595 = vadd.f32 %v4450, %v4594
  %v4596 = vpop.f32.mrb[0].mxu0
  %4597 = vmatprep.mubr.bf16.mxu0 0
  %4598 = vmatmul.mubr.bf16.gmra.mrb[0].mxu0 %v4021
  %v4599 = vpop.f32.mrb[0].mxu0
  %v4600 = vadd.f32 %v4455, %v4599
  %v4601 = vpop.f32.mrb[0].mxu0
  %v4602 = vpop.f32.mrb[0].mxu0
  %v4603 = vadd.f32 %v4458, %v4602
  %v4604 = vpop.f32.mrb[0].mxu0
  %4605 = vmatprep.mubr.bf16.mxu0 0
  %4606 = vmatmul.mubr.bf16.gmra.mrb[0].mxu0 %v4022
  %v4607 = vpop.f32.mrb[0].mxu0
  %v4608 = vadd.f32 %v4463, %v4607
  %v4609 = vpop.f32.mrb[0].mxu0
  %v4610 = vpop.f32.mrb[0].mxu0
  %v4611 = vadd.f32 %v4466, %v4610
  %v4612 = vpop.f32.mrb[0].mxu0
  %4613 = vmatprep.mubr.bf16.mxu0 0
  %4614 = vmatmul.mubr.bf16.gmra.mrb[0].mxu0 %v4023
  %v4615 = vpop.f32.mrb[0].mxu0
  %v4616 = vadd.f32 %v4471, %v4615
  %v4617 = vpop.f32.mrb[0].mxu0
  %v4618 = vpop.f32.mrb[0].mxu0
  %v4619 = vadd.f32 %v4474, %v4618
  %v4620 = vpop.f32.mrb[0].mxu0
  %4621 = vmatprep.mubr.bf16.mxu0 0
  %4622 = vmatmul.mubr.bf16.gmra.mrb[0].mxu0 %v4024
  %v4623 = vpop.f32.mrb[0].mxu0
  %v4624 = vadd.f32 %v4479, %v4623
  %v4625 = vpop.f32.mrb[0].mxu0
  %v4626 = vpop.f32.mrb[0].mxu0
  %v4627 = vadd.f32 %v4482, %v4626
  %v4628 = vpop.f32.mrb[0].mxu0
  %4629 = vmatprep.mubr.bf16.mxu0 0
  %4630 = vmatmul.mubr.bf16.gmra.mrb[0].mxu0 %v4025
  %v4631 = vpop.f32.mrb[0].mxu0
  %v4632 = vadd.f32 %v4487, %v4631
  %v4633 = vpop.f32.mrb[0].mxu0
  %v4634 = vpop.f32.mrb[0].mxu0
  %v4635 = vadd.f32 %v4490, %v4634
  %v4636 = vpop.f32.mrb[0].mxu0
  %4637 = vmatprep.mubr.bf16.mxu0 0
  %4638 = vmatmul.mubr.bf16.gmra.mrb[0].mxu0 %v4026
  %v4639 = vpop.f32.mrb[0].mxu0
  %v4640 = vadd.f32 %v4495, %v4639
  %v4641 = vpop.f32.mrb[0].mxu0
  %v4642 = vpop.f32.mrb[0].mxu0
  %v4643 = vadd.f32 %v4498, %v4642
  %v4644 = vpop.f32.mrb[0].mxu0
  %4645 = vmatprep.mubr.bf16.mxu0 0
  %4646 = vmatmul.mubr.bf16.gmra.mrb[0].mxu0 %v4027
  %v4647 = vpop.f32.mrb[0].mxu0
  %v4648 = vadd.f32 %v4503, %v4647
  %v4649 = vpop.f32.mrb[0].mxu0
  %v4650 = vpop.f32.mrb[0].mxu0
  %v4651 = vadd.f32 %v4506, %v4650
  %v4652 = vpop.f32.mrb[0].mxu0
  %4653 = vdwg.mxu0
  %v4654 = vld [vmem:[%s20 + $0x8] sm:$0xf]
  %v4655 = vld [vmem:[%s20 + $0x18] sm:$0xf]
  %v4656 = vld [vmem:[%s20 + $0x28] sm:$0xf]
  %v4657 = vld [vmem:[%s20 + $0x38] sm:$0xf]
  %v4658 = vld [vmem:[%s20 + $0x48] sm:$0xf]
  %v4659 = vld [vmem:[%s20 + $0x58] sm:$0xf]
  %v4660 = vld [vmem:[%s20 + $0x68] sm:$0xf]
  %v4661 = vld [vmem:[%s20 + $0x78] sm:$0xf]
  %v4662 = vld [vmem:[%s20 + $0x88] sm:$0xf]
  %v4663 = vld [vmem:[%s20 + $0x98] sm:$0xf]
  %v4664 = vld [vmem:[%s20 + $0xa8] sm:$0xf]
  %v4665 = vld [vmem:[%s20 + $0xb8] sm:$0xf]
  %v4666 = vld [vmem:[%s20 + $0xc8] sm:$0xf]
  %v4667 = vld [vmem:[%s20 + $0xd8] sm:$0xf]
  %v4668 = vld [vmem:[%s20 + $0xe8] sm:$0xf]
  %v4669 = vld [vmem:[%s20 + $0xf8] sm:$0xf]
  %v4670 = vld [vmem:[%s21 + $0x2] sm:$0x1]
  %v4672 = vlaneseq
  %v4673 = vshrl.u32 %v4672, 7
  %v4674 = vsub.s32 0, %v4673
  %v4675 = vrot.slane %v4670, %v4674
  %v4693 = vunpack.c.l.b16 %v4654
  %v4694 = vunpack.c.l.b16 %v4655
  %v4695 = vunpack.c.l.b16 %v4656
  %v4696 = vunpack.c.l.b16 %v4657
  %v4697 = vunpack.c.l.b16 %v4658
  %v4698 = vunpack.c.l.b16 %v4659
  %v4699 = vunpack.c.l.b16 %v4660
  %v4700 = vunpack.c.l.b16 %v4661
  %v4701 = vunpack.c.l.b16 %v4662
  %v4702 = vunpack.c.l.b16 %v4663
  %v4703 = vunpack.c.l.b16 %v4664
  %v4704 = vunpack.c.l.b16 %v4665
  %v4705 = vunpack.c.l.b16 %v4666
  %v4706 = vunpack.c.l.b16 %v4667
  %v4707 = vunpack.c.l.b16 %v4668
  %v4708 = vunpack.c.l.b16 %v4669
  %v4709 = vpack.c.b16 %v4694, %v4693
  %v4710 = vpack.c.b16 %v4696, %v4695
  %v4711 = vpack.c.b16 %v4698, %v4697
  %v4712 = vpack.c.b16 %v4700, %v4699
  %v4713 = vpack.c.b16 %v4702, %v4701
  %v4714 = vpack.c.b16 %v4704, %v4703
  %v4715 = vpack.c.b16 %v4706, %v4705
  %v4716 = vpack.c.b16 %v4708, %v4707
  %4725 = vmatprep.subr.bf16.mxu0 0
  %4726 = vmatpush1.bf16.msra.mxu0 %v4709
  %4727 = vmatprep.subr.bf16.mxu0 0
  %4728 = vmatpush1.bf16.msra.mxu0 %v4710
  %4729 = vmatprep.subr.bf16.mxu0 0
  %4730 = vmatpush1.bf16.msra.mxu0 %v4711
  %4731 = vmatprep.subr.bf16.mxu0 0
  %4732 = vmatpush1.bf16.msra.mxu0 %v4712
  %4733 = vmatprep.subr.bf16.mxu0 0
  %4734 = vmatpush1.bf16.msra.mxu0 %v4713
  %4735 = vmatprep.subr.bf16.mxu0 0
  %4736 = vmatpush1.bf16.msra.mxu0 %v4714
  %4737 = vmatprep.subr.bf16.mxu0 0
  %4738 = vmatpush1.bf16.msra.mxu0 %v4715
  %4739 = vmatprep.subr.bf16.mxu0 0
  %4740 = vmatpush1.bf16.msra.mxu0 %v4716
  %4741 = vmatprep.subr.bf16.mxu0 0
  %4742 = vmatpush1.bf16.msra.mxu0 0
  %4743 = vmatprep.subr.bf16.mxu0 0
  %4744 = vmatpush1.bf16.msra.mxu0 0
  %4745 = vmatprep.subr.bf16.mxu0 0
  %4746 = vmatpush1.bf16.msra.mxu0 0
  %4747 = vmatprep.subr.bf16.mxu0 0
  %4748 = vmatpush1.bf16.msra.mxu0 0
  %4749 = vmatprep.subr.bf16.mxu0 0
  %4750 = vmatpush1.bf16.msra.mxu0 0
  %4751 = vmatprep.subr.bf16.mxu0 0
  %4752 = vmatpush1.bf16.msra.mxu0 0
  %4753 = vmatprep.subr.bf16.mxu0 0
  %4754 = vmatpush1.bf16.msra.mxu0 0
  %4755 = vmatprep.subr.bf16.mxu0 0
  %4756 = vmatpush1.bf16.msra.mxu0 0
  %4757 = vmatprep.mubr.bf16.mxu0 0
  %4758 = vmatmul.mubr.bf16.gmra.mrb[0].mxu0 %v3716
  %v4759 = vpop.f32.mrb[0].mxu0
  %v4760 = vadd.f32 %v4675, %v4759
  %v4761 = vpop.f32.mrb[0].mxu0
  %v4762 = vpop.f32.mrb[0].mxu0
  %v4763 = vadd.f32 %v4675, %v4762
  %v4764 = vpop.f32.mrb[0].mxu0
  %4765 = vmatprep.mubr.bf16.mxu0 0
  %4766 = vmatmul.mubr.bf16.gmra.mrb[0].mxu0 %v3717
  %v4767 = vpop.f32.mrb[0].mxu0
  %v4768 = vadd.f32 %v4675, %v4767
  %v4769 = vpop.f32.mrb[0].mxu0
  %v4770 = vpop.f32.mrb[0].mxu0
  %v4771 = vadd.f32 %v4675, %v4770
  %v4772 = vpop.f32.mrb[0].mxu0
  %4773 = vmatprep.mubr.bf16.mxu0 0
  %4774 = vmatmul.mubr.bf16.gmra.mrb[0].mxu0 %v3718
  %v4775 = vpop.f32.mrb[0].mxu0
  %v4776 = vadd.f32 %v4675, %v4775
  %v4777 = vpop.f32.mrb[0].mxu0
  %v4778 = vpop.f32.mrb[0].mxu0
  %v4779 = vadd.f32 %v4675, %v4778
  %v4780 = vpop.f32.mrb[0].mxu0
  %4781 = vmatprep.mubr.bf16.mxu0 0
  %4782 = vmatmul.mubr.bf16.gmra.mrb[0].mxu0 %v3719
  %v4783 = vpop.f32.mrb[0].mxu0
  %v4784 = vadd.f32 %v4675, %v4783
  %v4785 = vpop.f32.mrb[0].mxu0
  %v4786 = vpop.f32.mrb[0].mxu0
  %v4787 = vadd.f32 %v4675, %v4786
  %v4788 = vpop.f32.mrb[0].mxu0
  %4789 = vmatprep.mubr.bf16.mxu0 0
  %4790 = vmatmul.mubr.bf16.gmra.mrb[0].mxu0 %v3720
  %v4791 = vpop.f32.mrb[0].mxu0
  %v4792 = vadd.f32 %v4675, %v4791
  %v4793 = vpop.f32.mrb[0].mxu0
  %v4794 = vpop.f32.mrb[0].mxu0
  %v4795 = vadd.f32 %v4675, %v4794
  %v4796 = vpop.f32.mrb[0].mxu0
  %4797 = vmatprep.mubr.bf16.mxu0 0
  %4798 = vmatmul.mubr.bf16.gmra.mrb[0].mxu0 %v3721
  %v4799 = vpop.f32.mrb[0].mxu0
  %v4800 = vadd.f32 %v4675, %v4799
  %v4801 = vpop.f32.mrb[0].mxu0
  %v4802 = vpop.f32.mrb[0].mxu0
  %v4803 = vadd.f32 %v4675, %v4802
  %v4804 = vpop.f32.mrb[0].mxu0
  %4805 = vmatprep.mubr.bf16.mxu0 0
  %4806 = vmatmul.mubr.bf16.gmra.mrb[0].mxu0 %v3722
  %v4807 = vpop.f32.mrb[0].mxu0
  %v4808 = vadd.f32 %v4675, %v4807
  %v4809 = vpop.f32.mrb[0].mxu0
  %v4810 = vpop.f32.mrb[0].mxu0
  %v4811 = vadd.f32 %v4675, %v4810
  %v4812 = vpop.f32.mrb[0].mxu0
  %4813 = vmatprep.mubr.bf16.mxu0 0
  %4814 = vmatmul.mubr.bf16.gmra.mrb[0].mxu0 %v3723
  %v4815 = vpop.f32.mrb[0].mxu0
  %v4816 = vadd.f32 %v4675, %v4815
  %v4817 = vpop.f32.mrb[0].mxu0
  %v4818 = vpop.f32.mrb[0].mxu0
  %v4819 = vadd.f32 %v4675, %v4818
  %v4820 = vpop.f32.mrb[0].mxu0
  %4821 = vdwg.mxu0
  %v4822 = vmul.f32 %v4760, 1.702
  %v4823 = vmul.f32 %v4763, 1.702
  %v4824 = vmul.f32 %v4768, 1.702
  %v4825 = vmul.f32 %v4771, 1.702
  %v4826 = vmul.f32 %v4776, 1.702
  %v4827 = vmul.f32 %v4779, 1.702
  %v4828 = vmul.f32 %v4784, 1.702
  %v4829 = vmul.f32 %v4787, 1.702
  %v4830 = vmul.f32 %v4792, 1.702
  %v4831 = vmul.f32 %v4795, 1.702
  %v4832 = vmul.f32 %v4800, 1.702
  %v4833 = vmul.f32 %v4803, 1.702
  %v4834 = vmul.f32 %v4808, 1.702
  %v4835 = vmul.f32 %v4811, 1.702
  %v4836 = vmul.f32 %v4816, 1.702
  %v4837 = vmul.f32 %v4819, 1.702
  %v4838 = vxor.u32 %v4822, 2147483648
  %v4839 = vxor.u32 %v4823, 2147483648
  %v4840 = vxor.u32 %v4824, 2147483648
  %v4841 = vxor.u32 %v4825, 2147483648
  %v4842 = vxor.u32 %v4826, 2147483648
  %v4843 = vxor.u32 %v4827, 2147483648
  %v4844 = vxor.u32 %v4828, 2147483648
  %v4845 = vxor.u32 %v4829, 2147483648
  %v4846 = vxor.u32 %v4830, 2147483648
  %v4847 = vxor.u32 %v4831, 2147483648
  %v4848 = vxor.u32 %v4832, 2147483648
  %v4849 = vxor.u32 %v4833, 2147483648
  %v4850 = vxor.u32 %v4834, 2147483648
  %v4851 = vxor.u32 %v4835, 2147483648
  %v4852 = vxor.u32 %v4836, 2147483648
  %v4853 = vxor.u32 %v4837, 2147483648
  %v4854 = vmul.f32 %v4838, 1.442695
  %v4855 = vpow.pop %v4854
  %v4856 = vmul.f32 %v4839, 1.442695
  %v4857 = vpow.pop %v4856
  %v4858 = vmul.f32 %v4840, 1.442695
  %v4859 = vpow.pop %v4858
  %v4860 = vmul.f32 %v4841, 1.442695
  %v4861 = vpow.pop %v4860
  %v4862 = vmul.f32 %v4842, 1.442695
  %v4863 = vpow.pop %v4862
  %v4864 = vmul.f32 %v4843, 1.442695
  %v4865 = vpow.pop %v4864
  %v4866 = vmul.f32 %v4844, 1.442695
  %v4867 = vpow.pop %v4866
  %v4868 = vmul.f32 %v4845, 1.442695
  %v4869 = vpow.pop %v4868
  %v4870 = vmul.f32 %v4846, 1.442695
  %v4871 = vpow.pop %v4870
  %v4872 = vmul.f32 %v4847, 1.442695
  %v4873 = vpow.pop %v4872
  %v4874 = vmul.f32 %v4848, 1.442695
  %v4875 = vpow.pop %v4874
  %v4876 = vmul.f32 %v4849, 1.442695
  %v4877 = vpow.pop %v4876
  %v4878 = vmul.f32 %v4850, 1.442695
  %v4879 = vpow.pop %v4878
  %v4880 = vmul.f32 %v4851, 1.442695
  %v4881 = vpow.pop %v4880
  %v4882 = vmul.f32 %v4852, 1.442695
  %v4883 = vpow.pop %v4882
  %v4884 = vmul.f32 %v4853, 1.442695
  %v4885 = vpow.pop %v4884
  %v4886 = vadd.f32 %v4855, 1.0
  %v4887 = vadd.f32 %v4857, 1.0
  %v4888 = vadd.f32 %v4859, 1.0
  %v4889 = vadd.f32 %v4861, 1.0
  %v4890 = vadd.f32 %v4863, 1.0
  %v4891 = vadd.f32 %v4865, 1.0
  %v4892 = vadd.f32 %v4867, 1.0
  %v4893 = vadd.f32 %v4869, 1.0
  %v4894 = vadd.f32 %v4871, 1.0
  %v4895 = vadd.f32 %v4873, 1.0
  %v4896 = vadd.f32 %v4875, 1.0
  %v4897 = vadd.f32 %v4877, 1.0
  %v4898 = vadd.f32 %v4879, 1.0
  %v4899 = vadd.f32 %v4881, 1.0
  %v4900 = vadd.f32 %v4883, 1.0
  %v4901 = vadd.f32 %v4885, 1.0
  %v4902 = vrcp.pop %v4886
  %v4903 = vmul.f32 1.0, %v4902
  %v4904 = vrcp.pop %v4887
  %v4905 = vmul.f32 1.0, %v4904
  %v4906 = vrcp.pop %v4888
  %v4907 = vmul.f32 1.0, %v4906
  %v4908 = vrcp.pop %v4889
  %v4909 = vmul.f32 1.0, %v4908
  %v4910 = vrcp.pop %v4890
  %v4911 = vmul.f32 1.0, %v4910
  %v4912 = vrcp.pop %v4891
  %v4913 = vmul.f32 1.0, %v4912
  %v4914 = vrcp.pop %v4892
  %v4915 = vmul.f32 1.0, %v4914
  %v4916 = vrcp.pop %v4893
  %v4917 = vmul.f32 1.0, %v4916
  %v4918 = vrcp.pop %v4894
  %v4919 = vmul.f32 1.0, %v4918
  %v4920 = vrcp.pop %v4895
  %v4921 = vmul.f32 1.0, %v4920
  %v4922 = vrcp.pop %v4896
  %v4923 = vmul.f32 1.0, %v4922
  %v4924 = vrcp.pop %v4897
  %v4925 = vmul.f32 1.0, %v4924
  %v4926 = vrcp.pop %v4898
  %v4927 = vmul.f32 1.0, %v4926
  %v4928 = vrcp.pop %v4899
  %v4929 = vmul.f32 1.0, %v4928
  %v4930 = vrcp.pop %v4900
  %v4931 = vmul.f32 1.0, %v4930
  %v4932 = vrcp.pop %v4901
  %v4933 = vmul.f32 1.0, %v4932
  %v4934 = vmul.f32 %v4760, %v4903
  %v4935 = vmul.f32 %v4763, %v4905
  %v4936 = vmul.f32 %v4768, %v4907
  %v4937 = vmul.f32 %v4771, %v4909
  %v4938 = vmul.f32 %v4776, %v4911
  %v4939 = vmul.f32 %v4779, %v4913
  %v4940 = vmul.f32 %v4784, %v4915
  %v4941 = vmul.f32 %v4787, %v4917
  %v4942 = vmul.f32 %v4792, %v4919
  %v4943 = vmul.f32 %v4795, %v4921
  %v4944 = vmul.f32 %v4800, %v4923
  %v4945 = vmul.f32 %v4803, %v4925
  %v4946 = vmul.f32 %v4808, %v4927
  %v4947 = vmul.f32 %v4811, %v4929
  %v4948 = vmul.f32 %v4816, %v4931
  %v4949 = vmul.f32 %v4819, %v4933
  %v4950 = vpack.c.bf16 %v4935, %v4934
  %v4951 = vpack.c.bf16 %v4937, %v4936
  %v4952 = vpack.c.bf16 %v4939, %v4938
  %v4953 = vpack.c.bf16 %v4941, %v4940
  %v4954 = vpack.c.bf16 %v4943, %v4942
  %v4955 = vpack.c.bf16 %v4945, %v4944
  %v4956 = vpack.c.bf16 %v4947, %v4946
  %v4957 = vpack.c.bf16 %v4949, %v4948
  %v4958 = vld [vmem:[%s22 + $0x80] sm:$0xf]
  %v4959 = vld [vmem:[%s22 + $0x84] sm:$0xf]
  %v4960 = vld [vmem:[%s22 + $0x88] sm:$0xf]
  %v4961 = vld [vmem:[%s22 + $0x8c] sm:$0xf]
  %v4962 = vld [vmem:[%s22 + $0x90] sm:$0xf]
  %v4963 = vld [vmem:[%s22 + $0x94] sm:$0xf]
  %v4964 = vld [vmem:[%s22 + $0x98] sm:$0xf]
  %v4965 = vld [vmem:[%s22 + $0x9c] sm:$0xf]
  %v4966 = vld [vmem:[%s22 + $0xa0] sm:$0xf]
  %v4967 = vld [vmem:[%s22 + $0xa4] sm:$0xf]
  %v4968 = vld [vmem:[%s22 + $0xa8] sm:$0xf]
  %v4969 = vld [vmem:[%s22 + $0xac] sm:$0xf]
  %v4970 = vld [vmem:[%s22 + $0xb0] sm:$0xf]
  %v4971 = vld [vmem:[%s22 + $0xb4] sm:$0xf]
  %v4972 = vld [vmem:[%s22 + $0xb8] sm:$0xf]
  %v4973 = vld [vmem:[%s22 + $0xbc] sm:$0xf]
  %v4990 = vunpack.c.l.b16 %v4958
  %v4991 = vunpack.c.l.b16 %v4959
  %v4992 = vunpack.c.l.b16 %v4960
  %v4993 = vunpack.c.l.b16 %v4961
  %v4994 = vunpack.c.l.b16 %v4962
  %v4995 = vunpack.c.l.b16 %v4963
  %v4996 = vunpack.c.l.b16 %v4964
  %v4997 = vunpack.c.l.b16 %v4965
  %v4998 = vunpack.c.l.b16 %v4966
  %v4999 = vunpack.c.l.b16 %v4967
  %v5000 = vunpack.c.l.b16 %v4968
  %v5001 = vunpack.c.l.b16 %v4969
  %v5002 = vunpack.c.l.b16 %v4970
  %v5003 = vunpack.c.l.b16 %v4971
  %v5004 = vunpack.c.l.b16 %v4972
  %v5005 = vunpack.c.l.b16 %v4973
  %v5006 = vpack.c.b16 %v4991, %v4990
  %v5007 = vpack.c.b16 %v4993, %v4992
  %v5008 = vpack.c.b16 %v4995, %v4994
  %v5009 = vpack.c.b16 %v4997, %v4996
  %v5010 = vpack.c.b16 %v4999, %v4998
  %v5011 = vpack.c.b16 %v5001, %v5000
  %v5012 = vpack.c.b16 %v5003, %v5002
  %v5013 = vpack.c.b16 %v5005, %v5004
  %5022 = vmatprep.subr.bf16.mxu0 0
  %5023 = vmatpush1.bf16.msra.mxu0 %v5006
  %5024 = vmatprep.subr.bf16.mxu0 0
  %5025 = vmatpush1.bf16.msra.mxu0 %v5007
  %5026 = vmatprep.subr.bf16.mxu0 0
  %5027 = vmatpush1.bf16.msra.mxu0 %v5008
  %5028 = vmatprep.subr.bf16.mxu0 0
  %5029 = vmatpush1.bf16.msra.mxu0 %v5009
  %5030 = vmatprep.subr.bf16.mxu0 0
  %5031 = vmatpush1.bf16.msra.mxu0 %v5010
  %5032 = vmatprep.subr.bf16.mxu0 0
  %5033 = vmatpush1.bf16.msra.mxu0 %v5011
  %5034 = vmatprep.subr.bf16.mxu0 0
  %5035 = vmatpush1.bf16.msra.mxu0 %v5012
  %5036 = vmatprep.subr.bf16.mxu0 0
  %5037 = vmatpush1.bf16.msra.mxu0 %v5013
  %5038 = vmatprep.subr.bf16.mxu0 0
  %5039 = vmatpush1.bf16.msra.mxu0 0
  %5040 = vmatprep.subr.bf16.mxu0 0
  %5041 = vmatpush1.bf16.msra.mxu0 0
  %5042 = vmatprep.subr.bf16.mxu0 0
  %5043 = vmatpush1.bf16.msra.mxu0 0
  %5044 = vmatprep.subr.bf16.mxu0 0
  %5045 = vmatpush1.bf16.msra.mxu0 0
  %5046 = vmatprep.subr.bf16.mxu0 0
  %5047 = vmatpush1.bf16.msra.mxu0 0
  %5048 = vmatprep.subr.bf16.mxu0 0
  %5049 = vmatpush1.bf16.msra.mxu0 0
  %5050 = vmatprep.subr.bf16.mxu0 0
  %5051 = vmatpush1.bf16.msra.mxu0 0
  %5052 = vmatprep.subr.bf16.mxu0 0
  %5053 = vmatpush1.bf16.msra.mxu0 0
  %5054 = vmatprep.mubr.bf16.mxu0 0
  %5055 = vmatmul.mubr.bf16.gmra.mrb[0].mxu0 %v4950
  %v5056 = vpop.f32.mrb[0].mxu0
  %v5057 = vadd.f32 0.0, %v5056
  %v5058 = vpop.f32.mrb[0].mxu0
  %v5059 = vpop.f32.mrb[0].mxu0
  %v5060 = vadd.f32 0.0, %v5059
  %v5061 = vpop.f32.mrb[0].mxu0
  %5062 = vmatprep.mubr.bf16.mxu0 0
  %5063 = vmatmul.mubr.bf16.gmra.mrb[0].mxu0 %v4951
  %v5064 = vpop.f32.mrb[0].mxu0
  %v5065 = vadd.f32 0.0, %v5064
  %v5066 = vpop.f32.mrb[0].mxu0
  %v5067 = vpop.f32.mrb[0].mxu0
  %v5068 = vadd.f32 0.0, %v5067
  %v5069 = vpop.f32.mrb[0].mxu0
  %5070 = vmatprep.mubr.bf16.mxu0 0
  %5071 = vmatmul.mubr.bf16.gmra.mrb[0].mxu0 %v4952
  %v5072 = vpop.f32.mrb[0].mxu0
  %v5073 = vadd.f32 0.0, %v5072
  %v5074 = vpop.f32.mrb[0].mxu0
  %v5075 = vpop.f32.mrb[0].mxu0
  %v5076 = vadd.f32 0.0, %v5075
  %v5077 = vpop.f32.mrb[0].mxu0
  %5078 = vmatprep.mubr.bf16.mxu0 0
  %5079 = vmatmul.mubr.bf16.gmra.mrb[0].mxu0 %v4953
  %v5080 = vpop.f32.mrb[0].mxu0
  %v5081 = vadd.f32 0.0, %v5080
  %v5082 = vpop.f32.mrb[0].mxu0
  %v5083 = vpop.f32.mrb[0].mxu0
  %v5084 = vadd.f32 0.0, %v5083
  %v5085 = vpop.f32.mrb[0].mxu0
  %5086 = vmatprep.mubr.bf16.mxu0 0
  %5087 = vmatmul.mubr.bf16.gmra.mrb[0].mxu0 %v4954
  %v5088 = vpop.f32.mrb[0].mxu0
  %v5089 = vadd.f32 0.0, %v5088
  %v5090 = vpop.f32.mrb[0].mxu0
  %v5091 = vpop.f32.mrb[0].mxu0
  %v5092 = vadd.f32 0.0, %v5091
  %v5093 = vpop.f32.mrb[0].mxu0
  %5094 = vmatprep.mubr.bf16.mxu0 0
  %5095 = vmatmul.mubr.bf16.gmra.mrb[0].mxu0 %v4955
  %v5096 = vpop.f32.mrb[0].mxu0
  %v5097 = vadd.f32 0.0, %v5096
  %v5098 = vpop.f32.mrb[0].mxu0
  %v5099 = vpop.f32.mrb[0].mxu0
  %v5100 = vadd.f32 0.0, %v5099
  %v5101 = vpop.f32.mrb[0].mxu0
  %5102 = vmatprep.mubr.bf16.mxu0 0
  %5103 = vmatmul.mubr.bf16.gmra.mrb[0].mxu0 %v4956
  %v5104 = vpop.f32.mrb[0].mxu0
  %v5105 = vadd.f32 0.0, %v5104
  %v5106 = vpop.f32.mrb[0].mxu0
  %v5107 = vpop.f32.mrb[0].mxu0
  %v5108 = vadd.f32 0.0, %v5107
  %v5109 = vpop.f32.mrb[0].mxu0
  %5110 = vmatprep.mubr.bf16.mxu0 0
  %5111 = vmatmul.mubr.bf16.gmra.mrb[0].mxu0 %v4957
  %v5112 = vpop.f32.mrb[0].mxu0
  %v5113 = vadd.f32 0.0, %v5112
  %v5114 = vpop.f32.mrb[0].mxu0
  %v5115 = vpop.f32.mrb[0].mxu0
  %v5116 = vadd.f32 0.0, %v5115
  %v5117 = vpop.f32.mrb[0].mxu0
  %5118 = vdwg.mxu0
  %v5119 = vadd.f32 %v4592, %v5057
  %v5120 = vadd.f32 %v4595, %v5060
  %v5121 = vadd.f32 %v4600, %v5065
  %v5122 = vadd.f32 %v4603, %v5068
  %v5123 = vadd.f32 %v4608, %v5073
  %v5124 = vadd.f32 %v4611, %v5076
  %v5125 = vadd.f32 %v4616, %v5081
  %v5126 = vadd.f32 %v4619, %v5084
  %v5127 = vadd.f32 %v4624, %v5089
  %v5128 = vadd.f32 %v4627, %v5092
  %v5129 = vadd.f32 %v4632, %v5097
  %v5130 = vadd.f32 %v4635, %v5100
  %v5131 = vadd.f32 %v4640, %v5105
  %v5132 = vadd.f32 %v4643, %v5108
  %v5133 = vadd.f32 %v4648, %v5113
  %v5134 = vadd.f32 %v4651, %v5116
  %v5135 = vld [vmem:[%s20 + $0xc] sm:$0xf]
  %v5136 = vld [vmem:[%s20 + $0x1c] sm:$0xf]
  %v5137 = vld [vmem:[%s20 + $0x2c] sm:$0xf]
  %v5138 = vld [vmem:[%s20 + $0x3c] sm:$0xf]
  %v5139 = vld [vmem:[%s20 + $0x4c] sm:$0xf]
  %v5140 = vld [vmem:[%s20 + $0x5c] sm:$0xf]
  %v5141 = vld [vmem:[%s20 + $0x6c] sm:$0xf]
  %v5142 = vld [vmem:[%s20 + $0x7c] sm:$0xf]
  %v5143 = vld [vmem:[%s20 + $0x8c] sm:$0xf]
  %v5144 = vld [vmem:[%s20 + $0x9c] sm:$0xf]
  %v5145 = vld [vmem:[%s20 + $0xac] sm:$0xf]
  %v5146 = vld [vmem:[%s20 + $0xbc] sm:$0xf]
  %v5147 = vld [vmem:[%s20 + $0xcc] sm:$0xf]
  %v5148 = vld [vmem:[%s20 + $0xdc] sm:$0xf]
  %v5149 = vld [vmem:[%s20 + $0xec] sm:$0xf]
  %v5150 = vld [vmem:[%s20 + $0xfc] sm:$0xf]
  %v5151 = vld [vmem:[%s21 + $0x3] sm:$0x1]
  %v5153 = vlaneseq
  %v5154 = vshrl.u32 %v5153, 7
  %v5155 = vsub.s32 0, %v5154
  %v5156 = vrot.slane %v5151, %v5155
  %v5174 = vunpack.c.l.b16 %v5135
  %v5175 = vunpack.c.l.b16 %v5136
  %v5176 = vunpack.c.l.b16 %v5137
  %v5177 = vunpack.c.l.b16 %v5138
  %v5178 = vunpack.c.l.b16 %v5139
  %v5179 = vunpack.c.l.b16 %v5140
  %v5180 = vunpack.c.l.b16 %v5141
  %v5181 = vunpack.c.l.b16 %v5142
  %v5182 = vunpack.c.l.b16 %v5143
  %v5183 = vunpack.c.l.b16 %v5144
  %v5184 = vunpack.c.l.b16 %v5145
  %v5185 = vunpack.c.l.b16 %v5146
  %v5186 = vunpack.c.l.b16 %v5147
  %v5187 = vunpack.c.l.b16 %v5148
  %v5188 = vunpack.c.l.b16 %v5149
  %v5189 = vunpack.c.l.b16 %v5150
  %v5190 = vpack.c.b16 %v5175, %v5174
  %v5191 = vpack.c.b16 %v5177, %v5176
  %v5192 = vpack.c.b16 %v5179, %v5178
  %v5193 = vpack.c.b16 %v5181, %v5180
  %v5194 = vpack.c.b16 %v5183, %v5182
  %v5195 = vpack.c.b16 %v5185, %v5184
  %v5196 = vpack.c.b16 %v5187, %v5186
  %v5197 = vpack.c.b16 %v5189, %v5188
  %5206 = vmatprep.subr.bf16.mxu0 0
  %5207 = vmatpush1.bf16.msra.mxu0 %v5190
  %5208 = vmatprep.subr.bf16.mxu0 0
  %5209 = vmatpush1.bf16.msra.mxu0 %v5191
  %5210 = vmatprep.subr.bf16.mxu0 0
  %5211 = vmatpush1.bf16.msra.mxu0 %v5192
  %5212 = vmatprep.subr.bf16.mxu0 0
  %5213 = vmatpush1.bf16.msra.mxu0 %v5193
  %5214 = vmatprep.subr.bf16.mxu0 0
  %5215 = vmatpush1.bf16.msra.mxu0 %v5194
  %5216 = vmatprep.subr.bf16.mxu0 0
  %5217 = vmatpush1.bf16.msra.mxu0 %v5195
  %5218 = vmatprep.subr.bf16.mxu0 0
  %5219 = vmatpush1.bf16.msra.mxu0 %v5196
  %5220 = vmatprep.subr.bf16.mxu0 0
  %5221 = vmatpush1.bf16.msra.mxu0 %v5197
  %5222 = vmatprep.subr.bf16.mxu0 0
  %5223 = vmatpush1.bf16.msra.mxu0 0
  %5224 = vmatprep.subr.bf16.mxu0 0
  %5225 = vmatpush1.bf16.msra.mxu0 0
  %5226 = vmatprep.subr.bf16.mxu0 0
  %5227 = vmatpush1.bf16.msra.mxu0 0
  %5228 = vmatprep.subr.bf16.mxu0 0
  %5229 = vmatpush1.bf16.msra.mxu0 0
  %5230 = vmatprep.subr.bf16.mxu0 0
  %5231 = vmatpush1.bf16.msra.mxu0 0
  %5232 = vmatprep.subr.bf16.mxu0 0
  %5233 = vmatpush1.bf16.msra.mxu0 0
  %5234 = vmatprep.subr.bf16.mxu0 0
  %5235 = vmatpush1.bf16.msra.mxu0 0
  %5236 = vmatprep.subr.bf16.mxu0 0
  %5237 = vmatpush1.bf16.msra.mxu0 0
  %5238 = vmatprep.mubr.bf16.mxu0 0
  %5239 = vmatmul.mubr.bf16.gmra.mrb[0].mxu0 %v3716
  %v5240 = vpop.f32.mrb[0].mxu0
  %v5241 = vadd.f32 %v5156, %v5240
  %v5242 = vpop.f32.mrb[0].mxu0
  %v5243 = vpop.f32.mrb[0].mxu0
  %v5244 = vadd.f32 %v5156, %v5243
  %v5245 = vpop.f32.mrb[0].mxu0
  %5246 = vmatprep.mubr.bf16.mxu0 0
  %5247 = vmatmul.mubr.bf16.gmra.mrb[0].mxu0 %v3717
  %v5248 = vpop.f32.mrb[0].mxu0
  %v5249 = vadd.f32 %v5156, %v5248
  %v5250 = vpop.f32.mrb[0].mxu0
  %v5251 = vpop.f32.mrb[0].mxu0
  %v5252 = vadd.f32 %v5156, %v5251
  %v5253 = vpop.f32.mrb[0].mxu0
  %5254 = vmatprep.mubr.bf16.mxu0 0
  %5255 = vmatmul.mubr.bf16.gmra.mrb[0].mxu0 %v3718
  %v5256 = vpop.f32.mrb[0].mxu0
  %v5257 = vadd.f32 %v5156, %v5256
  %v5258 = vpop.f32.mrb[0].mxu0
  %v5259 = vpop.f32.mrb[0].mxu0
  %v5260 = vadd.f32 %v5156, %v5259
  %v5261 = vpop.f32.mrb[0].mxu0
  %5262 = vmatprep.mubr.bf16.mxu0 0
  %5263 = vmatmul.mubr.bf16.gmra.mrb[0].mxu0 %v3719
  %v5264 = vpop.f32.mrb[0].mxu0
  %v5265 = vadd.f32 %v5156, %v5264
  %v5266 = vpop.f32.mrb[0].mxu0
  %v5267 = vpop.f32.mrb[0].mxu0
  %v5268 = vadd.f32 %v5156, %v5267
  %v5269 = vpop.f32.mrb[0].mxu0
  %5270 = vmatprep.mubr.bf16.mxu0 0
  %5271 = vmatmul.mubr.bf16.gmra.mrb[0].mxu0 %v3720
  %v5272 = vpop.f32.mrb[0].mxu0
  %v5273 = vadd.f32 %v5156, %v5272
  %v5274 = vpop.f32.mrb[0].mxu0
  %v5275 = vpop.f32.mrb[0].mxu0
  %v5276 = vadd.f32 %v5156, %v5275
  %v5277 = vpop.f32.mrb[0].mxu0
  %5278 = vmatprep.mubr.bf16.mxu0 0
  %5279 = vmatmul.mubr.bf16.gmra.mrb[0].mxu0 %v3721
  %v5280 = vpop.f32.mrb[0].mxu0
  %v5281 = vadd.f32 %v5156, %v5280
  %v5282 = vpop.f32.mrb[0].mxu0
  %v5283 = vpop.f32.mrb[0].mxu0
  %v5284 = vadd.f32 %v5156, %v5283
  %v5285 = vpop.f32.mrb[0].mxu0
  %5286 = vmatprep.mubr.bf16.mxu0 0
  %5287 = vmatmul.mubr.bf16.gmra.mrb[0].mxu0 %v3722
  %v5288 = vpop.f32.mrb[0].mxu0
  %v5289 = vadd.f32 %v5156, %v5288
  %v5290 = vpop.f32.mrb[0].mxu0
  %v5291 = vpop.f32.mrb[0].mxu0
  %v5292 = vadd.f32 %v5156, %v5291
  %v5293 = vpop.f32.mrb[0].mxu0
  %5294 = vmatprep.mubr.bf16.mxu0 0
  %5295 = vmatmul.mubr.bf16.gmra.mrb[0].mxu0 %v3723
  %v5296 = vpop.f32.mrb[0].mxu0
  %v5297 = vadd.f32 %v5156, %v5296
  %v5298 = vpop.f32.mrb[0].mxu0
  %v5299 = vpop.f32.mrb[0].mxu0
  %v5300 = vadd.f32 %v5156, %v5299
  %v5301 = vpop.f32.mrb[0].mxu0
  %5302 = vdwg.mxu0
  %v5303 = vmul.f32 %v5241, 1.702
  %v5304 = vmul.f32 %v5244, 1.702
  %v5305 = vmul.f32 %v5249, 1.702
  %v5306 = vmul.f32 %v5252, 1.702
  %v5307 = vmul.f32 %v5257, 1.702
  %v5308 = vmul.f32 %v5260, 1.702
  %v5309 = vmul.f32 %v5265, 1.702
  %v5310 = vmul.f32 %v5268, 1.702
  %v5311 = vmul.f32 %v5273, 1.702
  %v5312 = vmul.f32 %v5276, 1.702
  %v5313 = vmul.f32 %v5281, 1.702
  %v5314 = vmul.f32 %v5284, 1.702
  %v5315 = vmul.f32 %v5289, 1.702
  %v5316 = vmul.f32 %v5292, 1.702
  %v5317 = vmul.f32 %v5297, 1.702
  %v5318 = vmul.f32 %v5300, 1.702
  %v5319 = vxor.u32 %v5303, 2147483648
  %v5320 = vxor.u32 %v5304, 2147483648
  %v5321 = vxor.u32 %v5305, 2147483648
  %v5322 = vxor.u32 %v5306, 2147483648
  %v5323 = vxor.u32 %v5307, 2147483648
  %v5324 = vxor.u32 %v5308, 2147483648
  %v5325 = vxor.u32 %v5309, 2147483648
  %v5326 = vxor.u32 %v5310, 2147483648
  %v5327 = vxor.u32 %v5311, 2147483648
  %v5328 = vxor.u32 %v5312, 2147483648
  %v5329 = vxor.u32 %v5313, 2147483648
  %v5330 = vxor.u32 %v5314, 2147483648
  %v5331 = vxor.u32 %v5315, 2147483648
  %v5332 = vxor.u32 %v5316, 2147483648
  %v5333 = vxor.u32 %v5317, 2147483648
  %v5334 = vxor.u32 %v5318, 2147483648
  %v5335 = vmul.f32 %v5319, 1.442695
  %v5336 = vpow.pop %v5335
  %v5337 = vmul.f32 %v5320, 1.442695
  %v5338 = vpow.pop %v5337
  %v5339 = vmul.f32 %v5321, 1.442695
  %v5340 = vpow.pop %v5339
  %v5341 = vmul.f32 %v5322, 1.442695
  %v5342 = vpow.pop %v5341
  %v5343 = vmul.f32 %v5323, 1.442695
  %v5344 = vpow.pop %v5343
  %v5345 = vmul.f32 %v5324, 1.442695
  %v5346 = vpow.pop %v5345
  %v5347 = vmul.f32 %v5325, 1.442695
  %v5348 = vpow.pop %v5347
  %v5349 = vmul.f32 %v5326, 1.442695
  %v5350 = vpow.pop %v5349
  %v5351 = vmul.f32 %v5327, 1.442695
  %v5352 = vpow.pop %v5351
  %v5353 = vmul.f32 %v5328, 1.442695
  %v5354 = vpow.pop %v5353
  %v5355 = vmul.f32 %v5329, 1.442695
  %v5356 = vpow.pop %v5355
  %v5357 = vmul.f32 %v5330, 1.442695
  %v5358 = vpow.pop %v5357
  %v5359 = vmul.f32 %v5331, 1.442695
  %v5360 = vpow.pop %v5359
  %v5361 = vmul.f32 %v5332, 1.442695
  %v5362 = vpow.pop %v5361
  %v5363 = vmul.f32 %v5333, 1.442695
  %v5364 = vpow.pop %v5363
  %v5365 = vmul.f32 %v5334, 1.442695
  %v5366 = vpow.pop %v5365
  %v5367 = vadd.f32 %v5336, 1.0
  %v5368 = vadd.f32 %v5338, 1.0
  %v5369 = vadd.f32 %v5340, 1.0
  %v5370 = vadd.f32 %v5342, 1.0
  %v5371 = vadd.f32 %v5344, 1.0
  %v5372 = vadd.f32 %v5346, 1.0
  %v5373 = vadd.f32 %v5348, 1.0
  %v5374 = vadd.f32 %v5350, 1.0
  %v5375 = vadd.f32 %v5352, 1.0
  %v5376 = vadd.f32 %v5354, 1.0
  %v5377 = vadd.f32 %v5356, 1.0
  %v5378 = vadd.f32 %v5358, 1.0
  %v5379 = vadd.f32 %v5360, 1.0
  %v5380 = vadd.f32 %v5362, 1.0
  %v5381 = vadd.f32 %v5364, 1.0
  %v5382 = vadd.f32 %v5366, 1.0
  %v5383 = vrcp.pop %v5367
  %v5384 = vmul.f32 1.0, %v5383
  %v5385 = vrcp.pop %v5368
  %v5386 = vmul.f32 1.0, %v5385
  %v5387 = vrcp.pop %v5369
  %v5388 = vmul.f32 1.0, %v5387
  %v5389 = vrcp.pop %v5370
  %v5390 = vmul.f32 1.0, %v5389
  %v5391 = vrcp.pop %v5371
  %v5392 = vmul.f32 1.0, %v5391
  %v5393 = vrcp.pop %v5372
  %v5394 = vmul.f32 1.0, %v5393
  %v5395 = vrcp.pop %v5373
  %v5396 = vmul.f32 1.0, %v5395
  %v5397 = vrcp.pop %v5374
  %v5398 = vmul.f32 1.0, %v5397
  %v5399 = vrcp.pop %v5375
  %v5400 = vmul.f32 1.0, %v5399
  %v5401 = vrcp.pop %v5376
  %v5402 = vmul.f32 1.0, %v5401
  %v5403 = vrcp.pop %v5377
  %v5404 = vmul.f32 1.0, %v5403
  %v5405 = vrcp.pop %v5378
  %v5406 = vmul.f32 1.0, %v5405
  %v5407 = vrcp.pop %v5379
  %v5408 = vmul.f32 1.0, %v5407
  %v5409 = vrcp.pop %v5380
  %v5410 = vmul.f32 1.0, %v5409
  %v5411 = vrcp.pop %v5381
  %v5412 = vmul.f32 1.0, %v5411
  %v5413 = vrcp.pop %v5382
  %v5414 = vmul.f32 1.0, %v5413
  %v5415 = vmul.f32 %v5241, %v5384
  %v5416 = vmul.f32 %v5244, %v5386
  %v5417 = vmul.f32 %v5249, %v5388
  %v5418 = vmul.f32 %v5252, %v5390
  %v5419 = vmul.f32 %v5257, %v5392
  %v5420 = vmul.f32 %v5260, %v5394
  %v5421 = vmul.f32 %v5265, %v5396
  %v5422 = vmul.f32 %v5268, %v5398
  %v5423 = vmul.f32 %v5273, %v5400
  %v5424 = vmul.f32 %v5276, %v5402
  %v5425 = vmul.f32 %v5281, %v5404
  %v5426 = vmul.f32 %v5284, %v5406
  %v5427 = vmul.f32 %v5289, %v5408
  %v5428 = vmul.f32 %v5292, %v5410
  %v5429 = vmul.f32 %v5297, %v5412
  %v5430 = vmul.f32 %v5300, %v5414
  %v5431 = vpack.c.bf16 %v5416, %v5415
  %v5432 = vpack.c.bf16 %v5418, %v5417
  %v5433 = vpack.c.bf16 %v5420, %v5419
  %v5434 = vpack.c.bf16 %v5422, %v5421
  %v5435 = vpack.c.bf16 %v5424, %v5423
  %v5436 = vpack.c.bf16 %v5426, %v5425
  %v5437 = vpack.c.bf16 %v5428, %v5427
  %v5438 = vpack.c.bf16 %v5430, %v5429
  %v5439 = vld [vmem:[%s22 + $0xc0] sm:$0xf]
  %v5440 = vld [vmem:[%s22 + $0xc4] sm:$0xf]
  %v5441 = vld [vmem:[%s22 + $0xc8] sm:$0xf]
  %v5442 = vld [vmem:[%s22 + $0xcc] sm:$0xf]
  %v5443 = vld [vmem:[%s22 + $0xd0] sm:$0xf]
  %v5444 = vld [vmem:[%s22 + $0xd4] sm:$0xf]
  %v5445 = vld [vmem:[%s22 + $0xd8] sm:$0xf]
  %v5446 = vld [vmem:[%s22 + $0xdc] sm:$0xf]
  %v5447 = vld [vmem:[%s22 + $0xe0] sm:$0xf]
  %v5448 = vld [vmem:[%s22 + $0xe4] sm:$0xf]
  %v5449 = vld [vmem:[%s22 + $0xe8] sm:$0xf]
  %v5450 = vld [vmem:[%s22 + $0xec] sm:$0xf]
  %v5451 = vld [vmem:[%s22 + $0xf0] sm:$0xf]
  %v5452 = vld [vmem:[%s22 + $0xf4] sm:$0xf]
  %v5453 = vld [vmem:[%s22 + $0xf8] sm:$0xf]
  %v5454 = vld [vmem:[%s22 + $0xfc] sm:$0xf]
  %v5471 = vunpack.c.l.b16 %v5439
  %v5472 = vunpack.c.l.b16 %v5440
  %v5473 = vunpack.c.l.b16 %v5441
  %v5474 = vunpack.c.l.b16 %v5442
  %v5475 = vunpack.c.l.b16 %v5443
  %v5476 = vunpack.c.l.b16 %v5444
  %v5477 = vunpack.c.l.b16 %v5445
  %v5478 = vunpack.c.l.b16 %v5446
  %v5479 = vunpack.c.l.b16 %v5447
  %v5480 = vunpack.c.l.b16 %v5448
  %v5481 = vunpack.c.l.b16 %v5449
  %v5482 = vunpack.c.l.b16 %v5450
  %v5483 = vunpack.c.l.b16 %v5451
  %v5484 = vunpack.c.l.b16 %v5452
  %v5485 = vunpack.c.l.b16 %v5453
  %v5486 = vunpack.c.l.b16 %v5454
  %v5487 = vpack.c.b16 %v5472, %v5471
  %v5488 = vpack.c.b16 %v5474, %v5473
  %v5489 = vpack.c.b16 %v5476, %v5475
  %v5490 = vpack.c.b16 %v5478, %v5477
  %v5491 = vpack.c.b16 %v5480, %v5479
  %v5492 = vpack.c.b16 %v5482, %v5481
  %v5493 = vpack.c.b16 %v5484, %v5483
  %v5494 = vpack.c.b16 %v5486, %v5485
  %5503 = vmatprep.subr.bf16.mxu0 0
  %5504 = vmatpush1.bf16.msra.mxu0 %v5487
  %5505 = vmatprep.subr.bf16.mxu0 0
  %5506 = vmatpush1.bf16.msra.mxu0 %v5488
  %5507 = vmatprep.subr.bf16.mxu0 0
  %5508 = vmatpush1.bf16.msra.mxu0 %v5489
  %5509 = vmatprep.subr.bf16.mxu0 0
  %5510 = vmatpush1.bf16.msra.mxu0 %v5490
  %5511 = vmatprep.subr.bf16.mxu0 0
  %5512 = vmatpush1.bf16.msra.mxu0 %v5491
  %5513 = vmatprep.subr.bf16.mxu0 0
  %5514 = vmatpush1.bf16.msra.mxu0 %v5492
  %5515 = vmatprep.subr.bf16.mxu0 0
  %5516 = vmatpush1.bf16.msra.mxu0 %v5493
  %5517 = vmatprep.subr.bf16.mxu0 0
  %5518 = vmatpush1.bf16.msra.mxu0 %v5494
  %5519 = vmatprep.subr.bf16.mxu0 0
  %5520 = vmatpush1.bf16.msra.mxu0 0
  %5521 = vmatprep.subr.bf16.mxu0 0
  %5522 = vmatpush1.bf16.msra.mxu0 0
  %5523 = vmatprep.subr.bf16.mxu0 0
  %5524 = vmatpush1.bf16.msra.mxu0 0
  %5525 = vmatprep.subr.bf16.mxu0 0
  %5526 = vmatpush1.bf16.msra.mxu0 0
  %5527 = vmatprep.subr.bf16.mxu0 0
  %5528 = vmatpush1.bf16.msra.mxu0 0
  %5529 = vmatprep.subr.bf16.mxu0 0
  %5530 = vmatpush1.bf16.msra.mxu0 0
  %5531 = vmatprep.subr.bf16.mxu0 0
  %5532 = vmatpush1.bf16.msra.mxu0 0
  %5533 = vmatprep.subr.bf16.mxu0 0
  %5534 = vmatpush1.bf16.msra.mxu0 0
  %5535 = vmatprep.mubr.bf16.mxu0 0
  %5536 = vmatmul.mubr.bf16.gmra.mrb[0].mxu0 %v5431
  %v5537 = vpop.f32.mrb[0].mxu0
  %v5538 = vadd.f32 0.0, %v5537
  %v5539 = vpop.f32.mrb[0].mxu0
  %v5540 = vpop.f32.mrb[0].mxu0
  %v5541 = vadd.f32 0.0, %v5540
  %v5542 = vpop.f32.mrb[0].mxu0
  %5543 = vmatprep.mubr.bf16.mxu0 0
  %5544 = vmatmul.mubr.bf16.gmra.mrb[0].mxu0 %v5432
  %v5545 = vpop.f32.mrb[0].mxu0
  %v5546 = vadd.f32 0.0, %v5545
  %v5547 = vpop.f32.mrb[0].mxu0
  %v5548 = vpop.f32.mrb[0].mxu0
  %v5549 = vadd.f32 0.0, %v5548
  %v5550 = vpop.f32.mrb[0].mxu0
  %5551 = vmatprep.mubr.bf16.mxu0 0
  %5552 = vmatmul.mubr.bf16.gmra.mrb[0].mxu0 %v5433
  %v5553 = vpop.f32.mrb[0].mxu0
  %v5554 = vadd.f32 0.0, %v5553
  %v5555 = vpop.f32.mrb[0].mxu0
  %v5556 = vpop.f32.mrb[0].mxu0
  %v5557 = vadd.f32 0.0, %v5556
  %v5558 = vpop.f32.mrb[0].mxu0
  %5559 = vmatprep.mubr.bf16.mxu0 0
  %5560 = vmatmul.mubr.bf16.gmra.mrb[0].mxu0 %v5434
  %v5561 = vpop.f32.mrb[0].mxu0
  %v5562 = vadd.f32 0.0, %v5561
  %v5563 = vpop.f32.mrb[0].mxu0
  %v5564 = vpop.f32.mrb[0].mxu0
  %v5565 = vadd.f32 0.0, %v5564
  %v5566 = vpop.f32.mrb[0].mxu0
  %5567 = vmatprep.mubr.bf16.mxu0 0
  %5568 = vmatmul.mubr.bf16.gmra.mrb[0].mxu0 %v5435
  %v5569 = vpop.f32.mrb[0].mxu0
  %v5570 = vadd.f32 0.0, %v5569
  %v5571 = vpop.f32.mrb[0].mxu0
  %v5572 = vpop.f32.mrb[0].mxu0
  %v5573 = vadd.f32 0.0, %v5572
  %v5574 = vpop.f32.mrb[0].mxu0
  %5575 = vmatprep.mubr.bf16.mxu0 0
  %5576 = vmatmul.mubr.bf16.gmra.mrb[0].mxu0 %v5436
  %v5577 = vpop.f32.mrb[0].mxu0
  %v5578 = vadd.f32 0.0, %v5577
  %v5579 = vpop.f32.mrb[0].mxu0
  %v5580 = vpop.f32.mrb[0].mxu0
  %v5581 = vadd.f32 0.0, %v5580
  %v5582 = vpop.f32.mrb[0].mxu0
  %5583 = vmatprep.mubr.bf16.mxu0 0
  %5584 = vmatmul.mubr.bf16.gmra.mrb[0].mxu0 %v5437
  %v5585 = vpop.f32.mrb[0].mxu0
  %v5586 = vadd.f32 0.0, %v5585
  %v5587 = vpop.f32.mrb[0].mxu0
  %v5588 = vpop.f32.mrb[0].mxu0
  %v5589 = vadd.f32 0.0, %v5588
  %v5590 = vpop.f32.mrb[0].mxu0
  %5591 = vmatprep.mubr.bf16.mxu0 0
  %5592 = vmatmul.mubr.bf16.gmra.mrb[0].mxu0 %v5438
  %v5593 = vpop.f32.mrb[0].mxu0
  %v5594 = vadd.f32 0.0, %v5593
  %v5595 = vpop.f32.mrb[0].mxu0
  %v5596 = vpop.f32.mrb[0].mxu0
  %v5597 = vadd.f32 0.0, %v5596
  %v5598 = vpop.f32.mrb[0].mxu0
  %5599 = vdwg.mxu0
  %v5600 = vadd.f32 %v5119, %v5538
  %v5601 = vadd.f32 %v5120, %v5541
  %v5602 = vadd.f32 %v5121, %v5546
  %v5603 = vadd.f32 %v5122, %v5549
  %v5604 = vadd.f32 %v5123, %v5554
  %v5605 = vadd.f32 %v5124, %v5557
  %v5606 = vadd.f32 %v5125, %v5562
  %v5607 = vadd.f32 %v5126, %v5565
  %v5608 = vadd.f32 %v5127, %v5570
  %v5609 = vadd.f32 %v5128, %v5573
  %v5610 = vadd.f32 %v5129, %v5578
  %v5611 = vadd.f32 %v5130, %v5581
  %v5612 = vadd.f32 %v5131, %v5586
  %v5613 = vadd.f32 %v5132, %v5589
  %v5614 = vadd.f32 %v5133, %v5594
  %v5615 = vadd.f32 %v5134, %v5597
  %v5616 = vadd.f32 %v3478, %v5600
  %v5617 = vadd.f32 %v3479, %v5601
  %v5618 = vadd.f32 %v3480, %v5602
  %v5619 = vadd.f32 %v3481, %v5603
  %v5620 = vadd.f32 %v3482, %v5604
  %v5621 = vadd.f32 %v3483, %v5605
  %v5622 = vadd.f32 %v3484, %v5606
  %v5623 = vadd.f32 %v3485, %v5607
  %v5624 = vadd.f32 %v3486, %v5608
  %v5625 = vadd.f32 %v3487, %v5609
  %v5626 = vadd.f32 %v3488, %v5610
  %v5627 = vadd.f32 %v3489, %v5611
  %v5628 = vadd.f32 %v3490, %v5612
  %v5629 = vadd.f32 %v3491, %v5613
  %v5630 = vadd.f32 %v3492, %v5614
  %v5631 = vadd.f32 %v3493, %v5615
  %v5632 = vld [vmem:[%s23] sm:$0x1]
  %v5634 = vlaneseq
  %v5635 = vshrl.u32 %v5634, 7
  %v5636 = vsub.s32 0, %v5635
  %v5637 = vrot.slane %v5632, %v5636
  %v5639 = vadd.f32 %v5616, %v5637
  %v5640 = vadd.f32 %v5617, %v5637
  %v5641 = vadd.f32 %v5618, %v5637
  %v5642 = vadd.f32 %v5619, %v5637
  %v5643 = vadd.f32 %v5620, %v5637
  %v5644 = vadd.f32 %v5621, %v5637
  %v5645 = vadd.f32 %v5622, %v5637
  %v5646 = vadd.f32 %v5623, %v5637
  %v5647 = vadd.f32 %v5624, %v5637
  %v5648 = vadd.f32 %v5625, %v5637
  %v5649 = vadd.f32 %v5626, %v5637
  %v5650 = vadd.f32 %v5627, %v5637
  %v5651 = vadd.f32 %v5628, %v5637
  %v5652 = vadd.f32 %v5629, %v5637
  %v5653 = vadd.f32 %v5630, %v5637
  %v5654 = vadd.f32 %v5631, %v5637
  %5655 = vst [vmem:[%s24] sm:$0xff] %v5639
  %5656 = vst [vmem:[%s24 + $0x8] sm:$0xff] %v5640
  %5657 = vst [vmem:[%s24 + $0x10] sm:$0xff] %v5641
  %5658 = vst [vmem:[%s24 + $0x18] sm:$0xff] %v5642
  %5659 = vst [vmem:[%s24 + $0x20] sm:$0xff] %v5643
  %5660 = vst [vmem:[%s24 + $0x28] sm:$0xff] %v5644
  %5661 = vst [vmem:[%s24 + $0x30] sm:$0xff] %v5645
  %5662 = vst [vmem:[%s24 + $0x38] sm:$0xff] %v5646
  %5663 = vst [vmem:[%s24 + $0x40] sm:$0xff] %v5647
  %5664 = vst [vmem:[%s24 + $0x48] sm:$0xff] %v5648
  %5665 = vst [vmem:[%s24 + $0x50] sm:$0xff] %v5649
  %5666 = vst [vmem:[%s24 + $0x58] sm:$0xff] %v5650
  %5667 = vst [vmem:[%s24 + $0x60] sm:$0xff] %v5651
  %5668 = vst [vmem:[%s24 + $0x68] sm:$0xff] %v5652
  %5669 = vst [vmem:[%s24 + $0x70] sm:$0xff] %v5653
  %5670 = vst [vmem:[%s24 + $0x78] sm:$0xff] %v5654
  // Predicated region
  $region98: #{stadapt_block_forward.1} parent=0 // pred_check
    _
  $region99: #{stadapt_block_forward.1} parent=0 // pred_check_branch
    %5672 = sbr.rel (0) target = $region101
  $region100: #{stadapt_block_forward.1} parent=0 // pred_region
    _
  $region101: #{stadapt_block_forward.1} parent=0 // pred_fallthru
    _
  // Predicated region
  $region102: #{stadapt_block_forward.1} parent=0 // pred_check
    _
  $region103: #{stadapt_block_forward.1} parent=0 // pred_check_branch
    %5674 = sbr.rel (0) target = $region105
  $region104: #{stadapt_block_forward.1} parent=0 // pred_region
    _
  $region105: #{stadapt_block_forward.1} parent=0 // pred_fallthru
    _

</llo_original>
